<compile_context>
chip_gen: v6e
topology: v6e:2x2x1
jax: 0.10.0
libtpu: 0.0.40
codegen_flags: <defaults>
</compile_context>

<pallas_src>
import math

import jax
import jax.numpy as jnp
from jax import lax
from jax.experimental import pallas as pl
from jax.experimental.pallas import tpu as pltpu

# ----------------------------- net_params ---------------------------------
N_NODES = 16          # number of graph nodes; k = len(EigVals) == N
IN_DIM = 8            # in_dim (raw node feature dim)
N_CLASSES = 4
GT_LAYERS = 2
GT_HIDDEN = 32        # GT_hidden_dim
GT_OUT = 32           # GT_out_dim
GT_HEADS = 4          # GT_n_heads
SPE_HIDDEN = 16       # spe_hidden_dim
K_EIG = N_NODES       # k
M_EIG = 4             # m
MLP_HIDDEN = 32       # hidden_dim (for embedding_se / embedding_pe MLPs)
ALPHA = 0.5           # learn_alpha = False
LAYER_NORM = True
RESIDUAL = True


# ------------------------ shared forward math ------------------------------
# Used both inside the fused Pallas kernel (on loaded VMEM values) and as the
# pure-JAX reference for validation.  Everything is f32.

def _mlp(layers, x):
    """Linear(+ReLU) chain; ReLU on all but the last layer. Dropout = id."""
    n = len(layers)
    for i, lp in enumerate(layers):
        x = jnp.dot(x, lp["w"], preferred_element_type=jnp.float32) + lp["b"]
        if i < n - 1:
            x = jnp.maximum(x, 0.0)
    return x


def _layernorm(x, g, b, eps=1e-5):
    mu = jnp.mean(x, axis=-1, keepdims=True)
    xc = x - mu
    var = jnp.mean(xc * xc, axis=-1, keepdims=True)
    return xc * lax.rsqrt(var + eps) * g + b


def _gt_layer(lp, h, n_heads):
    """One GraphTransformerLayer (dense attention over all nodes)."""
    n, in_d = h.shape
    out_d = lp["wo"]["w"].shape[1]
    d_head = out_d // n_heads
    scale = 1.0 / math.sqrt(d_head)

    # Fused Q/K/V projection: one MXU pass on h.
    qkv = jnp.dot(h, lp["wqkv"], preferred_element_type=jnp.float32) + lp["bqkv"]
    q = qkv[:, 0 * out_d:1 * out_d]
    k = qkv[:, 1 * out_d:2 * out_d]
    v = qkv[:, 2 * out_d:3 * out_d]

    # Per-head attention, unrolled; head-concat + O-projection folded into a
    # per-head matmul accumulation:  concat(heads) @ Wo == sum_h head_h @ Wo[h].
    wo = lp["wo"]["w"]
    acc = None
    for hh in range(n_heads):
        sl = slice(hh * d_head, (hh + 1) * d_head)
        s = lax.dot_general(q[:, sl], k[:, sl],
                            (((1,), (1,)), ((), ())),
                            preferred_element_type=jnp.float32) * scale
        s = jnp.clip(s, -5.0, 5.0)            # exp-clamp to [-5, 5]
        p_attn = jnp.exp(s)                   # safe: s in [-5, 5], no max-sub
        p_attn = p_attn / jnp.sum(p_attn, axis=-1, keepdims=True)
        head = jnp.dot(p_attn, v[:, sl], preferred_element_type=jnp.float32)
        contrib = jnp.dot(head, wo[sl, :], preferred_element_type=jnp.float32)
        acc = contrib if acc is None else acc + contrib
    h1 = acc + lp["wo"]["b"]

    if RESIDUAL and in_d == out_d:
        h1 = h + h1
    if LAYER_NORM:
        h1 = _layernorm(h1, lp["ln1_g"], lp["ln1_b"])

    f = jnp.dot(h1, lp["ff1"]["w"], preferred_element_type=jnp.float32) + lp["ff1"]["b"]
    f = jnp.maximum(f, 0.0)
    f = jnp.dot(f, lp["ff2"]["w"], preferred_element_type=jnp.float32) + lp["ff2"]["b"]
    h2 = h1 + f if RESIDUAL else f
    if LAYER_NORM:
        h2 = _layernorm(h2, lp["ln2_g"], lp["ln2_b"])
    return h2


def _forward_math(p, h, pe_raw, h_se_raw, concat2):
    """Full SPETransformer forward on already-loaded values."""
    h_se = _mlp(p["emb_se"], h_se_raw)                 # [N, spe_hidden]
    h_pe = _mlp(p["emb_pe"], pe_raw)                   # [N, spe_hidden]
    h_spe = (1.0 - ALPHA) * h_pe + ALPHA * h_se        # learn_alpha = False

    h0 = jnp.dot(h, p["emb_h"]["w"], preferred_element_type=jnp.float32) \
        + p["emb_h"]["b"]                              # [N, GT_hidden - spe_hidden]
    x = concat2(h0, h_spe)                             # [N, GT_hidden]

    for lp in p["gt"]:
        x = _gt_layer(lp, x, GT_HEADS)

    return _mlp(p["readout"], x)                       # [N, n_classes]


# --------------------------- fused Pallas kernel ----------------------------
def make_fused_forward(params):
    """Build a callable running the entire forward in one pallas_call."""
    leaves, treedef = jax.tree_util.tree_flatten(params)
    n_leaves = len(leaves)
    n_data = 3  # h, pe_raw, h_se_raw

    def kernel(*refs):
        h_ref, pe_ref, se_ref = refs[0:n_data]
        param_refs = refs[n_data:n_data + n_leaves]
        out_ref = refs[n_data + n_leaves]
        x_scratch = refs[n_data + n_leaves + 1]        # VMEM [N, GT_HIDDEN]

        # All parameters are tiny; load once into values (vregs / VMEM).
        p = jax.tree_util.tree_unflatten(treedef, [r[...] for r in param_refs])

        def concat2(h0, h_spe):
            # Assemble [h0 | h_spe] in the VMEM scratch (avoids a minor-dim
            # concatenate op); both writes land before the full-tile load.
            d0 = h0.shape[1]
            x_scratch[:, 0:d0] = h0
            x_scratch[:, d0:] = h_spe
            return x_scratch[...]

        out = _forward_math(p, h_ref[...], pe_ref[...], se_ref[...], concat2)
        out_ref[...] = out.astype(out_ref.dtype)

    def forward(h, eig_vals, eig_vecs, h_se_raw):
        # PE_raw = cat([EigVals[:m] repeated k times, EigVecs[:, :m]], dim=1)
        k = eig_vals.shape[0]
        m_vals = jnp.tile(eig_vals[:M_EIG][None, :], (k, 1))        # [k, m]
        pe_raw = jnp.concatenate([m_vals, eig_vecs[:, :M_EIG]], axis=1)  # [N, 2m]

        inputs = [h, pe_raw, h_se_raw] + leaves                     # all 2-D f32
        in_specs = [pl.BlockSpec(x.shape, lambda i: (0, 0)) for x in inputs]
        return pl.pallas_call(
            kernel,
            out_shape=jax.ShapeDtypeStruct((N_NODES, N_CLASSES), jnp.float32),
            grid=(1,),
            in_specs=in_specs,
            out_specs=pl.BlockSpec((N_NODES, N_CLASSES), lambda i: (0, 0)),
            scratch_shapes=[pltpu.VMEM((N_NODES, GT_HIDDEN), jnp.float32)],
        )(*inputs)

    return forward


def reference_forward(params, h, eig_vals, eig_vecs, h_se_raw):
    """Pure-JAX reference (same math, no Pallas) for validation."""
    k = eig_vals.shape[0]
    m_vals = jnp.tile(eig_vals[:M_EIG][None, :], (k, 1))
    pe_raw = jnp.concatenate([m_vals, eig_vecs[:, :M_EIG]], axis=1)
    return _forward_math(params, h, pe_raw, h_se_raw,
                         lambda a, b: jnp.concatenate([a, b], axis=1))


# ------------------------------ parameters ---------------------------------
def _init_linear(key, in_dim, out_dim):
    kw, kb = jax.random.split(key)
    w = jax.random.normal(kw, (in_dim, out_dim), jnp.float32) * (1.0 / math.sqrt(in_dim))
    b = jax.random.normal(kb, (1, out_dim), jnp.float32) * 0.01   # kept 2-D for VMEM
    return {"w": w, "b": b}


def init_params(key):
    keys = iter(jax.random.split(key, 64))

    def lin(i, o):
        return _init_linear(next(keys), i, o)

    p = {}
    p["emb_h"] = lin(IN_DIM, GT_HIDDEN - SPE_HIDDEN)
    p["emb_se"] = [lin(K_EIG, MLP_HIDDEN), lin(MLP_HIDDEN, MLP_HIDDEN),
                   lin(MLP_HIDDEN, MLP_HIDDEN), lin(MLP_HIDDEN, SPE_HIDDEN)]
    p["emb_pe"] = [lin(2 * M_EIG, MLP_HIDDEN), lin(MLP_HIDDEN, MLP_HIDDEN),
                   lin(MLP_HIDDEN, MLP_HIDDEN), lin(MLP_HIDDEN, SPE_HIDDEN)]

    p["gt"] = []
    out_dims = [GT_HIDDEN] * (GT_LAYERS - 1) + [GT_OUT]
    in_d = GT_HIDDEN
    for out_d in out_dims:
        wq, wk, wv = lin(in_d, out_d), lin(in_d, out_d), lin(in_d, out_d)
        p["gt"].append({
            # Fused QKV slab: [in_d, 3*out_d] / [1, 3*out_d]
            "wqkv": jnp.concatenate([wq["w"], wk["w"], wv["w"]], axis=1),
            "bqkv": jnp.concatenate([wq["b"], wk["b"], wv["b"]], axis=1),
            "wo": lin(out_d, out_d),
            "ln1_g": jnp.ones((1, out_d), jnp.float32),
            "ln1_b": jnp.zeros((1, out_d), jnp.float32),
            "ff1": lin(out_d, 2 * out_d), "ff2": lin(2 * out_d, out_d),
            "ln2_g": jnp.ones((1, out_d), jnp.float32),
            "ln2_b": jnp.zeros((1, out_d), jnp.float32),
        })
        in_d = out_d

    p["readout"] = [lin(GT_OUT, GT_OUT // 2),
                    lin(GT_OUT // 2, GT_OUT // 4),
                    lin(GT_OUT // 4, N_CLASSES)]
    return p


# --------------------------------- main -------------------------------------
if __name__ == "__main__":
    key = jax.random.PRNGKey(0)
    k0, k1, k2, k3, k4 = jax.random.split(key, 5)

    h = jax.random.normal(k0, (N_NODES, IN_DIM), jnp.float32)        # node features
    eig_vals = jax.random.normal(k1, (K_EIG,), jnp.float32)          # g.EigVals
    eig_vecs = jax.random.normal(k2, (N_NODES, K_EIG), jnp.float32)  # g.EigVecs
    h_se_raw = jax.random.normal(k3, (N_NODES, K_EIG), jnp.float32)  # g.ndata['SE']

    params = init_params(k4)

    fused_forward = make_fused_forward(params)
    out = jax.block_until_ready(fused_forward(h, eig_vals, eig_vecs, h_se_raw))

    assert out.shape == (N_NODES, N_CLASSES), out.shape
    assert jnp.all(jnp.isfinite(out))

    # Validate the fused kernel against the plain-JAX reference.
    ref = jax.block_until_ready(
        reference_forward(params, h, eig_vals, eig_vecs, h_se_raw))
    assert jnp.max(jnp.abs(out - ref)) < 1e-2, float(jnp.max(jnp.abs(out - ref)))

    print("KERNEL_OK")
</pallas_src>

<mosaic_0001>
module attributes {stable_mosaic.version = 11 : i64} {
  func.func @kernel(%arg0: i32, %arg1: memref<16x8xf32, #tpu.memory_space<vmem>>, %arg2: memref<16x8xf32, #tpu.memory_space<vmem>>, %arg3: memref<16x16xf32, #tpu.memory_space<vmem>>, %arg4: memref<1x16xf32, #tpu.memory_space<vmem>>, %arg5: memref<8x16xf32, #tpu.memory_space<vmem>>, %arg6: memref<1x32xf32, #tpu.memory_space<vmem>>, %arg7: memref<8x32xf32, #tpu.memory_space<vmem>>, %arg8: memref<1x32xf32, #tpu.memory_space<vmem>>, %arg9: memref<32x32xf32, #tpu.memory_space<vmem>>, %arg10: memref<1x32xf32, #tpu.memory_space<vmem>>, %arg11: memref<32x32xf32, #tpu.memory_space<vmem>>, %arg12: memref<1x16xf32, #tpu.memory_space<vmem>>, %arg13: memref<32x16xf32, #tpu.memory_space<vmem>>, %arg14: memref<1x32xf32, #tpu.memory_space<vmem>>, %arg15: memref<16x32xf32, #tpu.memory_space<vmem>>, %arg16: memref<1x32xf32, #tpu.memory_space<vmem>>, %arg17: memref<32x32xf32, #tpu.memory_space<vmem>>, %arg18: memref<1x32xf32, #tpu.memory_space<vmem>>, %arg19: memref<32x32xf32, #tpu.memory_space<vmem>>, %arg20: memref<1x16xf32, #tpu.memory_space<vmem>>, %arg21: memref<32x16xf32, #tpu.memory_space<vmem>>, %arg22: memref<1x96xf32, #tpu.memory_space<vmem>>, %arg23: memref<1x64xf32, #tpu.memory_space<vmem>>, %arg24: memref<32x64xf32, #tpu.memory_space<vmem>>, %arg25: memref<1x32xf32, #tpu.memory_space<vmem>>, %arg26: memref<64x32xf32, #tpu.memory_space<vmem>>, %arg27: memref<1x32xf32, #tpu.memory_space<vmem>>, %arg28: memref<1x32xf32, #tpu.memory_space<vmem>>, %arg29: memref<1x32xf32, #tpu.memory_space<vmem>>, %arg30: memref<1x32xf32, #tpu.memory_space<vmem>>, %arg31: memref<1x32xf32, #tpu.memory_space<vmem>>, %arg32: memref<32x32xf32, #tpu.memory_space<vmem>>, %arg33: memref<32x96xf32, #tpu.memory_space<vmem>>, %arg34: memref<1x96xf32, #tpu.memory_space<vmem>>, %arg35: memref<1x64xf32, #tpu.memory_space<vmem>>, %arg36: memref<32x64xf32, #tpu.memory_space<vmem>>, %arg37: memref<1x32xf32, #tpu.memory_space<vmem>>, %arg38: memref<64x32xf32, #tpu.memory_space<vmem>>, %arg39: memref<1x32xf32, #tpu.memory_space<vmem>>, %arg40: memref<1x32xf32, #tpu.memory_space<vmem>>, %arg41: memref<1x32xf32, #tpu.memory_space<vmem>>, %arg42: memref<1x32xf32, #tpu.memory_space<vmem>>, %arg43: memref<1x32xf32, #tpu.memory_space<vmem>>, %arg44: memref<32x32xf32, #tpu.memory_space<vmem>>, %arg45: memref<32x96xf32, #tpu.memory_space<vmem>>, %arg46: memref<1x16xf32, #tpu.memory_space<vmem>>, %arg47: memref<32x16xf32, #tpu.memory_space<vmem>>, %arg48: memref<1x8xf32, #tpu.memory_space<vmem>>, %arg49: memref<16x8xf32, #tpu.memory_space<vmem>>, %arg50: memref<1x4xf32, #tpu.memory_space<vmem>>, %arg51: memref<8x4xf32, #tpu.memory_space<vmem>>, %arg52: memref<16x4xf32, #tpu.memory_space<vmem>>, %arg53: memref<16x32xf32, #tpu.memory_space<vmem>>) attributes {dimension_semantics = [#tpu.dimension_semantics<arbitrary>], iteration_bounds = array<i64: 1>, scalar_prefetch = 0 : i64, scratch_operands = 1 : i64, tpu.core_type = #tpu.core_type<tc>, window_params = [{pipeline_mode = #tpu.pipeline_mode<synchronous>, transform_indices = @transform_0, window_bounds = array<i64: 16, 8>}, {pipeline_mode = #tpu.pipeline_mode<synchronous>, transform_indices = @transform_1, window_bounds = array<i64: 16, 8>}, {pipeline_mode = #tpu.pipeline_mode<synchronous>, transform_indices = @transform_2, window_bounds = array<i64: 16, 16>}, {pipeline_mode = #tpu.pipeline_mode<synchronous>, transform_indices = @transform_3, window_bounds = array<i64: 1, 16>}, {pipeline_mode = #tpu.pipeline_mode<synchronous>, transform_indices = @transform_4, window_bounds = array<i64: 8, 16>}, {pipeline_mode = #tpu.pipeline_mode<synchronous>, transform_indices = @transform_5, window_bounds = array<i64: 1, 32>}, {pipeline_mode = #tpu.pipeline_mode<synchronous>, transform_indices = @transform_6, window_bounds = array<i64: 8, 32>}, {pipeline_mode = #tpu.pipeline_mode<synchronous>, transform_indices = @transform_7, window_bounds = array<i64: 1, 32>}, {pipeline_mode = #tpu.pipeline_mode<synchronous>, transform_indices = @transform_8, window_bounds = array<i64: 32, 32>}, {pipeline_mode = #tpu.pipeline_mode<synchronous>, transform_indices = @transform_9, window_bounds = array<i64: 1, 32>}, {pipeline_mode = #tpu.pipeline_mode<synchronous>, transform_indices = @transform_10, window_bounds = array<i64: 32, 32>}, {pipeline_mode = #tpu.pipeline_mode<synchronous>, transform_indices = @transform_11, window_bounds = array<i64: 1, 16>}, {pipeline_mode = #tpu.pipeline_mode<synchronous>, transform_indices = @transform_12, window_bounds = array<i64: 32, 16>}, {pipeline_mode = #tpu.pipeline_mode<synchronous>, transform_indices = @transform_13, window_bounds = array<i64: 1, 32>}, {pipeline_mode = #tpu.pipeline_mode<synchronous>, transform_indices = @transform_14, window_bounds = array<i64: 16, 32>}, {pipeline_mode = #tpu.pipeline_mode<synchronous>, transform_indices = @transform_15, window_bounds = array<i64: 1, 32>}, {pipeline_mode = #tpu.pipeline_mode<synchronous>, transform_indices = @transform_16, window_bounds = array<i64: 32, 32>}, {pipeline_mode = #tpu.pipeline_mode<synchronous>, transform_indices = @transform_17, window_bounds = array<i64: 1, 32>}, {pipeline_mode = #tpu.pipeline_mode<synchronous>, transform_indices = @transform_18, window_bounds = array<i64: 32, 32>}, {pipeline_mode = #tpu.pipeline_mode<synchronous>, transform_indices = @transform_19, window_bounds = array<i64: 1, 16>}, {pipeline_mode = #tpu.pipeline_mode<synchronous>, transform_indices = @transform_20, window_bounds = array<i64: 32, 16>}, {pipeline_mode = #tpu.pipeline_mode<synchronous>, transform_indices = @transform_21, window_bounds = array<i64: 1, 96>}, {pipeline_mode = #tpu.pipeline_mode<synchronous>, transform_indices = @transform_22, window_bounds = array<i64: 1, 64>}, {pipeline_mode = #tpu.pipeline_mode<synchronous>, transform_indices = @transform_23, window_bounds = array<i64: 32, 64>}, {pipeline_mode = #tpu.pipeline_mode<synchronous>, transform_indices = @transform_24, window_bounds = array<i64: 1, 32>}, {pipeline_mode = #tpu.pipeline_mode<synchronous>, transform_indices = @transform_25, window_bounds = array<i64: 64, 32>}, {pipeline_mode = #tpu.pipeline_mode<synchronous>, transform_indices = @transform_26, window_bounds = array<i64: 1, 32>}, {pipeline_mode = #tpu.pipeline_mode<synchronous>, transform_indices = @transform_27, window_bounds = array<i64: 1, 32>}, {pipeline_mode = #tpu.pipeline_mode<synchronous>, transform_indices = @transform_28, window_bounds = array<i64: 1, 32>}, {pipeline_mode = #tpu.pipeline_mode<synchronous>, transform_indices = @transform_29, window_bounds = array<i64: 1, 32>}, {pipeline_mode = #tpu.pipeline_mode<synchronous>, transform_indices = @transform_30, window_bounds = array<i64: 1, 32>}, {pipeline_mode = #tpu.pipeline_mode<synchronous>, transform_indices = @transform_31, window_bounds = array<i64: 32, 32>}, {pipeline_mode = #tpu.pipeline_mode<synchronous>, transform_indices = @transform_32, window_bounds = array<i64: 32, 96>}, {pipeline_mode = #tpu.pipeline_mode<synchronous>, transform_indices = @transform_33, window_bounds = array<i64: 1, 96>}, {pipeline_mode = #tpu.pipeline_mode<synchronous>, transform_indices = @transform_34, window_bounds = array<i64: 1, 64>}, {pipeline_mode = #tpu.pipeline_mode<synchronous>, transform_indices = @transform_35, window_bounds = array<i64: 32, 64>}, {pipeline_mode = #tpu.pipeline_mode<synchronous>, transform_indices = @transform_36, window_bounds = array<i64: 1, 32>}, {pipeline_mode = #tpu.pipeline_mode<synchronous>, transform_indices = @transform_37, window_bounds = array<i64: 64, 32>}, {pipeline_mode = #tpu.pipeline_mode<synchronous>, transform_indices = @transform_38, window_bounds = array<i64: 1, 32>}, {pipeline_mode = #tpu.pipeline_mode<synchronous>, transform_indices = @transform_39, window_bounds = array<i64: 1, 32>}, {pipeline_mode = #tpu.pipeline_mode<synchronous>, transform_indices = @transform_40, window_bounds = array<i64: 1, 32>}, {pipeline_mode = #tpu.pipeline_mode<synchronous>, transform_indices = @transform_41, window_bounds = array<i64: 1, 32>}, {pipeline_mode = #tpu.pipeline_mode<synchronous>, transform_indices = @transform_42, window_bounds = array<i64: 1, 32>}, {pipeline_mode = #tpu.pipeline_mode<synchronous>, transform_indices = @transform_43, window_bounds = array<i64: 32, 32>}, {pipeline_mode = #tpu.pipeline_mode<synchronous>, transform_indices = @transform_44, window_bounds = array<i64: 32, 96>}, {pipeline_mode = #tpu.pipeline_mode<synchronous>, transform_indices = @transform_45, window_bounds = array<i64: 1, 16>}, {pipeline_mode = #tpu.pipeline_mode<synchronous>, transform_indices = @transform_46, window_bounds = array<i64: 32, 16>}, {pipeline_mode = #tpu.pipeline_mode<synchronous>, transform_indices = @transform_47, window_bounds = array<i64: 1, 8>}, {pipeline_mode = #tpu.pipeline_mode<synchronous>, transform_indices = @transform_48, window_bounds = array<i64: 16, 8>}, {pipeline_mode = #tpu.pipeline_mode<synchronous>, transform_indices = @transform_49, window_bounds = array<i64: 1, 4>}, {pipeline_mode = #tpu.pipeline_mode<synchronous>, transform_indices = @transform_50, window_bounds = array<i64: 8, 4>}, {pipeline_mode = #tpu.pipeline_mode<synchronous>, transform_indices = @transform_51, window_bounds = array<i64: 16, 4>}]} {
    %c0 = arith.constant 0 : index
    %c0_0 = arith.constant 0 : index
    %0 = vector.load %arg4[%c0, %c0_0] : memref<1x16xf32, #tpu.memory_space<vmem>>, vector<1x16xf32>
    %c0_1 = arith.constant 0 : index
    %c0_2 = arith.constant 0 : index
    %1 = vector.load %arg5[%c0_1, %c0_2] : memref<8x16xf32, #tpu.memory_space<vmem>>, vector<8x16xf32>
    %c0_3 = arith.constant 0 : index
    %c0_4 = arith.constant 0 : index
    %2 = vector.load %arg6[%c0_3, %c0_4] : memref<1x32xf32, #tpu.memory_space<vmem>>, vector<1x32xf32>
    %c0_5 = arith.constant 0 : index
    %c0_6 = arith.constant 0 : index
    %3 = vector.load %arg7[%c0_5, %c0_6] : memref<8x32xf32, #tpu.memory_space<vmem>>, vector<8x32xf32>
    %c0_7 = arith.constant 0 : index
    %c0_8 = arith.constant 0 : index
    %4 = vector.load %arg8[%c0_7, %c0_8] : memref<1x32xf32, #tpu.memory_space<vmem>>, vector<1x32xf32>
    %c0_9 = arith.constant 0 : index
    %c0_10 = arith.constant 0 : index
    %5 = vector.load %arg9[%c0_9, %c0_10] : memref<32x32xf32, #tpu.memory_space<vmem>>, vector<32x32xf32>
    %c0_11 = arith.constant 0 : index
    %c0_12 = arith.constant 0 : index
    %6 = vector.load %arg10[%c0_11, %c0_12] : memref<1x32xf32, #tpu.memory_space<vmem>>, vector<1x32xf32>
    %c0_13 = arith.constant 0 : index
    %c0_14 = arith.constant 0 : index
    %7 = vector.load %arg11[%c0_13, %c0_14] : memref<32x32xf32, #tpu.memory_space<vmem>>, vector<32x32xf32>
    %c0_15 = arith.constant 0 : index
    %c0_16 = arith.constant 0 : index
    %8 = vector.load %arg12[%c0_15, %c0_16] : memref<1x16xf32, #tpu.memory_space<vmem>>, vector<1x16xf32>
    %c0_17 = arith.constant 0 : index
    %c0_18 = arith.constant 0 : index
    %9 = vector.load %arg13[%c0_17, %c0_18] : memref<32x16xf32, #tpu.memory_space<vmem>>, vector<32x16xf32>
    %c0_19 = arith.constant 0 : index
    %c0_20 = arith.constant 0 : index
    %10 = vector.load %arg14[%c0_19, %c0_20] : memref<1x32xf32, #tpu.memory_space<vmem>>, vector<1x32xf32>
    %c0_21 = arith.constant 0 : index
    %c0_22 = arith.constant 0 : index
    %11 = vector.load %arg15[%c0_21, %c0_22] : memref<16x32xf32, #tpu.memory_space<vmem>>, vector<16x32xf32>
    %c0_23 = arith.constant 0 : index
    %c0_24 = arith.constant 0 : index
    %12 = vector.load %arg16[%c0_23, %c0_24] : memref<1x32xf32, #tpu.memory_space<vmem>>, vector<1x32xf32>
    %c0_25 = arith.constant 0 : index
    %c0_26 = arith.constant 0 : index
    %13 = vector.load %arg17[%c0_25, %c0_26] : memref<32x32xf32, #tpu.memory_space<vmem>>, vector<32x32xf32>
    %c0_27 = arith.constant 0 : index
    %c0_28 = arith.constant 0 : index
    %14 = vector.load %arg18[%c0_27, %c0_28] : memref<1x32xf32, #tpu.memory_space<vmem>>, vector<1x32xf32>
    %c0_29 = arith.constant 0 : index
    %c0_30 = arith.constant 0 : index
    %15 = vector.load %arg19[%c0_29, %c0_30] : memref<32x32xf32, #tpu.memory_space<vmem>>, vector<32x32xf32>
    %c0_31 = arith.constant 0 : index
    %c0_32 = arith.constant 0 : index
    %16 = vector.load %arg20[%c0_31, %c0_32] : memref<1x16xf32, #tpu.memory_space<vmem>>, vector<1x16xf32>
    %c0_33 = arith.constant 0 : index
    %c0_34 = arith.constant 0 : index
    %17 = vector.load %arg21[%c0_33, %c0_34] : memref<32x16xf32, #tpu.memory_space<vmem>>, vector<32x16xf32>
    %c0_35 = arith.constant 0 : index
    %c0_36 = arith.constant 0 : index
    %18 = vector.load %arg22[%c0_35, %c0_36] : memref<1x96xf32, #tpu.memory_space<vmem>>, vector<1x96xf32>
    %c0_37 = arith.constant 0 : index
    %c0_38 = arith.constant 0 : index
    %19 = vector.load %arg23[%c0_37, %c0_38] : memref<1x64xf32, #tpu.memory_space<vmem>>, vector<1x64xf32>
    %c0_39 = arith.constant 0 : index
    %c0_40 = arith.constant 0 : index
    %20 = vector.load %arg24[%c0_39, %c0_40] : memref<32x64xf32, #tpu.memory_space<vmem>>, vector<32x64xf32>
    %c0_41 = arith.constant 0 : index
    %c0_42 = arith.constant 0 : index
    %21 = vector.load %arg25[%c0_41, %c0_42] : memref<1x32xf32, #tpu.memory_space<vmem>>, vector<1x32xf32>
    %c0_43 = arith.constant 0 : index
    %c0_44 = arith.constant 0 : index
    %22 = vector.load %arg26[%c0_43, %c0_44] : memref<64x32xf32, #tpu.memory_space<vmem>>, vector<64x32xf32>
    %c0_45 = arith.constant 0 : index
    %c0_46 = arith.constant 0 : index
    %23 = vector.load %arg27[%c0_45, %c0_46] : memref<1x32xf32, #tpu.memory_space<vmem>>, vector<1x32xf32>
    %c0_47 = arith.constant 0 : index
    %c0_48 = arith.constant 0 : index
    %24 = vector.load %arg28[%c0_47, %c0_48] : memref<1x32xf32, #tpu.memory_space<vmem>>, vector<1x32xf32>
    %c0_49 = arith.constant 0 : index
    %c0_50 = arith.constant 0 : index
    %25 = vector.load %arg29[%c0_49, %c0_50] : memref<1x32xf32, #tpu.memory_space<vmem>>, vector<1x32xf32>
    %c0_51 = arith.constant 0 : index
    %c0_52 = arith.constant 0 : index
    %26 = vector.load %arg30[%c0_51, %c0_52] : memref<1x32xf32, #tpu.memory_space<vmem>>, vector<1x32xf32>
    %c0_53 = arith.constant 0 : index
    %c0_54 = arith.constant 0 : index
    %27 = vector.load %arg31[%c0_53, %c0_54] : memref<1x32xf32, #tpu.memory_space<vmem>>, vector<1x32xf32>
    %c0_55 = arith.constant 0 : index
    %c0_56 = arith.constant 0 : index
    %28 = vector.load %arg32[%c0_55, %c0_56] : memref<32x32xf32, #tpu.memory_space<vmem>>, vector<32x32xf32>
    %c0_57 = arith.constant 0 : index
    %c0_58 = arith.constant 0 : index
    %29 = vector.load %arg33[%c0_57, %c0_58] : memref<32x96xf32, #tpu.memory_space<vmem>>, vector<32x96xf32>
    %c0_59 = arith.constant 0 : index
    %c0_60 = arith.constant 0 : index
    %30 = vector.load %arg34[%c0_59, %c0_60] : memref<1x96xf32, #tpu.memory_space<vmem>>, vector<1x96xf32>
    %c0_61 = arith.constant 0 : index
    %c0_62 = arith.constant 0 : index
    %31 = vector.load %arg35[%c0_61, %c0_62] : memref<1x64xf32, #tpu.memory_space<vmem>>, vector<1x64xf32>
    %c0_63 = arith.constant 0 : index
    %c0_64 = arith.constant 0 : index
    %32 = vector.load %arg36[%c0_63, %c0_64] : memref<32x64xf32, #tpu.memory_space<vmem>>, vector<32x64xf32>
    %c0_65 = arith.constant 0 : index
    %c0_66 = arith.constant 0 : index
    %33 = vector.load %arg37[%c0_65, %c0_66] : memref<1x32xf32, #tpu.memory_space<vmem>>, vector<1x32xf32>
    %c0_67 = arith.constant 0 : index
    %c0_68 = arith.constant 0 : index
    %34 = vector.load %arg38[%c0_67, %c0_68] : memref<64x32xf32, #tpu.memory_space<vmem>>, vector<64x32xf32>
    %c0_69 = arith.constant 0 : index
    %c0_70 = arith.constant 0 : index
    %35 = vector.load %arg39[%c0_69, %c0_70] : memref<1x32xf32, #tpu.memory_space<vmem>>, vector<1x32xf32>
    %c0_71 = arith.constant 0 : index
    %c0_72 = arith.constant 0 : index
    %36 = vector.load %arg40[%c0_71, %c0_72] : memref<1x32xf32, #tpu.memory_space<vmem>>, vector<1x32xf32>
    %c0_73 = arith.constant 0 : index
    %c0_74 = arith.constant 0 : index
    %37 = vector.load %arg41[%c0_73, %c0_74] : memref<1x32xf32, #tpu.memory_space<vmem>>, vector<1x32xf32>
    %c0_75 = arith.constant 0 : index
    %c0_76 = arith.constant 0 : index
    %38 = vector.load %arg42[%c0_75, %c0_76] : memref<1x32xf32, #tpu.memory_space<vmem>>, vector<1x32xf32>
    %c0_77 = arith.constant 0 : index
    %c0_78 = arith.constant 0 : index
    %39 = vector.load %arg43[%c0_77, %c0_78] : memref<1x32xf32, #tpu.memory_space<vmem>>, vector<1x32xf32>
    %c0_79 = arith.constant 0 : index
    %c0_80 = arith.constant 0 : index
    %40 = vector.load %arg44[%c0_79, %c0_80] : memref<32x32xf32, #tpu.memory_space<vmem>>, vector<32x32xf32>
    %c0_81 = arith.constant 0 : index
    %c0_82 = arith.constant 0 : index
    %41 = vector.load %arg45[%c0_81, %c0_82] : memref<32x96xf32, #tpu.memory_space<vmem>>, vector<32x96xf32>
    %c0_83 = arith.constant 0 : index
    %c0_84 = arith.constant 0 : index
    %42 = vector.load %arg46[%c0_83, %c0_84] : memref<1x16xf32, #tpu.memory_space<vmem>>, vector<1x16xf32>
    %c0_85 = arith.constant 0 : index
    %c0_86 = arith.constant 0 : index
    %43 = vector.load %arg47[%c0_85, %c0_86] : memref<32x16xf32, #tpu.memory_space<vmem>>, vector<32x16xf32>
    %c0_87 = arith.constant 0 : index
    %c0_88 = arith.constant 0 : index
    %44 = vector.load %arg48[%c0_87, %c0_88] : memref<1x8xf32, #tpu.memory_space<vmem>>, vector<1x8xf32>
    %c0_89 = arith.constant 0 : index
    %c0_90 = arith.constant 0 : index
    %45 = vector.load %arg49[%c0_89, %c0_90] : memref<16x8xf32, #tpu.memory_space<vmem>>, vector<16x8xf32>
    %c0_91 = arith.constant 0 : index
    %c0_92 = arith.constant 0 : index
    %46 = vector.load %arg50[%c0_91, %c0_92] : memref<1x4xf32, #tpu.memory_space<vmem>>, vector<1x4xf32>
    %c0_93 = arith.constant 0 : index
    %c0_94 = arith.constant 0 : index
    %47 = vector.load %arg51[%c0_93, %c0_94] : memref<8x4xf32, #tpu.memory_space<vmem>>, vector<8x4xf32>
    %c0_95 = arith.constant 0 : index
    %c0_96 = arith.constant 0 : index
    %48 = vector.load %arg1[%c0_95, %c0_96] : memref<16x8xf32, #tpu.memory_space<vmem>>, vector<16x8xf32>
    %c0_97 = arith.constant 0 : index
    %c0_98 = arith.constant 0 : index
    %49 = vector.load %arg2[%c0_97, %c0_98] : memref<16x8xf32, #tpu.memory_space<vmem>>, vector<16x8xf32>
    %c0_99 = arith.constant 0 : index
    %c0_100 = arith.constant 0 : index
    %50 = vector.load %arg3[%c0_99, %c0_100] : memref<16x16xf32, #tpu.memory_space<vmem>>, vector<16x16xf32>
    %cst = arith.constant dense<0.000000e+00> : vector<16x32xf32>
    %51 = tpu.matmul %50, %11, %cst {dimension_numbers = #tpu.dot_dimension_numbers<[1], [0], [0], [1], [0, 0, 1, 1], [], []>} : vector<16x16xf32>, vector<16x32xf32>, vector<16x32xf32> -> vector<16x32xf32>
    %52 = vector.broadcast %10 : vector<1x32xf32> to vector<16x32xf32>
    %53 = arith.addf %51, %52 : vector<16x32xf32>
    %cst_101 = arith.constant 0.000000e+00 : f32
    %54 = vector.broadcast %cst_101 : f32 to vector<16x32xf32>
    %55 = arith.maximumf %53, %54 : vector<16x32xf32>
    %cst_102 = arith.constant dense<0.000000e+00> : vector<16x32xf32>
    %56 = tpu.matmul %55, %13, %cst_102 {dimension_numbers = #tpu.dot_dimension_numbers<[1], [0], [0], [1], [0, 0, 1, 1], [], []>} : vector<16x32xf32>, vector<32x32xf32>, vector<16x32xf32> -> vector<16x32xf32>
    %57 = vector.broadcast %12 : vector<1x32xf32> to vector<16x32xf32>
    %58 = arith.addf %56, %57 : vector<16x32xf32>
    %cst_103 = arith.constant 0.000000e+00 : f32
    %59 = vector.broadcast %cst_103 : f32 to vector<16x32xf32>
    %60 = arith.maximumf %58, %59 : vector<16x32xf32>
    %cst_104 = arith.constant dense<0.000000e+00> : vector<16x32xf32>
    %61 = tpu.matmul %60, %15, %cst_104 {dimension_numbers = #tpu.dot_dimension_numbers<[1], [0], [0], [1], [0, 0, 1, 1], [], []>} : vector<16x32xf32>, vector<32x32xf32>, vector<16x32xf32> -> vector<16x32xf32>
    %62 = vector.broadcast %14 : vector<1x32xf32> to vector<16x32xf32>
    %63 = arith.addf %61, %62 : vector<16x32xf32>
    %cst_105 = arith.constant 0.000000e+00 : f32
    %64 = vector.broadcast %cst_105 : f32 to vector<16x32xf32>
    %65 = arith.maximumf %63, %64 : vector<16x32xf32>
    %cst_106 = arith.constant dense<0.000000e+00> : vector<16x16xf32>
    %66 = tpu.matmul %65, %17, %cst_106 {dimension_numbers = #tpu.dot_dimension_numbers<[1], [0], [0], [1], [0, 0, 1, 1], [], []>} : vector<16x32xf32>, vector<32x16xf32>, vector<16x16xf32> -> vector<16x16xf32>
    %67 = vector.broadcast %16 : vector<1x16xf32> to vector<16x16xf32>
    %68 = arith.addf %66, %67 : vector<16x16xf32>
    %cst_107 = arith.constant dense<0.000000e+00> : vector<16x32xf32>
    %69 = tpu.matmul %49, %3, %cst_107 {dimension_numbers = #tpu.dot_dimension_numbers<[1], [0], [0], [1], [0, 0, 1, 1], [], []>} : vector<16x8xf32>, vector<8x32xf32>, vector<16x32xf32> -> vector<16x32xf32>
    %70 = vector.broadcast %2 : vector<1x32xf32> to vector<16x32xf32>
    %71 = arith.addf %69, %70 : vector<16x32xf32>
    %cst_108 = arith.constant 0.000000e+00 : f32
    %72 = vector.broadcast %cst_108 : f32 to vector<16x32xf32>
    %73 = arith.maximumf %71, %72 : vector<16x32xf32>
    %cst_109 = arith.constant dense<0.000000e+00> : vector<16x32xf32>
    %74 = tpu.matmul %73, %5, %cst_109 {dimension_numbers = #tpu.dot_dimension_numbers<[1], [0], [0], [1], [0, 0, 1, 1], [], []>} : vector<16x32xf32>, vector<32x32xf32>, vector<16x32xf32> -> vector<16x32xf32>
    %75 = vector.broadcast %4 : vector<1x32xf32> to vector<16x32xf32>
    %76 = arith.addf %74, %75 : vector<16x32xf32>
    %cst_110 = arith.constant 0.000000e+00 : f32
    %77 = vector.broadcast %cst_110 : f32 to vector<16x32xf32>
    %78 = arith.maximumf %76, %77 : vector<16x32xf32>
    %cst_111 = arith.constant dense<0.000000e+00> : vector<16x32xf32>
    %79 = tpu.matmul %78, %7, %cst_111 {dimension_numbers = #tpu.dot_dimension_numbers<[1], [0], [0], [1], [0, 0, 1, 1], [], []>} : vector<16x32xf32>, vector<32x32xf32>, vector<16x32xf32> -> vector<16x32xf32>
    %80 = vector.broadcast %6 : vector<1x32xf32> to vector<16x32xf32>
    %81 = arith.addf %79, %80 : vector<16x32xf32>
    %cst_112 = arith.constant 0.000000e+00 : f32
    %82 = vector.broadcast %cst_112 : f32 to vector<16x32xf32>
    %83 = arith.maximumf %81, %82 : vector<16x32xf32>
    %cst_113 = arith.constant dense<0.000000e+00> : vector<16x16xf32>
    %84 = tpu.matmul %83, %9, %cst_113 {dimension_numbers = #tpu.dot_dimension_numbers<[1], [0], [0], [1], [0, 0, 1, 1], [], []>} : vector<16x32xf32>, vector<32x16xf32>, vector<16x16xf32> -> vector<16x16xf32>
    %85 = vector.broadcast %8 : vector<1x16xf32> to vector<16x16xf32>
    %86 = arith.addf %84, %85 : vector<16x16xf32>
    %cst_114 = arith.constant 5.000000e-01 : f32
    %87 = vector.broadcast %cst_114 : f32 to vector<16x16xf32>
    %88 = arith.mulf %87, %86 : vector<16x16xf32>
    %cst_115 = arith.constant 5.000000e-01 : f32
    %89 = vector.broadcast %cst_115 : f32 to vector<16x16xf32>
    %90 = arith.mulf %89, %68 : vector<16x16xf32>
    %91 = arith.addf %88, %90 : vector<16x16xf32>
    %cst_116 = arith.constant dense<0.000000e+00> : vector<16x16xf32>
    %92 = tpu.matmul %48, %1, %cst_116 {dimension_numbers = #tpu.dot_dimension_numbers<[1], [0], [0], [1], [0, 0, 1, 1], [], []>} : vector<16x8xf32>, vector<8x16xf32>, vector<16x16xf32> -> vector<16x16xf32>
    %93 = vector.broadcast %0 : vector<1x16xf32> to vector<16x16xf32>
    %94 = arith.addf %92, %93 : vector<16x16xf32>
    %c0_117 = arith.constant 0 : index
    %c0_118 = arith.constant 0 : index
    %95 = vector.load %arg53[%c0_117, %c0_118] : memref<16x32xf32, #tpu.memory_space<vmem>>, vector<16x16xf32>
    tpu.vector_store %arg53[%c0_117, %c0_118], %94 {strides = array<i32>} : memref<16x32xf32, #tpu.memory_space<vmem>>, vector<16x16xf32>,
    %c0_119 = arith.constant 0 : index
    %c16 = arith.constant 16 : index
    %96 = vector.load %arg53[%c0_119, %c16] : memref<16x32xf32, #tpu.memory_space<vmem>>, vector<16x16xf32>
    tpu.vector_store %arg53[%c0_119, %c16], %91 {strides = array<i32>} : memref<16x32xf32, #tpu.memory_space<vmem>>, vector<16x16xf32>,
    %c0_120 = arith.constant 0 : index
    %c0_121 = arith.constant 0 : index
    %97 = vector.load %arg53[%c0_120, %c0_121] : memref<16x32xf32, #tpu.memory_space<vmem>>, vector<16x32xf32>
    %cst_122 = arith.constant dense<0.000000e+00> : vector<16x96xf32>
    %98 = tpu.matmul %97, %29, %cst_122 {dimension_numbers = #tpu.dot_dimension_numbers<[1], [0], [0], [1], [0, 0, 1, 1], [], []>} : vector<16x32xf32>, vector<32x96xf32>, vector<16x96xf32> -> vector<16x96xf32>
    %99 = vector.broadcast %18 : vector<1x96xf32> to vector<16x96xf32>
    %100 = arith.addf %98, %99 : vector<16x96xf32>
    %101 = vector.extract_strided_slice %100 {offsets = [0, 0], sizes = [16, 32], strides = [1, 1]} : vector<16x96xf32> to vector<16x32xf32>
    %102 = vector.extract_strided_slice %100 {offsets = [0, 32], sizes = [16, 32], strides = [1, 1]} : vector<16x96xf32> to vector<16x32xf32>
    %103 = vector.extract_strided_slice %100 {offsets = [0, 64], sizes = [16, 32], strides = [1, 1]} : vector<16x96xf32> to vector<16x32xf32>
    %104 = vector.extract_strided_slice %101 {offsets = [0, 0], sizes = [16, 8], strides = [1, 1]} : vector<16x32xf32> to vector<16x8xf32>
    %105 = vector.extract_strided_slice %102 {offsets = [0, 0], sizes = [16, 8], strides = [1, 1]} : vector<16x32xf32> to vector<16x8xf32>
    %cst_123 = arith.constant dense<0.000000e+00> : vector<16x16xf32>
    %106 = tpu.matmul %104, %105, %cst_123 {dimension_numbers = #tpu.dot_dimension_numbers<[1], [1], [0], [0], [0, 0, 1, 0], [], []>} : vector<16x8xf32>, vector<16x8xf32>, vector<16x16xf32> -> vector<16x16xf32>
    %cst_124 = arith.constant 0.353553385 : f32
    %107 = vector.broadcast %cst_124 : f32 to vector<16x16xf32>
    %108 = arith.mulf %106, %107 : vector<16x16xf32>
    %cst_125 = arith.constant -5.000000e+00 : f32
    %cst_126 = arith.constant 5.000000e+00 : f32
    %109 = vector.broadcast %cst_125 : f32 to vector<16x16xf32>
    %110 = arith.maximumf %109, %108 : vector<16x16xf32>
    %111 = vector.broadcast %cst_126 : f32 to vector<16x16xf32>
    %112 = arith.minimumf %111, %110 : vector<16x16xf32>
    %113 = math.exp %112 : vector<16x16xf32>
    %cst_127 = arith.constant dense<0.000000e+00> : vector<16xf32>
    %114 = vector.multi_reduction <add>, %113, %cst_127 [1] : vector<16x16xf32> to vector<16xf32>
    %115 = vector.shape_cast %114 : vector<16xf32> to vector<16x1xf32>
    %116 = vector.broadcast %115 : vector<16x1xf32> to vector<16x16xf32>
    %117 = arith.divf %113, %116 : vector<16x16xf32>
    %118 = vector.extract_strided_slice %103 {offsets = [0, 0], sizes = [16, 8], strides = [1, 1]} : vector<16x32xf32> to vector<16x8xf32>
    %cst_128 = arith.constant dense<0.000000e+00> : vector<16x8xf32>
    %119 = tpu.matmul %117, %118, %cst_128 {dimension_numbers = #tpu.dot_dimension_numbers<[1], [0], [0], [1], [0, 0, 1, 1], [], []>} : vector<16x16xf32>, vector<16x8xf32>, vector<16x8xf32> -> vector<16x8xf32>
    %120 = vector.extract_strided_slice %28 {offsets = [0, 0], sizes = [8, 32], strides = [1, 1]} : vector<32x32xf32> to vector<8x32xf32>
    %cst_129 = arith.constant dense<0.000000e+00> : vector<16x32xf32>
    %121 = tpu.matmul %119, %120, %cst_129 {dimension_numbers = #tpu.dot_dimension_numbers<[1], [0], [0], [1], [0, 0, 1, 1], [], []>} : vector<16x8xf32>, vector<8x32xf32>, vector<16x32xf32> -> vector<16x32xf32>
    %122 = vector.extract_strided_slice %101 {offsets = [0, 8], sizes = [16, 8], strides = [1, 1]} : vector<16x32xf32> to vector<16x8xf32>
    %123 = vector.extract_strided_slice %102 {offsets = [0, 8], sizes = [16, 8], strides = [1, 1]} : vector<16x32xf32> to vector<16x8xf32>
    %cst_130 = arith.constant dense<0.000000e+00> : vector<16x16xf32>
    %124 = tpu.matmul %122, %123, %cst_130 {dimension_numbers = #tpu.dot_dimension_numbers<[1], [1], [0], [0], [0, 0, 1, 0], [], []>} : vector<16x8xf32>, vector<16x8xf32>, vector<16x16xf32> -> vector<16x16xf32>
    %cst_131 = arith.constant 0.353553385 : f32
    %125 = vector.broadcast %cst_131 : f32 to vector<16x16xf32>
    %126 = arith.mulf %124, %125 : vector<16x16xf32>
    %cst_132 = arith.constant -5.000000e+00 : f32
    %cst_133 = arith.constant 5.000000e+00 : f32
    %127 = vector.broadcast %cst_132 : f32 to vector<16x16xf32>
    %128 = arith.maximumf %127, %126 : vector<16x16xf32>
    %129 = vector.broadcast %cst_133 : f32 to vector<16x16xf32>
    %130 = arith.minimumf %129, %128 : vector<16x16xf32>
    %131 = math.exp %130 : vector<16x16xf32>
    %cst_134 = arith.constant dense<0.000000e+00> : vector<16xf32>
    %132 = vector.multi_reduction <add>, %131, %cst_134 [1] : vector<16x16xf32> to vector<16xf32>
    %133 = vector.shape_cast %132 : vector<16xf32> to vector<16x1xf32>
    %134 = vector.broadcast %133 : vector<16x1xf32> to vector<16x16xf32>
    %135 = arith.divf %131, %134 : vector<16x16xf32>
    %136 = vector.extract_strided_slice %103 {offsets = [0, 8], sizes = [16, 8], strides = [1, 1]} : vector<16x32xf32> to vector<16x8xf32>
    %cst_135 = arith.constant dense<0.000000e+00> : vector<16x8xf32>
    %137 = tpu.matmul %135, %136, %cst_135 {dimension_numbers = #tpu.dot_dimension_numbers<[1], [0], [0], [1], [0, 0, 1, 1], [], []>} : vector<16x16xf32>, vector<16x8xf32>, vector<16x8xf32> -> vector<16x8xf32>
    %138 = vector.extract_strided_slice %28 {offsets = [8, 0], sizes = [8, 32], strides = [1, 1]} : vector<32x32xf32> to vector<8x32xf32>
    %cst_136 = arith.constant dense<0.000000e+00> : vector<16x32xf32>
    %139 = tpu.matmul %137, %138, %cst_136 {dimension_numbers = #tpu.dot_dimension_numbers<[1], [0], [0], [1], [0, 0, 1, 1], [], []>} : vector<16x8xf32>, vector<8x32xf32>, vector<16x32xf32> -> vector<16x32xf32>
    %140 = arith.addf %121, %139 : vector<16x32xf32>
    %141 = vector.extract_strided_slice %101 {offsets = [0, 16], sizes = [16, 8], strides = [1, 1]} : vector<16x32xf32> to vector<16x8xf32>
    %142 = vector.extract_strided_slice %102 {offsets = [0, 16], sizes = [16, 8], strides = [1, 1]} : vector<16x32xf32> to vector<16x8xf32>
    %cst_137 = arith.constant dense<0.000000e+00> : vector<16x16xf32>
    %143 = tpu.matmul %141, %142, %cst_137 {dimension_numbers = #tpu.dot_dimension_numbers<[1], [1], [0], [0], [0, 0, 1, 0], [], []>} : vector<16x8xf32>, vector<16x8xf32>, vector<16x16xf32> -> vector<16x16xf32>
    %cst_138 = arith.constant 0.353553385 : f32
    %144 = vector.broadcast %cst_138 : f32 to vector<16x16xf32>
    %145 = arith.mulf %143, %144 : vector<16x16xf32>
    %cst_139 = arith.constant -5.000000e+00 : f32
    %cst_140 = arith.constant 5.000000e+00 : f32
    %146 = vector.broadcast %cst_139 : f32 to vector<16x16xf32>
    %147 = arith.maximumf %146, %145 : vector<16x16xf32>
    %148 = vector.broadcast %cst_140 : f32 to vector<16x16xf32>
    %149 = arith.minimumf %148, %147 : vector<16x16xf32>
    %150 = math.exp %149 : vector<16x16xf32>
    %cst_141 = arith.constant dense<0.000000e+00> : vector<16xf32>
    %151 = vector.multi_reduction <add>, %150, %cst_141 [1] : vector<16x16xf32> to vector<16xf32>
    %152 = vector.shape_cast %151 : vector<16xf32> to vector<16x1xf32>
    %153 = vector.broadcast %152 : vector<16x1xf32> to vector<16x16xf32>
    %154 = arith.divf %150, %153 : vector<16x16xf32>
    %155 = vector.extract_strided_slice %103 {offsets = [0, 16], sizes = [16, 8], strides = [1, 1]} : vector<16x32xf32> to vector<16x8xf32>
    %cst_142 = arith.constant dense<0.000000e+00> : vector<16x8xf32>
    %156 = tpu.matmul %154, %155, %cst_142 {dimension_numbers = #tpu.dot_dimension_numbers<[1], [0], [0], [1], [0, 0, 1, 1], [], []>} : vector<16x16xf32>, vector<16x8xf32>, vector<16x8xf32> -> vector<16x8xf32>
    %157 = vector.extract_strided_slice %28 {offsets = [16, 0], sizes = [8, 32], strides = [1, 1]} : vector<32x32xf32> to vector<8x32xf32>
    %cst_143 = arith.constant dense<0.000000e+00> : vector<16x32xf32>
    %158 = tpu.matmul %156, %157, %cst_143 {dimension_numbers = #tpu.dot_dimension_numbers<[1], [0], [0], [1], [0, 0, 1, 1], [], []>} : vector<16x8xf32>, vector<8x32xf32>, vector<16x32xf32> -> vector<16x32xf32>
    %159 = arith.addf %140, %158 : vector<16x32xf32>
    %160 = vector.extract_strided_slice %101 {offsets = [0, 24], sizes = [16, 8], strides = [1, 1]} : vector<16x32xf32> to vector<16x8xf32>
    %161 = vector.extract_strided_slice %102 {offsets = [0, 24], sizes = [16, 8], strides = [1, 1]} : vector<16x32xf32> to vector<16x8xf32>
    %cst_144 = arith.constant dense<0.000000e+00> : vector<16x16xf32>
    %162 = tpu.matmul %160, %161, %cst_144 {dimension_numbers = #tpu.dot_dimension_numbers<[1], [1], [0], [0], [0, 0, 1, 0], [], []>} : vector<16x8xf32>, vector<16x8xf32>, vector<16x16xf32> -> vector<16x16xf32>
    %cst_145 = arith.constant 0.353553385 : f32
    %163 = vector.broadcast %cst_145 : f32 to vector<16x16xf32>
    %164 = arith.mulf %162, %163 : vector<16x16xf32>
    %cst_146 = arith.constant -5.000000e+00 : f32
    %cst_147 = arith.constant 5.000000e+00 : f32
    %165 = vector.broadcast %cst_146 : f32 to vector<16x16xf32>
    %166 = arith.maximumf %165, %164 : vector<16x16xf32>
    %167 = vector.broadcast %cst_147 : f32 to vector<16x16xf32>
    %168 = arith.minimumf %167, %166 : vector<16x16xf32>
    %169 = math.exp %168 : vector<16x16xf32>
    %cst_148 = arith.constant dense<0.000000e+00> : vector<16xf32>
    %170 = vector.multi_reduction <add>, %169, %cst_148 [1] : vector<16x16xf32> to vector<16xf32>
    %171 = vector.shape_cast %170 : vector<16xf32> to vector<16x1xf32>
    %172 = vector.broadcast %171 : vector<16x1xf32> to vector<16x16xf32>
    %173 = arith.divf %169, %172 : vector<16x16xf32>
    %174 = vector.extract_strided_slice %103 {offsets = [0, 24], sizes = [16, 8], strides = [1, 1]} : vector<16x32xf32> to vector<16x8xf32>
    %cst_149 = arith.constant dense<0.000000e+00> : vector<16x8xf32>
    %175 = tpu.matmul %173, %174, %cst_149 {dimension_numbers = #tpu.dot_dimension_numbers<[1], [0], [0], [1], [0, 0, 1, 1], [], []>} : vector<16x16xf32>, vector<16x8xf32>, vector<16x8xf32> -> vector<16x8xf32>
    %176 = vector.extract_strided_slice %28 {offsets = [24, 0], sizes = [8, 32], strides = [1, 1]} : vector<32x32xf32> to vector<8x32xf32>
    %cst_150 = arith.constant dense<0.000000e+00> : vector<16x32xf32>
    %177 = tpu.matmul %175, %176, %cst_150 {dimension_numbers = #tpu.dot_dimension_numbers<[1], [0], [0], [1], [0, 0, 1, 1], [], []>} : vector<16x8xf32>, vector<8x32xf32>, vector<16x32xf32> -> vector<16x32xf32>
    %178 = arith.addf %159, %177 : vector<16x32xf32>
    %179 = vector.broadcast %27 : vector<1x32xf32> to vector<16x32xf32>
    %180 = arith.addf %178, %179 : vector<16x32xf32>
    %181 = arith.addf %97, %180 : vector<16x32xf32>
    %cst_151 = arith.constant dense<0.000000e+00> : vector<16xf32>
    %182 = vector.multi_reduction <add>, %181, %cst_151 [1] : vector<16x32xf32> to vector<16xf32>
    %183 = vector.shape_cast %182 : vector<16xf32> to vector<16x1xf32>
    %cst_152 = arith.constant 3.200000e+01 : f32
    %184 = vector.broadcast %cst_152 : f32 to vector<16x1xf32>
    %185 = arith.divf %183, %184 : vector<16x1xf32>
    %186 = vector.broadcast %185 : vector<16x1xf32> to vector<16x32xf32>
    %187 = arith.subf %181, %186 : vector<16x32xf32>
    %188 = arith.mulf %187, %187 : vector<16x32xf32>
    %cst_153 = arith.constant dense<0.000000e+00> : vector<16xf32>
    %189 = vector.multi_reduction <add>, %188, %cst_153 [1] : vector<16x32xf32> to vector<16xf32>
    %190 = vector.shape_cast %189 : vector<16xf32> to vector<16x1xf32>
    %cst_154 = arith.constant 3.200000e+01 : f32
    %191 = vector.broadcast %cst_154 : f32 to vector<16x1xf32>
    %192 = arith.divf %190, %191 : vector<16x1xf32>
    %cst_155 = arith.constant 9.99999974E-6 : f32
    %193 = vector.broadcast %cst_155 : f32 to vector<16x1xf32>
    %194 = arith.addf %192, %193 : vector<16x1xf32>
    %195 = math.rsqrt %194 : vector<16x1xf32>
    %196 = vector.broadcast %195 : vector<16x1xf32> to vector<16x32xf32>
    %197 = arith.mulf %187, %196 : vector<16x32xf32>
    %198 = vector.broadcast %24 : vector<1x32xf32> to vector<16x32xf32>
    %199 = arith.mulf %197, %198 : vector<16x32xf32>
    %200 = vector.broadcast %23 : vector<1x32xf32> to vector<16x32xf32>
    %201 = arith.addf %199, %200 : vector<16x32xf32>
    %cst_156 = arith.constant dense<0.000000e+00> : vector<16x64xf32>
    %202 = tpu.matmul %201, %20, %cst_156 {dimension_numbers = #tpu.dot_dimension_numbers<[1], [0], [0], [1], [0, 0, 1, 1], [], []>} : vector<16x32xf32>, vector<32x64xf32>, vector<16x64xf32> -> vector<16x64xf32>
    %203 = vector.broadcast %19 : vector<1x64xf32> to vector<16x64xf32>
    %204 = arith.addf %202, %203 : vector<16x64xf32>
    %cst_157 = arith.constant 0.000000e+00 : f32
    %205 = vector.broadcast %cst_157 : f32 to vector<16x64xf32>
    %206 = arith.maximumf %204, %205 : vector<16x64xf32>
    %cst_158 = arith.constant dense<0.000000e+00> : vector<16x32xf32>
    %207 = tpu.matmul %206, %22, %cst_158 {dimension_numbers = #tpu.dot_dimension_numbers<[1], [0], [0], [1], [0, 0, 1, 1], [], []>} : vector<16x64xf32>, vector<64x32xf32>, vector<16x32xf32> -> vector<16x32xf32>
    %208 = vector.broadcast %21 : vector<1x32xf32> to vector<16x32xf32>
    %209 = arith.addf %207, %208 : vector<16x32xf32>
    %210 = arith.addf %201, %209 : vector<16x32xf32>
    %cst_159 = arith.constant dense<0.000000e+00> : vector<16xf32>
    %211 = vector.multi_reduction <add>, %210, %cst_159 [1] : vector<16x32xf32> to vector<16xf32>
    %212 = vector.shape_cast %211 : vector<16xf32> to vector<16x1xf32>
    %cst_160 = arith.constant 3.200000e+01 : f32
    %213 = vector.broadcast %cst_160 : f32 to vector<16x1xf32>
    %214 = arith.divf %212, %213 : vector<16x1xf32>
    %215 = vector.broadcast %214 : vector<16x1xf32> to vector<16x32xf32>
    %216 = arith.subf %210, %215 : vector<16x32xf32>
    %217 = arith.mulf %216, %216 : vector<16x32xf32>
    %cst_161 = arith.constant dense<0.000000e+00> : vector<16xf32>
    %218 = vector.multi_reduction <add>, %217, %cst_161 [1] : vector<16x32xf32> to vector<16xf32>
    %219 = vector.shape_cast %218 : vector<16xf32> to vector<16x1xf32>
    %cst_162 = arith.constant 3.200000e+01 : f32
    %220 = vector.broadcast %cst_162 : f32 to vector<16x1xf32>
    %221 = arith.divf %219, %220 : vector<16x1xf32>
    %cst_163 = arith.constant 9.99999974E-6 : f32
    %222 = vector.broadcast %cst_163 : f32 to vector<16x1xf32>
    %223 = arith.addf %221, %222 : vector<16x1xf32>
    %224 = math.rsqrt %223 : vector<16x1xf32>
    %225 = vector.broadcast %224 : vector<16x1xf32> to vector<16x32xf32>
    %226 = arith.mulf %216, %225 : vector<16x32xf32>
    %227 = vector.broadcast %26 : vector<1x32xf32> to vector<16x32xf32>
    %228 = arith.mulf %226, %227 : vector<16x32xf32>
    %229 = vector.broadcast %25 : vector<1x32xf32> to vector<16x32xf32>
    %230 = arith.addf %228, %229 : vector<16x32xf32>
    %cst_164 = arith.constant dense<0.000000e+00> : vector<16x96xf32>
    %231 = tpu.matmul %230, %41, %cst_164 {dimension_numbers = #tpu.dot_dimension_numbers<[1], [0], [0], [1], [0, 0, 1, 1], [], []>} : vector<16x32xf32>, vector<32x96xf32>, vector<16x96xf32> -> vector<16x96xf32>
    %232 = vector.broadcast %30 : vector<1x96xf32> to vector<16x96xf32>
    %233 = arith.addf %231, %232 : vector<16x96xf32>
    %234 = vector.extract_strided_slice %233 {offsets = [0, 0], sizes = [16, 32], strides = [1, 1]} : vector<16x96xf32> to vector<16x32xf32>
    %235 = vector.extract_strided_slice %233 {offsets = [0, 32], sizes = [16, 32], strides = [1, 1]} : vector<16x96xf32> to vector<16x32xf32>
    %236 = vector.extract_strided_slice %233 {offsets = [0, 64], sizes = [16, 32], strides = [1, 1]} : vector<16x96xf32> to vector<16x32xf32>
    %237 = vector.extract_strided_slice %234 {offsets = [0, 0], sizes = [16, 8], strides = [1, 1]} : vector<16x32xf32> to vector<16x8xf32>
    %238 = vector.extract_strided_slice %235 {offsets = [0, 0], sizes = [16, 8], strides = [1, 1]} : vector<16x32xf32> to vector<16x8xf32>
    %cst_165 = arith.constant dense<0.000000e+00> : vector<16x16xf32>
    %239 = tpu.matmul %237, %238, %cst_165 {dimension_numbers = #tpu.dot_dimension_numbers<[1], [1], [0], [0], [0, 0, 1, 0], [], []>} : vector<16x8xf32>, vector<16x8xf32>, vector<16x16xf32> -> vector<16x16xf32>
    %cst_166 = arith.constant 0.353553385 : f32
    %240 = vector.broadcast %cst_166 : f32 to vector<16x16xf32>
    %241 = arith.mulf %239, %240 : vector<16x16xf32>
    %cst_167 = arith.constant -5.000000e+00 : f32
    %cst_168 = arith.constant 5.000000e+00 : f32
    %242 = vector.broadcast %cst_167 : f32 to vector<16x16xf32>
    %243 = arith.maximumf %242, %241 : vector<16x16xf32>
    %244 = vector.broadcast %cst_168 : f32 to vector<16x16xf32>
    %245 = arith.minimumf %244, %243 : vector<16x16xf32>
    %246 = math.exp %245 : vector<16x16xf32>
    %cst_169 = arith.constant dense<0.000000e+00> : vector<16xf32>
    %247 = vector.multi_reduction <add>, %246, %cst_169 [1] : vector<16x16xf32> to vector<16xf32>
    %248 = vector.shape_cast %247 : vector<16xf32> to vector<16x1xf32>
    %249 = vector.broadcast %248 : vector<16x1xf32> to vector<16x16xf32>
    %250 = arith.divf %246, %249 : vector<16x16xf32>
    %251 = vector.extract_strided_slice %236 {offsets = [0, 0], sizes = [16, 8], strides = [1, 1]} : vector<16x32xf32> to vector<16x8xf32>
    %cst_170 = arith.constant dense<0.000000e+00> : vector<16x8xf32>
    %252 = tpu.matmul %250, %251, %cst_170 {dimension_numbers = #tpu.dot_dimension_numbers<[1], [0], [0], [1], [0, 0, 1, 1], [], []>} : vector<16x16xf32>, vector<16x8xf32>, vector<16x8xf32> -> vector<16x8xf32>
    %253 = vector.extract_strided_slice %40 {offsets = [0, 0], sizes = [8, 32], strides = [1, 1]} : vector<32x32xf32> to vector<8x32xf32>
    %cst_171 = arith.constant dense<0.000000e+00> : vector<16x32xf32>
    %254 = tpu.matmul %252, %253, %cst_171 {dimension_numbers = #tpu.dot_dimension_numbers<[1], [0], [0], [1], [0, 0, 1, 1], [], []>} : vector<16x8xf32>, vector<8x32xf32>, vector<16x32xf32> -> vector<16x32xf32>
    %255 = vector.extract_strided_slice %234 {offsets = [0, 8], sizes = [16, 8], strides = [1, 1]} : vector<16x32xf32> to vector<16x8xf32>
    %256 = vector.extract_strided_slice %235 {offsets = [0, 8], sizes = [16, 8], strides = [1, 1]} : vector<16x32xf32> to vector<16x8xf32>
    %cst_172 = arith.constant dense<0.000000e+00> : vector<16x16xf32>
    %257 = tpu.matmul %255, %256, %cst_172 {dimension_numbers = #tpu.dot_dimension_numbers<[1], [1], [0], [0], [0, 0, 1, 0], [], []>} : vector<16x8xf32>, vector<16x8xf32>, vector<16x16xf32> -> vector<16x16xf32>
    %cst_173 = arith.constant 0.353553385 : f32
    %258 = vector.broadcast %cst_173 : f32 to vector<16x16xf32>
    %259 = arith.mulf %257, %258 : vector<16x16xf32>
    %cst_174 = arith.constant -5.000000e+00 : f32
    %cst_175 = arith.constant 5.000000e+00 : f32
    %260 = vector.broadcast %cst_174 : f32 to vector<16x16xf32>
    %261 = arith.maximumf %260, %259 : vector<16x16xf32>
    %262 = vector.broadcast %cst_175 : f32 to vector<16x16xf32>
    %263 = arith.minimumf %262, %261 : vector<16x16xf32>
    %264 = math.exp %263 : vector<16x16xf32>
    %cst_176 = arith.constant dense<0.000000e+00> : vector<16xf32>
    %265 = vector.multi_reduction <add>, %264, %cst_176 [1] : vector<16x16xf32> to vector<16xf32>
    %266 = vector.shape_cast %265 : vector<16xf32> to vector<16x1xf32>
    %267 = vector.broadcast %266 : vector<16x1xf32> to vector<16x16xf32>
    %268 = arith.divf %264, %267 : vector<16x16xf32>
    %269 = vector.extract_strided_slice %236 {offsets = [0, 8], sizes = [16, 8], strides = [1, 1]} : vector<16x32xf32> to vector<16x8xf32>
    %cst_177 = arith.constant dense<0.000000e+00> : vector<16x8xf32>
    %270 = tpu.matmul %268, %269, %cst_177 {dimension_numbers = #tpu.dot_dimension_numbers<[1], [0], [0], [1], [0, 0, 1, 1], [], []>} : vector<16x16xf32>, vector<16x8xf32>, vector<16x8xf32> -> vector<16x8xf32>
    %271 = vector.extract_strided_slice %40 {offsets = [8, 0], sizes = [8, 32], strides = [1, 1]} : vector<32x32xf32> to vector<8x32xf32>
    %cst_178 = arith.constant dense<0.000000e+00> : vector<16x32xf32>
    %272 = tpu.matmul %270, %271, %cst_178 {dimension_numbers = #tpu.dot_dimension_numbers<[1], [0], [0], [1], [0, 0, 1, 1], [], []>} : vector<16x8xf32>, vector<8x32xf32>, vector<16x32xf32> -> vector<16x32xf32>
    %273 = arith.addf %254, %272 : vector<16x32xf32>
    %274 = vector.extract_strided_slice %234 {offsets = [0, 16], sizes = [16, 8], strides = [1, 1]} : vector<16x32xf32> to vector<16x8xf32>
    %275 = vector.extract_strided_slice %235 {offsets = [0, 16], sizes = [16, 8], strides = [1, 1]} : vector<16x32xf32> to vector<16x8xf32>
    %cst_179 = arith.constant dense<0.000000e+00> : vector<16x16xf32>
    %276 = tpu.matmul %274, %275, %cst_179 {dimension_numbers = #tpu.dot_dimension_numbers<[1], [1], [0], [0], [0, 0, 1, 0], [], []>} : vector<16x8xf32>, vector<16x8xf32>, vector<16x16xf32> -> vector<16x16xf32>
    %cst_180 = arith.constant 0.353553385 : f32
    %277 = vector.broadcast %cst_180 : f32 to vector<16x16xf32>
    %278 = arith.mulf %276, %277 : vector<16x16xf32>
    %cst_181 = arith.constant -5.000000e+00 : f32
    %cst_182 = arith.constant 5.000000e+00 : f32
    %279 = vector.broadcast %cst_181 : f32 to vector<16x16xf32>
    %280 = arith.maximumf %279, %278 : vector<16x16xf32>
    %281 = vector.broadcast %cst_182 : f32 to vector<16x16xf32>
    %282 = arith.minimumf %281, %280 : vector<16x16xf32>
    %283 = math.exp %282 : vector<16x16xf32>
    %cst_183 = arith.constant dense<0.000000e+00> : vector<16xf32>
    %284 = vector.multi_reduction <add>, %283, %cst_183 [1] : vector<16x16xf32> to vector<16xf32>
    %285 = vector.shape_cast %284 : vector<16xf32> to vector<16x1xf32>
    %286 = vector.broadcast %285 : vector<16x1xf32> to vector<16x16xf32>
    %287 = arith.divf %283, %286 : vector<16x16xf32>
    %288 = vector.extract_strided_slice %236 {offsets = [0, 16], sizes = [16, 8], strides = [1, 1]} : vector<16x32xf32> to vector<16x8xf32>
    %cst_184 = arith.constant dense<0.000000e+00> : vector<16x8xf32>
    %289 = tpu.matmul %287, %288, %cst_184 {dimension_numbers = #tpu.dot_dimension_numbers<[1], [0], [0], [1], [0, 0, 1, 1], [], []>} : vector<16x16xf32>, vector<16x8xf32>, vector<16x8xf32> -> vector<16x8xf32>
    %290 = vector.extract_strided_slice %40 {offsets = [16, 0], sizes = [8, 32], strides = [1, 1]} : vector<32x32xf32> to vector<8x32xf32>
    %cst_185 = arith.constant dense<0.000000e+00> : vector<16x32xf32>
    %291 = tpu.matmul %289, %290, %cst_185 {dimension_numbers = #tpu.dot_dimension_numbers<[1], [0], [0], [1], [0, 0, 1, 1], [], []>} : vector<16x8xf32>, vector<8x32xf32>, vector<16x32xf32> -> vector<16x32xf32>
    %292 = arith.addf %273, %291 : vector<16x32xf32>
    %293 = vector.extract_strided_slice %234 {offsets = [0, 24], sizes = [16, 8], strides = [1, 1]} : vector<16x32xf32> to vector<16x8xf32>
    %294 = vector.extract_strided_slice %235 {offsets = [0, 24], sizes = [16, 8], strides = [1, 1]} : vector<16x32xf32> to vector<16x8xf32>
    %cst_186 = arith.constant dense<0.000000e+00> : vector<16x16xf32>
    %295 = tpu.matmul %293, %294, %cst_186 {dimension_numbers = #tpu.dot_dimension_numbers<[1], [1], [0], [0], [0, 0, 1, 0], [], []>} : vector<16x8xf32>, vector<16x8xf32>, vector<16x16xf32> -> vector<16x16xf32>
    %cst_187 = arith.constant 0.353553385 : f32
    %296 = vector.broadcast %cst_187 : f32 to vector<16x16xf32>
    %297 = arith.mulf %295, %296 : vector<16x16xf32>
    %cst_188 = arith.constant -5.000000e+00 : f32
    %cst_189 = arith.constant 5.000000e+00 : f32
    %298 = vector.broadcast %cst_188 : f32 to vector<16x16xf32>
    %299 = arith.maximumf %298, %297 : vector<16x16xf32>
    %300 = vector.broadcast %cst_189 : f32 to vector<16x16xf32>
    %301 = arith.minimumf %300, %299 : vector<16x16xf32>
    %302 = math.exp %301 : vector<16x16xf32>
    %cst_190 = arith.constant dense<0.000000e+00> : vector<16xf32>
    %303 = vector.multi_reduction <add>, %302, %cst_190 [1] : vector<16x16xf32> to vector<16xf32>
    %304 = vector.shape_cast %303 : vector<16xf32> to vector<16x1xf32>
    %305 = vector.broadcast %304 : vector<16x1xf32> to vector<16x16xf32>
    %306 = arith.divf %302, %305 : vector<16x16xf32>
    %307 = vector.extract_strided_slice %236 {offsets = [0, 24], sizes = [16, 8], strides = [1, 1]} : vector<16x32xf32> to vector<16x8xf32>
    %cst_191 = arith.constant dense<0.000000e+00> : vector<16x8xf32>
    %308 = tpu.matmul %306, %307, %cst_191 {dimension_numbers = #tpu.dot_dimension_numbers<[1], [0], [0], [1], [0, 0, 1, 1], [], []>} : vector<16x16xf32>, vector<16x8xf32>, vector<16x8xf32> -> vector<16x8xf32>
    %309 = vector.extract_strided_slice %40 {offsets = [24, 0], sizes = [8, 32], strides = [1, 1]} : vector<32x32xf32> to vector<8x32xf32>
    %cst_192 = arith.constant dense<0.000000e+00> : vector<16x32xf32>
    %310 = tpu.matmul %308, %309, %cst_192 {dimension_numbers = #tpu.dot_dimension_numbers<[1], [0], [0], [1], [0, 0, 1, 1], [], []>} : vector<16x8xf32>, vector<8x32xf32>, vector<16x32xf32> -> vector<16x32xf32>
    %311 = arith.addf %292, %310 : vector<16x32xf32>
    %312 = vector.broadcast %39 : vector<1x32xf32> to vector<16x32xf32>
    %313 = arith.addf %311, %312 : vector<16x32xf32>
    %314 = arith.addf %230, %313 : vector<16x32xf32>
    %cst_193 = arith.constant dense<0.000000e+00> : vector<16xf32>
    %315 = vector.multi_reduction <add>, %314, %cst_193 [1] : vector<16x32xf32> to vector<16xf32>
    %316 = vector.shape_cast %315 : vector<16xf32> to vector<16x1xf32>
    %cst_194 = arith.constant 3.200000e+01 : f32
    %317 = vector.broadcast %cst_194 : f32 to vector<16x1xf32>
    %318 = arith.divf %316, %317 : vector<16x1xf32>
    %319 = vector.broadcast %318 : vector<16x1xf32> to vector<16x32xf32>
    %320 = arith.subf %314, %319 : vector<16x32xf32>
    %321 = arith.mulf %320, %320 : vector<16x32xf32>
    %cst_195 = arith.constant dense<0.000000e+00> : vector<16xf32>
    %322 = vector.multi_reduction <add>, %321, %cst_195 [1] : vector<16x32xf32> to vector<16xf32>
    %323 = vector.shape_cast %322 : vector<16xf32> to vector<16x1xf32>
    %cst_196 = arith.constant 3.200000e+01 : f32
    %324 = vector.broadcast %cst_196 : f32 to vector<16x1xf32>
    %325 = arith.divf %323, %324 : vector<16x1xf32>
    %cst_197 = arith.constant 9.99999974E-6 : f32
    %326 = vector.broadcast %cst_197 : f32 to vector<16x1xf32>
    %327 = arith.addf %325, %326 : vector<16x1xf32>
    %328 = math.rsqrt %327 : vector<16x1xf32>
    %329 = vector.broadcast %328 : vector<16x1xf32> to vector<16x32xf32>
    %330 = arith.mulf %320, %329 : vector<16x32xf32>
    %331 = vector.broadcast %36 : vector<1x32xf32> to vector<16x32xf32>
    %332 = arith.mulf %330, %331 : vector<16x32xf32>
    %333 = vector.broadcast %35 : vector<1x32xf32> to vector<16x32xf32>
    %334 = arith.addf %332, %333 : vector<16x32xf32>
    %cst_198 = arith.constant dense<0.000000e+00> : vector<16x64xf32>
    %335 = tpu.matmul %334, %32, %cst_198 {dimension_numbers = #tpu.dot_dimension_numbers<[1], [0], [0], [1], [0, 0, 1, 1], [], []>} : vector<16x32xf32>, vector<32x64xf32>, vector<16x64xf32> -> vector<16x64xf32>
    %336 = vector.broadcast %31 : vector<1x64xf32> to vector<16x64xf32>
    %337 = arith.addf %335, %336 : vector<16x64xf32>
    %cst_199 = arith.constant 0.000000e+00 : f32
    %338 = vector.broadcast %cst_199 : f32 to vector<16x64xf32>
    %339 = arith.maximumf %337, %338 : vector<16x64xf32>
    %cst_200 = arith.constant dense<0.000000e+00> : vector<16x32xf32>
    %340 = tpu.matmul %339, %34, %cst_200 {dimension_numbers = #tpu.dot_dimension_numbers<[1], [0], [0], [1], [0, 0, 1, 1], [], []>} : vector<16x64xf32>, vector<64x32xf32>, vector<16x32xf32> -> vector<16x32xf32>
    %341 = vector.broadcast %33 : vector<1x32xf32> to vector<16x32xf32>
    %342 = arith.addf %340, %341 : vector<16x32xf32>
    %343 = arith.addf %334, %342 : vector<16x32xf32>
    %cst_201 = arith.constant dense<0.000000e+00> : vector<16xf32>
    %344 = vector.multi_reduction <add>, %343, %cst_201 [1] : vector<16x32xf32> to vector<16xf32>
    %345 = vector.shape_cast %344 : vector<16xf32> to vector<16x1xf32>
    %cst_202 = arith.constant 3.200000e+01 : f32
    %346 = vector.broadcast %cst_202 : f32 to vector<16x1xf32>
    %347 = arith.divf %345, %346 : vector<16x1xf32>
    %348 = vector.broadcast %347 : vector<16x1xf32> to vector<16x32xf32>
    %349 = arith.subf %343, %348 : vector<16x32xf32>
    %350 = arith.mulf %349, %349 : vector<16x32xf32>
    %cst_203 = arith.constant dense<0.000000e+00> : vector<16xf32>
    %351 = vector.multi_reduction <add>, %350, %cst_203 [1] : vector<16x32xf32> to vector<16xf32>
    %352 = vector.shape_cast %351 : vector<16xf32> to vector<16x1xf32>
    %cst_204 = arith.constant 3.200000e+01 : f32
    %353 = vector.broadcast %cst_204 : f32 to vector<16x1xf32>
    %354 = arith.divf %352, %353 : vector<16x1xf32>
    %cst_205 = arith.constant 9.99999974E-6 : f32
    %355 = vector.broadcast %cst_205 : f32 to vector<16x1xf32>
    %356 = arith.addf %354, %355 : vector<16x1xf32>
    %357 = math.rsqrt %356 : vector<16x1xf32>
    %358 = vector.broadcast %357 : vector<16x1xf32> to vector<16x32xf32>
    %359 = arith.mulf %349, %358 : vector<16x32xf32>
    %360 = vector.broadcast %38 : vector<1x32xf32> to vector<16x32xf32>
    %361 = arith.mulf %359, %360 : vector<16x32xf32>
    %362 = vector.broadcast %37 : vector<1x32xf32> to vector<16x32xf32>
    %363 = arith.addf %361, %362 : vector<16x32xf32>
    %cst_206 = arith.constant dense<0.000000e+00> : vector<16x16xf32>
    %364 = tpu.matmul %363, %43, %cst_206 {dimension_numbers = #tpu.dot_dimension_numbers<[1], [0], [0], [1], [0, 0, 1, 1], [], []>} : vector<16x32xf32>, vector<32x16xf32>, vector<16x16xf32> -> vector<16x16xf32>
    %365 = vector.broadcast %42 : vector<1x16xf32> to vector<16x16xf32>
    %366 = arith.addf %364, %365 : vector<16x16xf32>
    %cst_207 = arith.constant 0.000000e+00 : f32
    %367 = vector.broadcast %cst_207 : f32 to vector<16x16xf32>
    %368 = arith.maximumf %366, %367 : vector<16x16xf32>
    %cst_208 = arith.constant dense<0.000000e+00> : vector<16x8xf32>
    %369 = tpu.matmul %368, %45, %cst_208 {dimension_numbers = #tpu.dot_dimension_numbers<[1], [0], [0], [1], [0, 0, 1, 1], [], []>} : vector<16x16xf32>, vector<16x8xf32>, vector<16x8xf32> -> vector<16x8xf32>
    %370 = vector.broadcast %44 : vector<1x8xf32> to vector<16x8xf32>
    %371 = arith.addf %369, %370 : vector<16x8xf32>
    %cst_209 = arith.constant 0.000000e+00 : f32
    %372 = vector.broadcast %cst_209 : f32 to vector<16x8xf32>
    %373 = arith.maximumf %371, %372 : vector<16x8xf32>
    %cst_210 = arith.constant dense<0.000000e+00> : vector<16x4xf32>
    %374 = tpu.matmul %373, %47, %cst_210 {dimension_numbers = #tpu.dot_dimension_numbers<[1], [0], [0], [1], [0, 0, 1, 1], [], []>} : vector<16x8xf32>, vector<8x4xf32>, vector<16x4xf32> -> vector<16x4xf32>
    %375 = vector.broadcast %46 : vector<1x4xf32> to vector<16x4xf32>
    %376 = arith.addf %374, %375 : vector<16x4xf32>
    %c0_211 = arith.constant 0 : index
    %c0_212 = arith.constant 0 : index
    %377 = vector.load %arg52[%c0_211, %c0_212] : memref<16x4xf32, #tpu.memory_space<vmem>>, vector<16x4xf32>
    tpu.vector_store %arg52[%c0_211, %c0_212], %376 {strides = array<i32>} : memref<16x4xf32, #tpu.memory_space<vmem>>, vector<16x4xf32>,
    return
  }
  func.func @transform_0(%arg0: i32) -> (i32, i32) {
    %c0_i32 = arith.constant 0 : i32
    %c0_i32_0 = arith.constant 0 : i32
    %c0_i32_1 = arith.constant 0 : i32
    return %c0_i32, %c0_i32_0 : i32, i32
  }
  func.func @transform_1(%arg0: i32) -> (i32, i32) {
    %c0_i32 = arith.constant 0 : i32
    %c0_i32_0 = arith.constant 0 : i32
    %c0_i32_1 = arith.constant 0 : i32
    return %c0_i32, %c0_i32_0 : i32, i32
  }
  func.func @transform_2(%arg0: i32) -> (i32, i32) {
    %c0_i32 = arith.constant 0 : i32
    %c0_i32_0 = arith.constant 0 : i32
    %c0_i32_1 = arith.constant 0 : i32
    return %c0_i32, %c0_i32_0 : i32, i32
  }
  func.func @transform_3(%arg0: i32) -> (i32, i32) {
    %c0_i32 = arith.constant 0 : i32
    %c0_i32_0 = arith.constant 0 : i32
    %c0_i32_1 = arith.constant 0 : i32
    return %c0_i32, %c0_i32_0 : i32, i32
  }
  func.func @transform_4(%arg0: i32) -> (i32, i32) {
    %c0_i32 = arith.constant 0 : i32
    %c0_i32_0 = arith.constant 0 : i32
    %c0_i32_1 = arith.constant 0 : i32
    return %c0_i32, %c0_i32_0 : i32, i32
  }
  func.func @transform_5(%arg0: i32) -> (i32, i32) {
    %c0_i32 = arith.constant 0 : i32
    %c0_i32_0 = arith.constant 0 : i32
    %c0_i32_1 = arith.constant 0 : i32
    return %c0_i32, %c0_i32_0 : i32, i32
  }
  func.func @transform_6(%arg0: i32) -> (i32, i32) {
    %c0_i32 = arith.constant 0 : i32
    %c0_i32_0 = arith.constant 0 : i32
    %c0_i32_1 = arith.constant 0 : i32
    return %c0_i32, %c0_i32_0 : i32, i32
  }
  func.func @transform_7(%arg0: i32) -> (i32, i32) {
    %c0_i32 = arith.constant 0 : i32
    %c0_i32_0 = arith.constant 0 : i32
    %c0_i32_1 = arith.constant 0 : i32
    return %c0_i32, %c0_i32_0 : i32, i32
  }
  func.func @transform_8(%arg0: i32) -> (i32, i32) {
    %c0_i32 = arith.constant 0 : i32
    %c0_i32_0 = arith.constant 0 : i32
    %c0_i32_1 = arith.constant 0 : i32
    return %c0_i32, %c0_i32_0 : i32, i32
  }
  func.func @transform_9(%arg0: i32) -> (i32, i32) {
    %c0_i32 = arith.constant 0 : i32
    %c0_i32_0 = arith.constant 0 : i32
    %c0_i32_1 = arith.constant 0 : i32
    return %c0_i32, %c0_i32_0 : i32, i32
  }
  func.func @transform_10(%arg0: i32) -> (i32, i32) {
    %c0_i32 = arith.constant 0 : i32
    %c0_i32_0 = arith.constant 0 : i32
    %c0_i32_1 = arith.constant 0 : i32
    return %c0_i32, %c0_i32_0 : i32, i32
  }
  func.func @transform_11(%arg0: i32) -> (i32, i32) {
    %c0_i32 = arith.constant 0 : i32
    %c0_i32_0 = arith.constant 0 : i32
    %c0_i32_1 = arith.constant 0 : i32
    return %c0_i32, %c0_i32_0 : i32, i32
  }
  func.func @transform_12(%arg0: i32) -> (i32, i32) {
    %c0_i32 = arith.constant 0 : i32
    %c0_i32_0 = arith.constant 0 : i32
    %c0_i32_1 = arith.constant 0 : i32
    return %c0_i32, %c0_i32_0 : i32, i32
  }
  func.func @transform_13(%arg0: i32) -> (i32, i32) {
    %c0_i32 = arith.constant 0 : i32
    %c0_i32_0 = arith.constant 0 : i32
    %c0_i32_1 = arith.constant 0 : i32
    return %c0_i32, %c0_i32_0 : i32, i32
  }
  func.func @transform_14(%arg0: i32) -> (i32, i32) {
    %c0_i32 = arith.constant 0 : i32
    %c0_i32_0 = arith.constant 0 : i32
    %c0_i32_1 = arith.constant 0 : i32
    return %c0_i32, %c0_i32_0 : i32, i32
  }
  func.func @transform_15(%arg0: i32) -> (i32, i32) {
    %c0_i32 = arith.constant 0 : i32
    %c0_i32_0 = arith.constant 0 : i32
    %c0_i32_1 = arith.constant 0 : i32
    return %c0_i32, %c0_i32_0 : i32, i32
  }
  func.func @transform_16(%arg0: i32) -> (i32, i32) {
    %c0_i32 = arith.constant 0 : i32
    %c0_i32_0 = arith.constant 0 : i32
    %c0_i32_1 = arith.constant 0 : i32
    return %c0_i32, %c0_i32_0 : i32, i32
  }
  func.func @transform_17(%arg0: i32) -> (i32, i32) {
    %c0_i32 = arith.constant 0 : i32
    %c0_i32_0 = arith.constant 0 : i32
    %c0_i32_1 = arith.constant 0 : i32
    return %c0_i32, %c0_i32_0 : i32, i32
  }
  func.func @transform_18(%arg0: i32) -> (i32, i32) {
    %c0_i32 = arith.constant 0 : i32
    %c0_i32_0 = arith.constant 0 : i32
    %c0_i32_1 = arith.constant 0 : i32
    return %c0_i32, %c0_i32_0 : i32, i32
  }
  func.func @transform_19(%arg0: i32) -> (i32, i32) {
    %c0_i32 = arith.constant 0 : i32
    %c0_i32_0 = arith.constant 0 : i32
    %c0_i32_1 = arith.constant 0 : i32
    return %c0_i32, %c0_i32_0 : i32, i32
  }
  func.func @transform_20(%arg0: i32) -> (i32, i32) {
    %c0_i32 = arith.constant 0 : i32
    %c0_i32_0 = arith.constant 0 : i32
    %c0_i32_1 = arith.constant 0 : i32
    return %c0_i32, %c0_i32_0 : i32, i32
  }
  func.func @transform_21(%arg0: i32) -> (i32, i32) {
    %c0_i32 = arith.constant 0 : i32
    %c0_i32_0 = arith.constant 0 : i32
    %c0_i32_1 = arith.constant 0 : i32
    return %c0_i32, %c0_i32_0 : i32, i32
  }
  func.func @transform_22(%arg0: i32) -> (i32, i32) {
    %c0_i32 = arith.constant 0 : i32
    %c0_i32_0 = arith.constant 0 : i32
    %c0_i32_1 = arith.constant 0 : i32
    return %c0_i32, %c0_i32_0 : i32, i32
  }
  func.func @transform_23(%arg0: i32) -> (i32, i32) {
    %c0_i32 = arith.constant 0 : i32
    %c0_i32_0 = arith.constant 0 : i32
    %c0_i32_1 = arith.constant 0 : i32
    return %c0_i32, %c0_i32_0 : i32, i32
  }
  func.func @transform_24(%arg0: i32) -> (i32, i32) {
    %c0_i32 = arith.constant 0 : i32
    %c0_i32_0 = arith.constant 0 : i32
    %c0_i32_1 = arith.constant 0 : i32
    return %c0_i32, %c0_i32_0 : i32, i32
  }
  func.func @transform_25(%arg0: i32) -> (i32, i32) {
    %c0_i32 = arith.constant 0 : i32
    %c0_i32_0 = arith.constant 0 : i32
    %c0_i32_1 = arith.constant 0 : i32
    return %c0_i32, %c0_i32_0 : i32, i32
  }
  func.func @transform_26(%arg0: i32) -> (i32, i32) {
    %c0_i32 = arith.constant 0 : i32
    %c0_i32_0 = arith.constant 0 : i32
    %c0_i32_1 = arith.constant 0 : i32
    return %c0_i32, %c0_i32_0 : i32, i32
  }
  func.func @transform_27(%arg0: i32) -> (i32, i32) {
    %c0_i32 = arith.constant 0 : i32
    %c0_i32_0 = arith.constant 0 : i32
    %c0_i32_1 = arith.constant 0 : i32
    return %c0_i32, %c0_i32_0 : i32, i32
  }
  func.func @transform_28(%arg0: i32) -> (i32, i32) {
    %c0_i32 = arith.constant 0 : i32
    %c0_i32_0 = arith.constant 0 : i32
    %c0_i32_1 = arith.constant 0 : i32
    return %c0_i32, %c0_i32_0 : i32, i32
  }
  func.func @transform_29(%arg0: i32) -> (i32, i32) {
    %c0_i32 = arith.constant 0 : i32
    %c0_i32_0 = arith.constant 0 : i32
    %c0_i32_1 = arith.constant 0 : i32
    return %c0_i32, %c0_i32_0 : i32, i32
  }
  func.func @transform_30(%arg0: i32) -> (i32, i32) {
    %c0_i32 = arith.constant 0 : i32
    %c0_i32_0 = arith.constant 0 : i32
    %c0_i32_1 = arith.constant 0 : i32
    return %c0_i32, %c0_i32_0 : i32, i32
  }
  func.func @transform_31(%arg0: i32) -> (i32, i32) {
    %c0_i32 = arith.constant 0 : i32
    %c0_i32_0 = arith.constant 0 : i32
    %c0_i32_1 = arith.constant 0 : i32
    return %c0_i32, %c0_i32_0 : i32, i32
  }
  func.func @transform_32(%arg0: i32) -> (i32, i32) {
    %c0_i32 = arith.constant 0 : i32
    %c0_i32_0 = arith.constant 0 : i32
    %c0_i32_1 = arith.constant 0 : i32
    return %c0_i32, %c0_i32_0 : i32, i32
  }
  func.func @transform_33(%arg0: i32) -> (i32, i32) {
    %c0_i32 = arith.constant 0 : i32
    %c0_i32_0 = arith.constant 0 : i32
    %c0_i32_1 = arith.constant 0 : i32
    return %c0_i32, %c0_i32_0 : i32, i32
  }
  func.func @transform_34(%arg0: i32) -> (i32, i32) {
    %c0_i32 = arith.constant 0 : i32
    %c0_i32_0 = arith.constant 0 : i32
    %c0_i32_1 = arith.constant 0 : i32
    return %c0_i32, %c0_i32_0 : i32, i32
  }
  func.func @transform_35(%arg0: i32) -> (i32, i32) {
    %c0_i32 = arith.constant 0 : i32
    %c0_i32_0 = arith.constant 0 : i32
    %c0_i32_1 = arith.constant 0 : i32
    return %c0_i32, %c0_i32_0 : i32, i32
  }
  func.func @transform_36(%arg0: i32) -> (i32, i32) {
    %c0_i32 = arith.constant 0 : i32
    %c0_i32_0 = arith.constant 0 : i32
    %c0_i32_1 = arith.constant 0 : i32
    return %c0_i32, %c0_i32_0 : i32, i32
  }
  func.func @transform_37(%arg0: i32) -> (i32, i32) {
    %c0_i32 = arith.constant 0 : i32
    %c0_i32_0 = arith.constant 0 : i32
    %c0_i32_1 = arith.constant 0 : i32
    return %c0_i32, %c0_i32_0 : i32, i32
  }
  func.func @transform_38(%arg0: i32) -> (i32, i32) {
    %c0_i32 = arith.constant 0 : i32
    %c0_i32_0 = arith.constant 0 : i32
    %c0_i32_1 = arith.constant 0 : i32
    return %c0_i32, %c0_i32_0 : i32, i32
  }
  func.func @transform_39(%arg0: i32) -> (i32, i32) {
    %c0_i32 = arith.constant 0 : i32
    %c0_i32_0 = arith.constant 0 : i32
    %c0_i32_1 = arith.constant 0 : i32
    return %c0_i32, %c0_i32_0 : i32, i32
  }
  func.func @transform_40(%arg0: i32) -> (i32, i32) {
    %c0_i32 = arith.constant 0 : i32
    %c0_i32_0 = arith.constant 0 : i32
    %c0_i32_1 = arith.constant 0 : i32
    return %c0_i32, %c0_i32_0 : i32, i32
  }
  func.func @transform_41(%arg0: i32) -> (i32, i32) {
    %c0_i32 = arith.constant 0 : i32
    %c0_i32_0 = arith.constant 0 : i32
    %c0_i32_1 = arith.constant 0 : i32
    return %c0_i32, %c0_i32_0 : i32, i32
  }
  func.func @transform_42(%arg0: i32) -> (i32, i32) {
    %c0_i32 = arith.constant 0 : i32
    %c0_i32_0 = arith.constant 0 : i32
    %c0_i32_1 = arith.constant 0 : i32
    return %c0_i32, %c0_i32_0 : i32, i32
  }
  func.func @transform_43(%arg0: i32) -> (i32, i32) {
    %c0_i32 = arith.constant 0 : i32
    %c0_i32_0 = arith.constant 0 : i32
    %c0_i32_1 = arith.constant 0 : i32
    return %c0_i32, %c0_i32_0 : i32, i32
  }
  func.func @transform_44(%arg0: i32) -> (i32, i32) {
    %c0_i32 = arith.constant 0 : i32
    %c0_i32_0 = arith.constant 0 : i32
    %c0_i32_1 = arith.constant 0 : i32
    return %c0_i32, %c0_i32_0 : i32, i32
  }
  func.func @transform_45(%arg0: i32) -> (i32, i32) {
    %c0_i32 = arith.constant 0 : i32
    %c0_i32_0 = arith.constant 0 : i32
    %c0_i32_1 = arith.constant 0 : i32
    return %c0_i32, %c0_i32_0 : i32, i32
  }
  func.func @transform_46(%arg0: i32) -> (i32, i32) {
    %c0_i32 = arith.constant 0 : i32
    %c0_i32_0 = arith.constant 0 : i32
    %c0_i32_1 = arith.constant 0 : i32
    return %c0_i32, %c0_i32_0 : i32, i32
  }
  func.func @transform_47(%arg0: i32) -> (i32, i32) {
    %c0_i32 = arith.constant 0 : i32
    %c0_i32_0 = arith.constant 0 : i32
    %c0_i32_1 = arith.constant 0 : i32
    return %c0_i32, %c0_i32_0 : i32, i32
  }
  func.func @transform_48(%arg0: i32) -> (i32, i32) {
    %c0_i32 = arith.constant 0 : i32
    %c0_i32_0 = arith.constant 0 : i32
    %c0_i32_1 = arith.constant 0 : i32
    return %c0_i32, %c0_i32_0 : i32, i32
  }
  func.func @transform_49(%arg0: i32) -> (i32, i32) {
    %c0_i32 = arith.constant 0 : i32
    %c0_i32_0 = arith.constant 0 : i32
    %c0_i32_1 = arith.constant 0 : i32
    return %c0_i32, %c0_i32_0 : i32, i32
  }
  func.func @transform_50(%arg0: i32) -> (i32, i32) {
    %c0_i32 = arith.constant 0 : i32
    %c0_i32_0 = arith.constant 0 : i32
    %c0_i32_1 = arith.constant 0 : i32
    return %c0_i32, %c0_i32_0 : i32, i32
  }
  func.func @transform_51(%arg0: i32) -> (i32, i32) {
    %c0_i32 = arith.constant 0 : i32
    %c0_i32_0 = arith.constant 0 : i32
    %c0_i32_1 = arith.constant 0 : i32
    return %c0_i32, %c0_i32_0 : i32, i32
  }
}

</mosaic_0001>

<llo_original>
// kernel: tpu_custom_call.1
$region0: #{tpu_custom_call.1}
  #allocation0 [shape = 'u32[]', space=smem, size = 0x4, offset = 0x4, fixed_abs, tag = 'smem constant byte address 0x4 - core index']
  #allocation1 [shape = 'u32[144,128]{1,0:T(1,128)}', space=vmem, size = 0x12000, scoped, tag = 'internal scratch']
  #allocation2 [shape = 'f32[16,32]{1,0:T(8,128)}', space=vmem, size = 0x2000, scoped, tag = 'scratch operand']
  %s0 = inlined_call_operand.smem [shape: u32[52], index: -1, kind: input, shape index: {}]
  %s1 = sld [smem:[%s0]]
  %s2 = scalar_lea.smem %s0, 1
  %s3 = sld [smem:[%s2]]
  %s4 = scalar_lea.smem %s0, 2
  %s5 = sld [smem:[%s4]]
  %s6 = scalar_lea.smem %s0, 3
  %s7 = sld [smem:[%s6]]
  %s8 = scalar_lea.smem %s0, 4
  %s9 = sld [smem:[%s8]]
  %s10 = scalar_lea.smem %s0, 5
  %s11 = sld [smem:[%s10]]
  %s12 = scalar_lea.smem %s0, 6
  %s13 = sld [smem:[%s12]]
  %s14 = scalar_lea.smem %s0, 7
  %s15 = sld [smem:[%s14]]
  %s16 = scalar_lea.smem %s0, 8
  %s17 = sld [smem:[%s16]]
  %s18 = scalar_lea.smem %s0, 9
  %s19 = sld [smem:[%s18]]
  %s20 = scalar_lea.smem %s0, 10
  %s21 = sld [smem:[%s20]]
  %s22 = scalar_lea.smem %s0, 11
  %s23 = sld [smem:[%s22]]
  %s24 = scalar_lea.smem %s0, 12
  %s25 = sld [smem:[%s24]]
  %s26 = scalar_lea.smem %s0, 13
  %s27 = sld [smem:[%s26]]
  %s28 = scalar_lea.smem %s0, 14
  %s29 = sld [smem:[%s28]]
  %s30 = scalar_lea.smem %s0, 15
  %s31 = sld [smem:[%s30]]
  %s32 = scalar_lea.smem %s0, 16
  %s33 = sld [smem:[%s32]]
  %s34 = scalar_lea.smem %s0, 17
  %s35 = sld [smem:[%s34]]
  %s36 = scalar_lea.smem %s0, 18
  %s37 = sld [smem:[%s36]]
  %s38 = scalar_lea.smem %s0, 19
  %s39 = sld [smem:[%s38]]
  %s40 = scalar_lea.smem %s0, 20
  %s41 = sld [smem:[%s40]]
  %s42 = scalar_lea.smem %s0, 21
  %s43 = sld [smem:[%s42]]
  %s44 = scalar_lea.smem %s0, 22
  %s45 = sld [smem:[%s44]]
  %s46 = scalar_lea.smem %s0, 23
  %s47 = sld [smem:[%s46]]
  %s48 = scalar_lea.smem %s0, 24
  %s49 = sld [smem:[%s48]]
  %s50 = scalar_lea.smem %s0, 25
  %s51 = sld [smem:[%s50]]
  %s52 = scalar_lea.smem %s0, 26
  %s53 = sld [smem:[%s52]]
  %s54 = scalar_lea.smem %s0, 27
  %s55 = sld [smem:[%s54]]
  %s56 = scalar_lea.smem %s0, 28
  %s57 = sld [smem:[%s56]]
  %s58 = scalar_lea.smem %s0, 29
  %s59 = sld [smem:[%s58]]
  %s60 = scalar_lea.smem %s0, 30
  %s61 = sld [smem:[%s60]]
  %s62 = scalar_lea.smem %s0, 31
  %s63 = sld [smem:[%s62]]
  %s64 = scalar_lea.smem %s0, 32
  %s65 = sld [smem:[%s64]]
  %s66 = scalar_lea.smem %s0, 33
  %s67 = sld [smem:[%s66]]
  %s68 = scalar_lea.smem %s0, 34
  %s69 = sld [smem:[%s68]]
  %s70 = scalar_lea.smem %s0, 35
  %s71 = sld [smem:[%s70]]
  %s72 = scalar_lea.smem %s0, 36
  %s73 = sld [smem:[%s72]]
  %s74 = scalar_lea.smem %s0, 37
  %s75 = sld [smem:[%s74]]
  %s76 = scalar_lea.smem %s0, 38
  %s77 = sld [smem:[%s76]]
  %s78 = scalar_lea.smem %s0, 39
  %s79 = sld [smem:[%s78]]
  %s80 = scalar_lea.smem %s0, 40
  %s81 = sld [smem:[%s80]]
  %s82 = scalar_lea.smem %s0, 41
  %s83 = sld [smem:[%s82]]
  %s84 = scalar_lea.smem %s0, 42
  %s85 = sld [smem:[%s84]]
  %s86 = scalar_lea.smem %s0, 43
  %s87 = sld [smem:[%s86]]
  %s88 = scalar_lea.smem %s0, 44
  %s89 = sld [smem:[%s88]]
  %s90 = scalar_lea.smem %s0, 45
  %s91 = sld [smem:[%s90]]
  %s92 = scalar_lea.smem %s0, 46
  %s93 = sld [smem:[%s92]]
  %s94 = scalar_lea.smem %s0, 47
  %s95 = sld [smem:[%s94]]
  %s96 = scalar_lea.smem %s0, 48
  %s97 = sld [smem:[%s96]]
  %s98 = scalar_lea.smem %s0, 49
  %s99 = sld [smem:[%s98]]
  %s100 = scalar_lea.smem %s0, 50
  %s101 = sld [smem:[%s100]]
  %s102 = scalar_lea.smem %s0, 51
  %s103 = sld [smem:[%s102]]
  %s104 = sld [smem:[#allocation0]]
  $region250: #{tpu_custom_call.1} parent=0
    _
  %s106 = ssub.s32 1, %s104
  %s107 = scalar_select 0, %s106, %s104
  $region1: #{tpu_custom_call.1} parent=0
    #allocation3 [shape = 'u8[8192]{0}', space=vmem, size = 0x2000, scoped, tag = 'input window, operand 2, single buffered']
    #allocation4 [shape = 's32[1]{0}', space=sflag, size = 0x4, scoped, tag = 'scoped memory for tpu_custom_call.1']
    #allocation5 [shape = 'u8[512]{0}', space=vmem, size = 0x400, scoped, tag = 'input window, operand 3, single buffered']
    #allocation6 [shape = 's32[1]{0}', space=sflag, size = 0x4, scoped, tag = 'scoped memory for tpu_custom_call.1']
    #allocation7 [shape = 'u8[4096]{0}', space=vmem, size = 0x1000, scoped, tag = 'input window, operand 4, single buffered']
    #allocation8 [shape = 'u8[512]{0}', space=vmem, size = 0x400, scoped, tag = 'input window, operand 5, single buffered']
    #allocation9 [shape = 's32[1]{0}', space=sflag, size = 0x4, scoped, tag = 'scoped memory for tpu_custom_call.1']
    #allocation10 [shape = 'u8[4096]{0}', space=vmem, size = 0x1000, scoped, tag = 'input window, operand 6, single buffered']
    #allocation11 [shape = 'u8[512]{0}', space=vmem, size = 0x400, scoped, tag = 'input window, operand 7, single buffered']
    #allocation12 [shape = 's32[1]{0}', space=sflag, size = 0x4, scoped, tag = 'scoped memory for tpu_custom_call.1']
    #allocation13 [shape = 'u8[512]{0}', space=vmem, size = 0x400, scoped, tag = 'input window, operand 9, single buffered']
    #allocation14 [shape = 'u8[512]{0}', space=vmem, size = 0x400, scoped, tag = 'input window, operand 11, single buffered']
    #allocation15 [shape = 's32[1]{0}', space=sflag, size = 0x4, scoped, tag = 'scoped memory for tpu_custom_call.1']
    #allocation16 [shape = 'u8[8192]{0}', space=vmem, size = 0x2000, scoped, tag = 'input window, operand 14, single buffered']
    %108 = vsyncpa [#allocation4], 0
    %109 = vsyncpa [#allocation6], 0
    %110 = vsyncpa [#allocation9], 0
    %111 = vsyncpa [#allocation12], 0
    %112 = vsyncpa [#allocation15], 0
    // Predicated region
    $region2: #{tpu_custom_call.1} parent=1 // pred_check
      _
    $region3: #{tpu_custom_call.1} parent=1 // pred_check_branch
      %114 = sbr.rel (0) target = $region5
    $region4: #{tpu_custom_call.1} parent=1 // pred_region
      _
    $region5: #{tpu_custom_call.1} parent=1 // pred_fallthru
      _
    // Predicated region
    $region6: #{tpu_custom_call.1} parent=1 // pred_check
      _
    $region7: #{tpu_custom_call.1} parent=1 // pred_check_branch
      %116 = sbr.rel (0) target = $region9
    $region8: #{tpu_custom_call.1} parent=1 // pred_region
      _
    $region9: #{tpu_custom_call.1} parent=1 // pred_fallthru
      _
    // Predicated region
    $region10: #{tpu_custom_call.1} parent=1 // pred_check
      _
    $region11: #{tpu_custom_call.1} parent=1 // pred_check_branch
      %118 = sbr.rel (0) target = $region13
    $region12: #{tpu_custom_call.1} parent=1 // pred_region
      %s120 = ssub.s32 256, 256
      %121 = vsyncadd [#allocation4], %s120
      %s122 = sshll.u32 [#allocation3], 4
      %s123 = int_to_ptr.vmem [resolvable:$true] %s122
      %128 = dma.hbm_to_vmem [thread:$0]  %s5, 256, %s123, [#allocation4], 128, 128, 8
    $region13: #{tpu_custom_call.1} parent=1 // pred_fallthru
      _
    // Predicated region
    $region14: #{tpu_custom_call.1} parent=1 // pred_check
      _
    $region15: #{tpu_custom_call.1} parent=1 // pred_check_branch
      %130 = sbr.rel (0) target = $region17
    $region16: #{tpu_custom_call.1} parent=1 // pred_region
      %s132 = ssub.s32 16, 16
      %133 = vsyncadd [#allocation6], %s132
      %s135 = sshll.u32 [#allocation5], 4
      %s136 = int_to_ptr.vmem [resolvable:$true] %s135
      %138 = dma.hbm_to_vmem [thread:$0]  %s7, 16, %s136, [#allocation6]
    $region17: #{tpu_custom_call.1} parent=1 // pred_fallthru
      _
    // Predicated region
    $region18: #{tpu_custom_call.1} parent=1 // pred_check
      _
    $region19: #{tpu_custom_call.1} parent=1 // pred_check_branch
      %140 = sbr.rel (0) target = $region21
    $region20: #{tpu_custom_call.1} parent=1 // pred_region
      %s142 = ssub.s32 128, 128
      %143 = vsyncadd [#allocation6], %s142
      %s145 = sshll.u32 [#allocation7], 4
      %s146 = int_to_ptr.vmem [resolvable:$true] %s145
      %148 = dma.hbm_to_vmem [thread:$0]  %s9, 128, %s146, [#allocation6]
    $region21: #{tpu_custom_call.1} parent=1 // pred_fallthru
      _
    // Predicated region
    $region22: #{tpu_custom_call.1} parent=1 // pred_check
      _
    $region23: #{tpu_custom_call.1} parent=1 // pred_check_branch
      %150 = sbr.rel (0) target = $region25
    $region24: #{tpu_custom_call.1} parent=1 // pred_region
      %s152 = ssub.s32 16, 16
      %153 = vsyncadd [#allocation9], %s152
      %s155 = sshll.u32 [#allocation8], 4
      %s156 = int_to_ptr.vmem [resolvable:$true] %s155
      %158 = dma.hbm_to_vmem [thread:$0]  %s11, 16, %s156, [#allocation9]
    $region25: #{tpu_custom_call.1} parent=1 // pred_fallthru
      _
    // Predicated region
    $region26: #{tpu_custom_call.1} parent=1 // pred_check
      _
    $region27: #{tpu_custom_call.1} parent=1 // pred_check_branch
      %160 = sbr.rel (0) target = $region29
    $region28: #{tpu_custom_call.1} parent=1 // pred_region
      %s162 = ssub.s32 128, 128
      %163 = vsyncadd [#allocation9], %s162
      %s165 = sshll.u32 [#allocation10], 4
      %s166 = int_to_ptr.vmem [resolvable:$true] %s165
      %168 = dma.hbm_to_vmem [thread:$0]  %s13, 128, %s166, [#allocation9]
    $region29: #{tpu_custom_call.1} parent=1 // pred_fallthru
      _
    // Predicated region
    $region30: #{tpu_custom_call.1} parent=1 // pred_check
      _
    $region31: #{tpu_custom_call.1} parent=1 // pred_check_branch
      %170 = sbr.rel (0) target = $region33
    $region32: #{tpu_custom_call.1} parent=1 // pred_region
      %s172 = ssub.s32 16, 16
      %173 = vsyncadd [#allocation12], %s172
      %s175 = sshll.u32 [#allocation11], 4
      %s176 = int_to_ptr.vmem [resolvable:$true] %s175
      %178 = dma.hbm_to_vmem [thread:$0]  %s15, 16, %s176, [#allocation12]
    $region33: #{tpu_custom_call.1} parent=1 // pred_fallthru
      _
    // Predicated region
    $region34: #{tpu_custom_call.1} parent=1 // pred_check
      _
    $region35: #{tpu_custom_call.1} parent=1 // pred_check_branch
      %180 = sbr.rel (0) target = $region37
    $region36: #{tpu_custom_call.1} parent=1 // pred_region
      _
    $region37: #{tpu_custom_call.1} parent=1 // pred_fallthru
      _
    // Predicated region
    $region38: #{tpu_custom_call.1} parent=1 // pred_check
      _
    $region39: #{tpu_custom_call.1} parent=1 // pred_check_branch
      %182 = sbr.rel (0) target = $region41
    $region40: #{tpu_custom_call.1} parent=1 // pred_region
      %s184 = ssub.s32 16, 16
      %185 = vsyncadd [#allocation12], %s184
      %s187 = sshll.u32 [#allocation13], 4
      %s188 = int_to_ptr.vmem [resolvable:$true] %s187
      %190 = dma.hbm_to_vmem [thread:$0]  %s19, 16, %s188, [#allocation12]
    $region41: #{tpu_custom_call.1} parent=1 // pred_fallthru
      _
    // Predicated region
    $region42: #{tpu_custom_call.1} parent=1 // pred_check
      _
    $region43: #{tpu_custom_call.1} parent=1 // pred_check_branch
      %192 = sbr.rel (0) target = $region45
    $region44: #{tpu_custom_call.1} parent=1 // pred_region
      _
    $region45: #{tpu_custom_call.1} parent=1 // pred_fallthru
      _
    // Predicated region
    $region46: #{tpu_custom_call.1} parent=1 // pred_check
      _
    $region47: #{tpu_custom_call.1} parent=1 // pred_check_branch
      %194 = sbr.rel (0) target = $region49
    $region48: #{tpu_custom_call.1} parent=1 // pred_region
      %s196 = ssub.s32 16, 16
      %197 = vsyncadd [#allocation15], %s196
      %s199 = sshll.u32 [#allocation14], 4
      %s200 = int_to_ptr.vmem [resolvable:$true] %s199
      %202 = dma.hbm_to_vmem [thread:$0]  %s23, 16, %s200, [#allocation15]
    $region49: #{tpu_custom_call.1} parent=1 // pred_fallthru
      _
    // Predicated region
    $region50: #{tpu_custom_call.1} parent=1 // pred_check
      _
    $region51: #{tpu_custom_call.1} parent=1 // pred_check_branch
      %204 = sbr.rel (0) target = $region53
    $region52: #{tpu_custom_call.1} parent=1 // pred_region
      _
    $region53: #{tpu_custom_call.1} parent=1 // pred_fallthru
      _
    // Predicated region
    $region54: #{tpu_custom_call.1} parent=1 // pred_check
      _
    $region55: #{tpu_custom_call.1} parent=1 // pred_check_branch
      %206 = sbr.rel (0) target = $region57
    $region56: #{tpu_custom_call.1} parent=1 // pred_region
      _
    $region57: #{tpu_custom_call.1} parent=1 // pred_fallthru
      _
    // Predicated region
    $region58: #{tpu_custom_call.1} parent=1 // pred_check
      _
    $region59: #{tpu_custom_call.1} parent=1 // pred_check_branch
      %208 = sbr.rel (0) target = $region61
    $region60: #{tpu_custom_call.1} parent=1 // pred_region
      %s210 = ssub.s32 256, 256
      %211 = vsyncadd [#allocation15], %s210
      %s212 = sshll.u32 [#allocation16], 4
      %s213 = int_to_ptr.vmem [resolvable:$true] %s212
      %218 = dma.hbm_to_vmem [thread:$0]  %s29, 256, %s213, [#allocation15], 128, 128, 8
    $region61: #{tpu_custom_call.1} parent=1 // pred_fallthru
      _
    // Predicated region
    $region62: #{tpu_custom_call.1} parent=1 // pred_check
      _
    $region63: #{tpu_custom_call.1} parent=1 // pred_check_branch
      %220 = sbr.rel (0) target = $region65
    $region64: #{tpu_custom_call.1} parent=1 // pred_region
      _
    $region65: #{tpu_custom_call.1} parent=1 // pred_fallthru
      _
    // Predicated region
    $region66: #{tpu_custom_call.1} parent=1 // pred_check
      _
    $region67: #{tpu_custom_call.1} parent=1 // pred_check_branch
      %222 = sbr.rel (0) target = $region69
    $region68: #{tpu_custom_call.1} parent=1 // pred_region
      _
    $region69: #{tpu_custom_call.1} parent=1 // pred_fallthru
      _
    // Predicated region
    $region70: #{tpu_custom_call.1} parent=1 // pred_check
      _
    $region71: #{tpu_custom_call.1} parent=1 // pred_check_branch
      %224 = sbr.rel (0) target = $region73
    $region72: #{tpu_custom_call.1} parent=1 // pred_region
      _
    $region73: #{tpu_custom_call.1} parent=1 // pred_fallthru
      _
    // Predicated region
    $region74: #{tpu_custom_call.1} parent=1 // pred_check
      _
    $region75: #{tpu_custom_call.1} parent=1 // pred_check_branch
      %226 = sbr.rel (0) target = $region77
    $region76: #{tpu_custom_call.1} parent=1 // pred_region
      _
    $region77: #{tpu_custom_call.1} parent=1 // pred_fallthru
      _
    // Predicated region
    $region78: #{tpu_custom_call.1} parent=1 // pred_check
      _
    $region79: #{tpu_custom_call.1} parent=1 // pred_check_branch
      %228 = sbr.rel (0) target = $region81
    $region80: #{tpu_custom_call.1} parent=1 // pred_region
      _
    $region81: #{tpu_custom_call.1} parent=1 // pred_fallthru
      _
    // Predicated region
    $region82: #{tpu_custom_call.1} parent=1 // pred_check
      _
    $region83: #{tpu_custom_call.1} parent=1 // pred_check_branch
      %230 = sbr.rel (0) target = $region85
    $region84: #{tpu_custom_call.1} parent=1 // pred_region
      _
    $region85: #{tpu_custom_call.1} parent=1 // pred_fallthru
      _
    // Predicated region
    $region86: #{tpu_custom_call.1} parent=1 // pred_check
      _
    $region87: #{tpu_custom_call.1} parent=1 // pred_check_branch
      %232 = sbr.rel (0) target = $region89
    $region88: #{tpu_custom_call.1} parent=1 // pred_region
      _
    $region89: #{tpu_custom_call.1} parent=1 // pred_fallthru
      _
    // Predicated region
    $region90: #{tpu_custom_call.1} parent=1 // pred_check
      _
    $region91: #{tpu_custom_call.1} parent=1 // pred_check_branch
      %234 = sbr.rel (0) target = $region93
    $region92: #{tpu_custom_call.1} parent=1 // pred_region
      _
    $region93: #{tpu_custom_call.1} parent=1 // pred_fallthru
      _
    // Predicated region
    $region94: #{tpu_custom_call.1} parent=1 // pred_check
      _
    $region95: #{tpu_custom_call.1} parent=1 // pred_check_branch
      %236 = sbr.rel (0) target = $region97
    $region96: #{tpu_custom_call.1} parent=1 // pred_region
      _
    $region97: #{tpu_custom_call.1} parent=1 // pred_fallthru
      _
    // Predicated region
    $region98: #{tpu_custom_call.1} parent=1 // pred_check
      _
    $region99: #{tpu_custom_call.1} parent=1 // pred_check_branch
      %238 = sbr.rel (0) target = $region101
    $region100: #{tpu_custom_call.1} parent=1 // pred_region
      _
    $region101: #{tpu_custom_call.1} parent=1 // pred_fallthru
      _
    // Predicated region
    $region102: #{tpu_custom_call.1} parent=1 // pred_check
      _
    $region103: #{tpu_custom_call.1} parent=1 // pred_check_branch
      %240 = sbr.rel (0) target = $region105
    $region104: #{tpu_custom_call.1} parent=1 // pred_region
      _
    $region105: #{tpu_custom_call.1} parent=1 // pred_fallthru
      _
    // Predicated region
    $region106: #{tpu_custom_call.1} parent=1 // pred_check
      _
    $region107: #{tpu_custom_call.1} parent=1 // pred_check_branch
      %242 = sbr.rel (0) target = $region109
    $region108: #{tpu_custom_call.1} parent=1 // pred_region
      _
    $region109: #{tpu_custom_call.1} parent=1 // pred_fallthru
      _
    // Predicated region
    $region110: #{tpu_custom_call.1} parent=1 // pred_check
      _
    $region111: #{tpu_custom_call.1} parent=1 // pred_check_branch
      %244 = sbr.rel (0) target = $region113
    $region112: #{tpu_custom_call.1} parent=1 // pred_region
      _
    $region113: #{tpu_custom_call.1} parent=1 // pred_fallthru
      _
    // Predicated region
    $region114: #{tpu_custom_call.1} parent=1 // pred_check
      _
    $region115: #{tpu_custom_call.1} parent=1 // pred_check_branch
      %246 = sbr.rel (0) target = $region117
    $region116: #{tpu_custom_call.1} parent=1 // pred_region
      _
    $region117: #{tpu_custom_call.1} parent=1 // pred_fallthru
      _
    // Predicated region
    $region118: #{tpu_custom_call.1} parent=1 // pred_check
      _
    $region119: #{tpu_custom_call.1} parent=1 // pred_check_branch
      %248 = sbr.rel (0) target = $region121
    $region120: #{tpu_custom_call.1} parent=1 // pred_region
      _
    $region121: #{tpu_custom_call.1} parent=1 // pred_fallthru
      _
    // Predicated region
    $region122: #{tpu_custom_call.1} parent=1 // pred_check
      _
    $region123: #{tpu_custom_call.1} parent=1 // pred_check_branch
      %250 = sbr.rel (0) target = $region125
    $region124: #{tpu_custom_call.1} parent=1 // pred_region
      _
    $region125: #{tpu_custom_call.1} parent=1 // pred_fallthru
      _
    // Predicated region
    $region126: #{tpu_custom_call.1} parent=1 // pred_check
      _
    $region127: #{tpu_custom_call.1} parent=1 // pred_check_branch
      %252 = sbr.rel (0) target = $region129
    $region128: #{tpu_custom_call.1} parent=1 // pred_region
      _
    $region129: #{tpu_custom_call.1} parent=1 // pred_fallthru
      _
    // Predicated region
    $region130: #{tpu_custom_call.1} parent=1 // pred_check
      _
    $region131: #{tpu_custom_call.1} parent=1 // pred_check_branch
      %254 = sbr.rel (0) target = $region133
    $region132: #{tpu_custom_call.1} parent=1 // pred_region
      _
    $region133: #{tpu_custom_call.1} parent=1 // pred_fallthru
      _
    // Predicated region
    $region134: #{tpu_custom_call.1} parent=1 // pred_check
      _
    $region135: #{tpu_custom_call.1} parent=1 // pred_check_branch
      %256 = sbr.rel (0) target = $region137
    $region136: #{tpu_custom_call.1} parent=1 // pred_region
      _
    $region137: #{tpu_custom_call.1} parent=1 // pred_fallthru
      _
    // Predicated region
    $region138: #{tpu_custom_call.1} parent=1 // pred_check
      _
    $region139: #{tpu_custom_call.1} parent=1 // pred_check_branch
      %258 = sbr.rel (0) target = $region141
    $region140: #{tpu_custom_call.1} parent=1 // pred_region
      _
    $region141: #{tpu_custom_call.1} parent=1 // pred_fallthru
      _
    // Predicated region
    $region142: #{tpu_custom_call.1} parent=1 // pred_check
      _
    $region143: #{tpu_custom_call.1} parent=1 // pred_check_branch
      %260 = sbr.rel (0) target = $region145
    $region144: #{tpu_custom_call.1} parent=1 // pred_region
      _
    $region145: #{tpu_custom_call.1} parent=1 // pred_fallthru
      _
    // Predicated region
    $region146: #{tpu_custom_call.1} parent=1 // pred_check
      _
    $region147: #{tpu_custom_call.1} parent=1 // pred_check_branch
      %262 = sbr.rel (0) target = $region149
    $region148: #{tpu_custom_call.1} parent=1 // pred_region
      _
    $region149: #{tpu_custom_call.1} parent=1 // pred_fallthru
      _
    // Predicated region
    $region150: #{tpu_custom_call.1} parent=1 // pred_check
      _
    $region151: #{tpu_custom_call.1} parent=1 // pred_check_branch
      %264 = sbr.rel (0) target = $region153
    $region152: #{tpu_custom_call.1} parent=1 // pred_region
      _
    $region153: #{tpu_custom_call.1} parent=1 // pred_fallthru
      _
    // Predicated region
    $region154: #{tpu_custom_call.1} parent=1 // pred_check
      _
    $region155: #{tpu_custom_call.1} parent=1 // pred_check_branch
      %266 = sbr.rel (0) target = $region157
    $region156: #{tpu_custom_call.1} parent=1 // pred_region
      _
    $region157: #{tpu_custom_call.1} parent=1 // pred_fallthru
      _
    // Predicated region
    $region158: #{tpu_custom_call.1} parent=1 // pred_check
      _
    $region159: #{tpu_custom_call.1} parent=1 // pred_check_branch
      %268 = sbr.rel (0) target = $region161
    $region160: #{tpu_custom_call.1} parent=1 // pred_region
      _
    $region161: #{tpu_custom_call.1} parent=1 // pred_fallthru
      _
    // Predicated region
    $region162: #{tpu_custom_call.1} parent=1 // pred_check
      _
    $region163: #{tpu_custom_call.1} parent=1 // pred_check_branch
      %270 = sbr.rel (0) target = $region165
    $region164: #{tpu_custom_call.1} parent=1 // pred_region
      _
    $region165: #{tpu_custom_call.1} parent=1 // pred_fallthru
      _
    // Predicated region
    $region166: #{tpu_custom_call.1} parent=1 // pred_check
      _
    $region167: #{tpu_custom_call.1} parent=1 // pred_check_branch
      %272 = sbr.rel (0) target = $region169
    $region168: #{tpu_custom_call.1} parent=1 // pred_region
      _
    $region169: #{tpu_custom_call.1} parent=1 // pred_fallthru
      _
    // Predicated region
    $region170: #{tpu_custom_call.1} parent=1 // pred_check
      _
    $region171: #{tpu_custom_call.1} parent=1 // pred_check_branch
      %274 = sbr.rel (0) target = $region173
    $region172: #{tpu_custom_call.1} parent=1 // pred_region
      _
    $region173: #{tpu_custom_call.1} parent=1 // pred_fallthru
      _
    // Predicated region
    $region174: #{tpu_custom_call.1} parent=1 // pred_check
      _
    $region175: #{tpu_custom_call.1} parent=1 // pred_check_branch
      %276 = sbr.rel (0) target = $region177
    $region176: #{tpu_custom_call.1} parent=1 // pred_region
      _
    $region177: #{tpu_custom_call.1} parent=1 // pred_fallthru
      _
    // Predicated region
    $region178: #{tpu_custom_call.1} parent=1 // pred_check
      _
    $region179: #{tpu_custom_call.1} parent=1 // pred_check_branch
      %278 = sbr.rel (0) target = $region181
    $region180: #{tpu_custom_call.1} parent=1 // pred_region
      _
    $region181: #{tpu_custom_call.1} parent=1 // pred_fallthru
      _
    // Predicated region
    $region182: #{tpu_custom_call.1} parent=1 // pred_check
      _
    $region183: #{tpu_custom_call.1} parent=1 // pred_check_branch
      %280 = sbr.rel (0) target = $region185
    $region184: #{tpu_custom_call.1} parent=1 // pred_region
      _
    $region185: #{tpu_custom_call.1} parent=1 // pred_fallthru
      _
    // Predicated region
    $region186: #{tpu_custom_call.1} parent=1 // pred_check
      _
    $region187: #{tpu_custom_call.1} parent=1 // pred_check_branch
      %282 = sbr.rel (0) target = $region189
    $region188: #{tpu_custom_call.1} parent=1 // pred_region
      _
    $region189: #{tpu_custom_call.1} parent=1 // pred_fallthru
      _
    // Predicated region
    $region190: #{tpu_custom_call.1} parent=1 // pred_check
      _
    $region191: #{tpu_custom_call.1} parent=1 // pred_check_branch
      %284 = sbr.rel (0) target = $region193
    $region192: #{tpu_custom_call.1} parent=1 // pred_region
      _
    $region193: #{tpu_custom_call.1} parent=1 // pred_fallthru
      _
    // Predicated region
    $region194: #{tpu_custom_call.1} parent=1 // pred_check
      _
    $region195: #{tpu_custom_call.1} parent=1 // pred_check_branch
      %286 = sbr.rel (0) target = $region197
    $region196: #{tpu_custom_call.1} parent=1 // pred_region
      _
    $region197: #{tpu_custom_call.1} parent=1 // pred_fallthru
      _
    // Predicated region
    $region198: #{tpu_custom_call.1} parent=1 // pred_check
      _
    $region199: #{tpu_custom_call.1} parent=1 // pred_check_branch
      %288 = sbr.rel (0) target = $region201
    $region200: #{tpu_custom_call.1} parent=1 // pred_region
      _
    $region201: #{tpu_custom_call.1} parent=1 // pred_fallthru
      _
    // Predicated region
    $region202: #{tpu_custom_call.1} parent=1 // pred_check
      _
    $region203: #{tpu_custom_call.1} parent=1 // pred_check_branch
      %290 = sbr.rel (0) target = $region205
    $region204: #{tpu_custom_call.1} parent=1 // pred_region
      _
    $region205: #{tpu_custom_call.1} parent=1 // pred_fallthru
      _
    // Predicated region
    $region206: #{tpu_custom_call.1} parent=1 // pred_check
      _
    $region207: #{tpu_custom_call.1} parent=1 // pred_check_branch
      %292 = sbr.rel (0) target = $region209
    $region208: #{tpu_custom_call.1} parent=1 // pred_region
      %293 = dma.done [#allocation4], 256
    $region209: #{tpu_custom_call.1} parent=1 // pred_fallthru
      _
    // Predicated region
    $region210: #{tpu_custom_call.1} parent=1 // pred_check
      _
    $region211: #{tpu_custom_call.1} parent=1 // pred_check_branch
      %295 = sbr.rel (0) target = $region213
    $region212: #{tpu_custom_call.1} parent=1 // pred_region
      %296 = dma.done [#allocation6], 16
    $region213: #{tpu_custom_call.1} parent=1 // pred_fallthru
      _
    // Predicated region
    $region214: #{tpu_custom_call.1} parent=1 // pred_check
      _
    $region215: #{tpu_custom_call.1} parent=1 // pred_check_branch
      %298 = sbr.rel (0) target = $region217
    $region216: #{tpu_custom_call.1} parent=1 // pred_region
      %299 = dma.done [#allocation6], 128
    $region217: #{tpu_custom_call.1} parent=1 // pred_fallthru
      _
    // Predicated region
    $region218: #{tpu_custom_call.1} parent=1 // pred_check
      _
    $region219: #{tpu_custom_call.1} parent=1 // pred_check_branch
      %301 = sbr.rel (0) target = $region221
    $region220: #{tpu_custom_call.1} parent=1 // pred_region
      %302 = dma.done [#allocation9], 16
    $region221: #{tpu_custom_call.1} parent=1 // pred_fallthru
      _
    // Predicated region
    $region222: #{tpu_custom_call.1} parent=1 // pred_check
      _
    $region223: #{tpu_custom_call.1} parent=1 // pred_check_branch
      %304 = sbr.rel (0) target = $region225
    $region224: #{tpu_custom_call.1} parent=1 // pred_region
      %305 = dma.done [#allocation9], 128
    $region225: #{tpu_custom_call.1} parent=1 // pred_fallthru
      _
    // Predicated region
    $region226: #{tpu_custom_call.1} parent=1 // pred_check
      _
    $region227: #{tpu_custom_call.1} parent=1 // pred_check_branch
      %307 = sbr.rel (0) target = $region229
    $region228: #{tpu_custom_call.1} parent=1 // pred_region
      %308 = dma.done [#allocation12], 16
    $region229: #{tpu_custom_call.1} parent=1 // pred_fallthru
      _
    // Predicated region
    $region230: #{tpu_custom_call.1} parent=1 // pred_check
      _
    $region231: #{tpu_custom_call.1} parent=1 // pred_check_branch
      %310 = sbr.rel (0) target = $region233
    $region232: #{tpu_custom_call.1} parent=1 // pred_region
      %311 = dma.done [#allocation12], 16
    $region233: #{tpu_custom_call.1} parent=1 // pred_fallthru
      _
    // Predicated region
    $region234: #{tpu_custom_call.1} parent=1 // pred_check
      _
    $region235: #{tpu_custom_call.1} parent=1 // pred_check_branch
      %313 = sbr.rel (0) target = $region237
    $region236: #{tpu_custom_call.1} parent=1 // pred_region
      %314 = dma.done [#allocation15], 16
    $region237: #{tpu_custom_call.1} parent=1 // pred_fallthru
      _
    // Predicated region
    $region238: #{tpu_custom_call.1} parent=1 // pred_check
      _
    $region239: #{tpu_custom_call.1} parent=1 // pred_check_branch
      %316 = sbr.rel (0) target = $region241
    $region240: #{tpu_custom_call.1} parent=1 // pred_region
      %317 = dma.done [#allocation15], 256
    $region241: #{tpu_custom_call.1} parent=1 // pred_fallthru
      _
    %v318 = vld [vmem:[#allocation5] sm:$0x1]
    %v319 = vld [vmem:[#allocation7] sm:$0xff]
    %v320 = vld [vmem:[#allocation8] sm:$0x1]
    %v321 = vld [vmem:[#allocation10] sm:$0xff]
    %v322 = vld [vmem:[#allocation11] sm:$0x1]
    %v323 = vld [vmem:[%s17] sm:$0xff]
    %v324 = vld [vmem:[%s17 + $0x8] sm:$0xff]
    %v325 = vld [vmem:[%s17 + $0x10] sm:$0xff]
    %v326 = vld [vmem:[%s17 + $0x18] sm:$0xff]
    %v327 = vld [vmem:[#allocation13] sm:$0x1]
    %v328 = vld [vmem:[%s21] sm:$0xff]
    %v329 = vld [vmem:[%s21 + $0x8] sm:$0xff]
    %v330 = vld [vmem:[%s21 + $0x10] sm:$0xff]
    %v331 = vld [vmem:[%s21 + $0x18] sm:$0xff]
    %v332 = vld [vmem:[#allocation14] sm:$0x1]
    %v333 = vld [vmem:[%s25] sm:$0xff]
    %v334 = vld [vmem:[%s25 + $0x8] sm:$0xff]
    %v335 = vld [vmem:[%s25 + $0x10] sm:$0xff]
    %v336 = vld [vmem:[%s25 + $0x18] sm:$0xff]
    %v337 = vld [vmem:[%s27] sm:$0x1]
    %v338 = vld [vmem:[#allocation16] sm:$0xff]
    %v339 = vld [vmem:[#allocation16 + $0x8] sm:$0xff]
    %v340 = vld [vmem:[%s31] sm:$0x1]
    %v341 = vld [vmem:[%s33] sm:$0xff]
    %v342 = vld [vmem:[%s33 + $0x8] sm:$0xff]
    %v343 = vld [vmem:[%s33 + $0x10] sm:$0xff]
    %v344 = vld [vmem:[%s33 + $0x18] sm:$0xff]
    %v345 = vld [vmem:[%s35] sm:$0x1]
    %v346 = vld [vmem:[%s37] sm:$0xff]
    %v347 = vld [vmem:[%s37 + $0x8] sm:$0xff]
    %v348 = vld [vmem:[%s37 + $0x10] sm:$0xff]
    %v349 = vld [vmem:[%s37 + $0x18] sm:$0xff]
    %v350 = vld [vmem:[%s39] sm:$0x1]
    %v351 = vld [vmem:[%s41] sm:$0xff]
    %v352 = vld [vmem:[%s41 + $0x8] sm:$0xff]
    %v353 = vld [vmem:[%s41 + $0x10] sm:$0xff]
    %v354 = vld [vmem:[%s41 + $0x18] sm:$0xff]
    %v355 = vld [vmem:[%s43] sm:$0x1]
    %v356 = vld [vmem:[%s45] sm:$0x1]
    %v357 = vld [vmem:[%s47] sm:$0xff]
    %v358 = vld [vmem:[%s47 + $0x8] sm:$0xff]
    %v359 = vld [vmem:[%s47 + $0x10] sm:$0xff]
    %v360 = vld [vmem:[%s47 + $0x18] sm:$0xff]
    %v361 = vld [vmem:[%s49] sm:$0x1]
    %v362 = vld [vmem:[%s51] sm:$0xff]
    %v363 = vld [vmem:[%s51 + $0x8] sm:$0xff]
    %v364 = vld [vmem:[%s51 + $0x10] sm:$0xff]
    %v365 = vld [vmem:[%s51 + $0x18] sm:$0xff]
    %v366 = vld [vmem:[%s51 + $0x20] sm:$0xff]
    %v367 = vld [vmem:[%s51 + $0x28] sm:$0xff]
    %v368 = vld [vmem:[%s51 + $0x30] sm:$0xff]
    %v369 = vld [vmem:[%s51 + $0x38] sm:$0xff]
    %v370 = vld [vmem:[%s53] sm:$0x1]
    %v371 = vld [vmem:[%s55] sm:$0x1]
    %v372 = vld [vmem:[%s57] sm:$0x1]
    %v373 = vld [vmem:[%s59] sm:$0x1]
    %v374 = vld [vmem:[%s61] sm:$0x1]
    %v375 = vld [vmem:[%s63] sm:$0xff]
    %v376 = vld [vmem:[%s63 + $0x8] sm:$0xff]
    %v377 = vld [vmem:[%s63 + $0x10] sm:$0xff]
    %v378 = vld [vmem:[%s63 + $0x18] sm:$0xff]
    %v379 = vld [vmem:[%s65] sm:$0xff]
    %v380 = vld [vmem:[%s65 + $0x8] sm:$0xff]
    %v381 = vld [vmem:[%s65 + $0x10] sm:$0xff]
    %v382 = vld [vmem:[%s65 + $0x18] sm:$0xff]
    %v383 = vld [vmem:[%s67] sm:$0x1]
    %v384 = vld [vmem:[%s69] sm:$0x1]
    %v385 = vld [vmem:[%s71] sm:$0xff]
    %v386 = vld [vmem:[%s71 + $0x8] sm:$0xff]
    %v387 = vld [vmem:[%s71 + $0x10] sm:$0xff]
    %v388 = vld [vmem:[%s71 + $0x18] sm:$0xff]
    %v389 = vld [vmem:[%s73] sm:$0x1]
    %v390 = vld [vmem:[%s75] sm:$0xff]
    %v391 = vld [vmem:[%s75 + $0x8] sm:$0xff]
    %v392 = vld [vmem:[%s75 + $0x10] sm:$0xff]
    %v393 = vld [vmem:[%s75 + $0x18] sm:$0xff]
    %v394 = vld [vmem:[%s75 + $0x20] sm:$0xff]
    %v395 = vld [vmem:[%s75 + $0x28] sm:$0xff]
    %v396 = vld [vmem:[%s75 + $0x30] sm:$0xff]
    %v397 = vld [vmem:[%s75 + $0x38] sm:$0xff]
    %v398 = vld [vmem:[%s77] sm:$0x1]
    %v399 = vld [vmem:[%s79] sm:$0x1]
    %v400 = vld [vmem:[%s81] sm:$0x1]
    %v401 = vld [vmem:[%s83] sm:$0x1]
    %v402 = vld [vmem:[%s85] sm:$0x1]
    %v403 = vld [vmem:[%s87] sm:$0xff]
    %v404 = vld [vmem:[%s87 + $0x8] sm:$0xff]
    %v405 = vld [vmem:[%s87 + $0x10] sm:$0xff]
    %v406 = vld [vmem:[%s87 + $0x18] sm:$0xff]
    %v407 = vld [vmem:[%s89] sm:$0xff]
    %v408 = vld [vmem:[%s89 + $0x8] sm:$0xff]
    %v409 = vld [vmem:[%s89 + $0x10] sm:$0xff]
    %v410 = vld [vmem:[%s89 + $0x18] sm:$0xff]
    %v411 = vld [vmem:[%s91] sm:$0x1]
    %v412 = vld [vmem:[%s93] sm:$0xff]
    %v413 = vld [vmem:[%s93 + $0x8] sm:$0xff]
    %v414 = vld [vmem:[%s93 + $0x10] sm:$0xff]
    %v415 = vld [vmem:[%s93 + $0x18] sm:$0xff]
    %v416 = vld [vmem:[%s95] sm:$0x1]
    %v417 = vld [vmem:[%s97] sm:$0xff]
    %v418 = vld [vmem:[%s97 + $0x8] sm:$0xff]
    %v419 = vld [vmem:[%s99] sm:$0x1]
    %v420 = vld [vmem:[%s101] sm:$0xff]
    %v421 = vld [vmem:[%s1] sm:$0xff]
    %v422 = vld [vmem:[%s1 + $0x8] sm:$0xff]
    %v423 = vld [vmem:[%s3] sm:$0xff]
    %v424 = vld [vmem:[%s3 + $0x8] sm:$0xff]
    %v425 = vld [vmem:[#allocation3] sm:$0xff]
    %v426 = vld [vmem:[#allocation3 + $0x8] sm:$0xff]
    %v428 = vlaneseq
    %v429 = vshrl.u32 %v428, 7
    %v430 = vsub.s32 0, %v429
    %v431 = vrot.slane %v337, %v430
    %vm433 = vcmask 130048
    %v435 = vsel %vm433, %v425, 0
    %v438 = vsel %vm433, %v426, 0
    %440 = vmatprep.subr.mxu0 0.0
    %441 = vmatpush1.msra.mxu0 0.0
    %442 = vmatprep.subr.mxu0 0.0
    %443 = vmatpush1.msra.mxu0 0.0
    %444 = vmatprep.subr.mxu0 0.0
    %445 = vmatpush1.msra.mxu0 0.0
    %446 = vmatprep.subr.mxu0 0.0
    %447 = vmatpush1.msra.mxu0 0.0
    %448 = vmatprep.subr.mxu0 0.0
    %449 = vmatpush1.msra.mxu0 0.0
    %450 = vmatprep.subr.mxu0 0.0
    %451 = vmatpush1.msra.mxu0 0.0
    %452 = vmatprep.subr.mxu0 0.0
    %453 = vmatpush1.msra.mxu0 0.0
    %454 = vmatprep.subr.mxu0 0.0
    %455 = vmatpush1.msra.mxu0 0.0
    %456 = vmatprep.subr.mxu0 0.0
    %457 = vmatpush1.msra.mxu0 0.0
    %458 = vmatprep.subr.mxu0 0.0
    %459 = vmatpush1.msra.mxu0 0.0
    %460 = vmatprep.subr.mxu0 0.0
    %461 = vmatpush1.msra.mxu0 0.0
    %462 = vmatprep.subr.mxu0 0.0
    %463 = vmatpush1.msra.mxu0 0.0
    %464 = vmatprep.subr.mxu0 0.0
    %465 = vmatpush1.msra.mxu0 0.0
    %466 = vmatprep.subr.mxu0 0.0
    %467 = vmatpush1.msra.mxu0 0.0
    %468 = vmatprep.subr.mxu0 0.0
    %469 = vmatpush1.msra.mxu0 %v339
    %470 = vmatprep.subr.mxu0 0.0
    %471 = vmatpush1.msra.mxu0 %v338
    %472 = vmatprep.subr.mxu0 0.0
    %473 = vmatpush2.msra.mxu0 0.0
    %474 = vmatprep.subr.mxu0 0.0
    %475 = vmatpush2.msra.mxu0 0.0
    %476 = vmatprep.subr.mxu0 0.0
    %477 = vmatpush2.msra.mxu0 0.0
    %478 = vmatprep.subr.mxu0 0.0
    %479 = vmatpush2.msra.mxu0 0.0
    %480 = vmatprep.subr.mxu0 0.0
    %481 = vmatpush2.msra.mxu0 0.0
    %482 = vmatprep.subr.mxu0 0.0
    %483 = vmatpush2.msra.mxu0 0.0
    %484 = vmatprep.subr.mxu0 0.0
    %485 = vmatpush2.msra.mxu0 0.0
    %486 = vmatprep.subr.mxu0 0.0
    %487 = vmatpush2.msra.mxu0 0.0
    %488 = vmatprep.subr.mxu0 0.0
    %489 = vmatpush2.msra.mxu0 0.0
    %490 = vmatprep.subr.mxu0 0.0
    %491 = vmatpush2.msra.mxu0 0.0
    %492 = vmatprep.subr.mxu0 0.0
    %493 = vmatpush2.msra.mxu0 0.0
    %494 = vmatprep.subr.mxu0 0.0
    %495 = vmatpush2.msra.mxu0 0.0
    %496 = vmatprep.subr.mxu0 0.0
    %497 = vmatpush2.msra.mxu0 0.0
    %498 = vmatprep.subr.mxu0 0.0
    %499 = vmatpush2.msra.mxu0 0.0
    %500 = vmatprep.subr.mxu0 0.0
    %501 = vmatpush2.msra.mxu0 0.0
    %502 = vmatprep.subr.mxu0 0.0
    %503 = vmatpush2.msra.mxu0 0.0
    %504 = vmatprep.mubr.f32.mxu0 0.0
    %505 = vmatmul.mubr.f32.gmra.mxu0 %v435
    %v506 = vpop.f32.mrf.mxu0
    %v507 = vadd.f32 %v431, %v506
    %v508 = vpop.f32.mrf.mxu0
    %509 = vmatprep.mubr.f32.mxu0 0.0
    %510 = vmatmul.mubr.f32.gmra.mxu0 %v438
    %v511 = vpop.f32.mrf.mxu0
    %v512 = vadd.f32 %v431, %v511
    %v513 = vpop.f32.mrf.mxu0
    %514 = vdwg.mxu0
    %v515 = vmax.f32 %v507, 0.0
    %v516 = vmax.f32 %v512, 0.0
    %v518 = vlaneseq
    %v519 = vshrl.u32 %v518, 7
    %v520 = vsub.s32 0, %v519
    %v521 = vrot.slane %v340, %v520
    %vm523 = vcmask 261120
    %v525 = vsel %vm523, %v515, 0
    %v528 = vsel %vm523, %v516, 0
    %530 = vmatprep.subr.mxu0 0.0
    %531 = vmatpush1.msra.mxu0 0.0
    %532 = vmatprep.subr.mxu0 0.0
    %533 = vmatpush1.msra.mxu0 0.0
    %534 = vmatprep.subr.mxu0 0.0
    %535 = vmatpush1.msra.mxu0 0.0
    %536 = vmatprep.subr.mxu0 0.0
    %537 = vmatpush1.msra.mxu0 0.0
    %538 = vmatprep.subr.mxu0 0.0
    %539 = vmatpush1.msra.mxu0 0.0
    %540 = vmatprep.subr.mxu0 0.0
    %541 = vmatpush1.msra.mxu0 0.0
    %542 = vmatprep.subr.mxu0 0.0
    %543 = vmatpush1.msra.mxu0 0.0
    %544 = vmatprep.subr.mxu0 0.0
    %545 = vmatpush1.msra.mxu0 0.0
    %546 = vmatprep.subr.mxu0 0.0
    %547 = vmatpush1.msra.mxu0 0.0
    %548 = vmatprep.subr.mxu0 0.0
    %549 = vmatpush1.msra.mxu0 0.0
    %550 = vmatprep.subr.mxu0 0.0
    %551 = vmatpush1.msra.mxu0 0.0
    %552 = vmatprep.subr.mxu0 0.0
    %553 = vmatpush1.msra.mxu0 0.0
    %554 = vmatprep.subr.mxu0 0.0
    %555 = vmatpush1.msra.mxu0 %v344
    %556 = vmatprep.subr.mxu0 0.0
    %557 = vmatpush1.msra.mxu0 %v343
    %558 = vmatprep.subr.mxu0 0.0
    %559 = vmatpush1.msra.mxu0 %v342
    %560 = vmatprep.subr.mxu0 0.0
    %561 = vmatpush1.msra.mxu0 %v341
    %562 = vmatprep.subr.mxu0 0.0
    %563 = vmatpush2.msra.mxu0 0.0
    %564 = vmatprep.subr.mxu0 0.0
    %565 = vmatpush2.msra.mxu0 0.0
    %566 = vmatprep.subr.mxu0 0.0
    %567 = vmatpush2.msra.mxu0 0.0
    %568 = vmatprep.subr.mxu0 0.0
    %569 = vmatpush2.msra.mxu0 0.0
    %570 = vmatprep.subr.mxu0 0.0
    %571 = vmatpush2.msra.mxu0 0.0
    %572 = vmatprep.subr.mxu0 0.0
    %573 = vmatpush2.msra.mxu0 0.0
    %574 = vmatprep.subr.mxu0 0.0
    %575 = vmatpush2.msra.mxu0 0.0
    %576 = vmatprep.subr.mxu0 0.0
    %577 = vmatpush2.msra.mxu0 0.0
    %578 = vmatprep.subr.mxu0 0.0
    %579 = vmatpush2.msra.mxu0 0.0
    %580 = vmatprep.subr.mxu0 0.0
    %581 = vmatpush2.msra.mxu0 0.0
    %582 = vmatprep.subr.mxu0 0.0
    %583 = vmatpush2.msra.mxu0 0.0
    %584 = vmatprep.subr.mxu0 0.0
    %585 = vmatpush2.msra.mxu0 0.0
    %586 = vmatprep.subr.mxu0 0.0
    %587 = vmatpush2.msra.mxu0 0.0
    %588 = vmatprep.subr.mxu0 0.0
    %589 = vmatpush2.msra.mxu0 0.0
    %590 = vmatprep.subr.mxu0 0.0
    %591 = vmatpush2.msra.mxu0 0.0
    %592 = vmatprep.subr.mxu0 0.0
    %593 = vmatpush2.msra.mxu0 0.0
    %594 = vmatprep.mubr.f32.mxu0 0.0
    %595 = vmatmul.mubr.f32.gmra.mxu0 %v525
    %v596 = vpop.f32.mrf.mxu0
    %v597 = vadd.f32 %v521, %v596
    %v598 = vpop.f32.mrf.mxu0
    %599 = vmatprep.mubr.f32.mxu0 0.0
    %600 = vmatmul.mubr.f32.gmra.mxu0 %v528
    %v601 = vpop.f32.mrf.mxu0
    %v602 = vadd.f32 %v521, %v601
    %v603 = vpop.f32.mrf.mxu0
    %604 = vdwg.mxu0
    %v605 = vmax.f32 %v597, 0.0
    %v606 = vmax.f32 %v602, 0.0
    %v608 = vlaneseq
    %v609 = vshrl.u32 %v608, 7
    %v610 = vsub.s32 0, %v609
    %v611 = vrot.slane %v345, %v610
    %v614 = vsel %vm523, %v605, 0
    %v617 = vsel %vm523, %v606, 0
    %619 = vmatprep.subr.mxu0 0.0
    %620 = vmatpush1.msra.mxu0 0.0
    %621 = vmatprep.subr.mxu0 0.0
    %622 = vmatpush1.msra.mxu0 0.0
    %623 = vmatprep.subr.mxu0 0.0
    %624 = vmatpush1.msra.mxu0 0.0
    %625 = vmatprep.subr.mxu0 0.0
    %626 = vmatpush1.msra.mxu0 0.0
    %627 = vmatprep.subr.mxu0 0.0
    %628 = vmatpush1.msra.mxu0 0.0
    %629 = vmatprep.subr.mxu0 0.0
    %630 = vmatpush1.msra.mxu0 0.0
    %631 = vmatprep.subr.mxu0 0.0
    %632 = vmatpush1.msra.mxu0 0.0
    %633 = vmatprep.subr.mxu0 0.0
    %634 = vmatpush1.msra.mxu0 0.0
    %635 = vmatprep.subr.mxu0 0.0
    %636 = vmatpush1.msra.mxu0 0.0
    %637 = vmatprep.subr.mxu0 0.0
    %638 = vmatpush1.msra.mxu0 0.0
    %639 = vmatprep.subr.mxu0 0.0
    %640 = vmatpush1.msra.mxu0 0.0
    %641 = vmatprep.subr.mxu0 0.0
    %642 = vmatpush1.msra.mxu0 0.0
    %643 = vmatprep.subr.mxu0 0.0
    %644 = vmatpush1.msra.mxu0 %v349
    %645 = vmatprep.subr.mxu0 0.0
    %646 = vmatpush1.msra.mxu0 %v348
    %647 = vmatprep.subr.mxu0 0.0
    %648 = vmatpush1.msra.mxu0 %v347
    %649 = vmatprep.subr.mxu0 0.0
    %650 = vmatpush1.msra.mxu0 %v346
    %651 = vmatprep.subr.mxu0 0.0
    %652 = vmatpush2.msra.mxu0 0.0
    %653 = vmatprep.subr.mxu0 0.0
    %654 = vmatpush2.msra.mxu0 0.0
    %655 = vmatprep.subr.mxu0 0.0
    %656 = vmatpush2.msra.mxu0 0.0
    %657 = vmatprep.subr.mxu0 0.0
    %658 = vmatpush2.msra.mxu0 0.0
    %659 = vmatprep.subr.mxu0 0.0
    %660 = vmatpush2.msra.mxu0 0.0
    %661 = vmatprep.subr.mxu0 0.0
    %662 = vmatpush2.msra.mxu0 0.0
    %663 = vmatprep.subr.mxu0 0.0
    %664 = vmatpush2.msra.mxu0 0.0
    %665 = vmatprep.subr.mxu0 0.0
    %666 = vmatpush2.msra.mxu0 0.0
    %667 = vmatprep.subr.mxu0 0.0
    %668 = vmatpush2.msra.mxu0 0.0
    %669 = vmatprep.subr.mxu0 0.0
    %670 = vmatpush2.msra.mxu0 0.0
    %671 = vmatprep.subr.mxu0 0.0
    %672 = vmatpush2.msra.mxu0 0.0
    %673 = vmatprep.subr.mxu0 0.0
    %674 = vmatpush2.msra.mxu0 0.0
    %675 = vmatprep.subr.mxu0 0.0
    %676 = vmatpush2.msra.mxu0 0.0
    %677 = vmatprep.subr.mxu0 0.0
    %678 = vmatpush2.msra.mxu0 0.0
    %679 = vmatprep.subr.mxu0 0.0
    %680 = vmatpush2.msra.mxu0 0.0
    %681 = vmatprep.subr.mxu0 0.0
    %682 = vmatpush2.msra.mxu0 0.0
    %683 = vmatprep.mubr.f32.mxu0 0.0
    %684 = vmatmul.mubr.f32.gmra.mxu0 %v614
    %v685 = vpop.f32.mrf.mxu0
    %v686 = vadd.f32 %v611, %v685
    %v687 = vpop.f32.mrf.mxu0
    %688 = vmatprep.mubr.f32.mxu0 0.0
    %689 = vmatmul.mubr.f32.gmra.mxu0 %v617
    %v690 = vpop.f32.mrf.mxu0
    %v691 = vadd.f32 %v611, %v690
    %v692 = vpop.f32.mrf.mxu0
    %693 = vdwg.mxu0
    %v694 = vmax.f32 %v686, 0.0
    %v695 = vmax.f32 %v691, 0.0
    %v697 = vlaneseq
    %v698 = vshrl.u32 %v697, 7
    %v699 = vsub.s32 0, %v698
    %v700 = vrot.slane %v350, %v699
    %v703 = vsel %vm523, %v694, 0
    %v706 = vsel %vm523, %v695, 0
    %708 = vmatprep.subr.mxu0 0.0
    %709 = vmatpush1.msra.mxu0 0.0
    %710 = vmatprep.subr.mxu0 0.0
    %711 = vmatpush1.msra.mxu0 0.0
    %712 = vmatprep.subr.mxu0 0.0
    %713 = vmatpush1.msra.mxu0 0.0
    %714 = vmatprep.subr.mxu0 0.0
    %715 = vmatpush1.msra.mxu0 0.0
    %716 = vmatprep.subr.mxu0 0.0
    %717 = vmatpush1.msra.mxu0 0.0
    %718 = vmatprep.subr.mxu0 0.0
    %719 = vmatpush1.msra.mxu0 0.0
    %720 = vmatprep.subr.mxu0 0.0
    %721 = vmatpush1.msra.mxu0 0.0
    %722 = vmatprep.subr.mxu0 0.0
    %723 = vmatpush1.msra.mxu0 0.0
    %724 = vmatprep.subr.mxu0 0.0
    %725 = vmatpush1.msra.mxu0 0.0
    %726 = vmatprep.subr.mxu0 0.0
    %727 = vmatpush1.msra.mxu0 0.0
    %728 = vmatprep.subr.mxu0 0.0
    %729 = vmatpush1.msra.mxu0 0.0
    %730 = vmatprep.subr.mxu0 0.0
    %731 = vmatpush1.msra.mxu0 0.0
    %732 = vmatprep.subr.mxu0 0.0
    %733 = vmatpush1.msra.mxu0 %v354
    %734 = vmatprep.subr.mxu0 0.0
    %735 = vmatpush1.msra.mxu0 %v353
    %736 = vmatprep.subr.mxu0 0.0
    %737 = vmatpush1.msra.mxu0 %v352
    %738 = vmatprep.subr.mxu0 0.0
    %739 = vmatpush1.msra.mxu0 %v351
    %740 = vmatprep.subr.mxu0 0.0
    %741 = vmatpush2.msra.mxu0 0.0
    %742 = vmatprep.subr.mxu0 0.0
    %743 = vmatpush2.msra.mxu0 0.0
    %744 = vmatprep.subr.mxu0 0.0
    %745 = vmatpush2.msra.mxu0 0.0
    %746 = vmatprep.subr.mxu0 0.0
    %747 = vmatpush2.msra.mxu0 0.0
    %748 = vmatprep.subr.mxu0 0.0
    %749 = vmatpush2.msra.mxu0 0.0
    %750 = vmatprep.subr.mxu0 0.0
    %751 = vmatpush2.msra.mxu0 0.0
    %752 = vmatprep.subr.mxu0 0.0
    %753 = vmatpush2.msra.mxu0 0.0
    %754 = vmatprep.subr.mxu0 0.0
    %755 = vmatpush2.msra.mxu0 0.0
    %756 = vmatprep.subr.mxu0 0.0
    %757 = vmatpush2.msra.mxu0 0.0
    %758 = vmatprep.subr.mxu0 0.0
    %759 = vmatpush2.msra.mxu0 0.0
    %760 = vmatprep.subr.mxu0 0.0
    %761 = vmatpush2.msra.mxu0 0.0
    %762 = vmatprep.subr.mxu0 0.0
    %763 = vmatpush2.msra.mxu0 0.0
    %764 = vmatprep.subr.mxu0 0.0
    %765 = vmatpush2.msra.mxu0 0.0
    %766 = vmatprep.subr.mxu0 0.0
    %767 = vmatpush2.msra.mxu0 0.0
    %768 = vmatprep.subr.mxu0 0.0
    %769 = vmatpush2.msra.mxu0 0.0
    %770 = vmatprep.subr.mxu0 0.0
    %771 = vmatpush2.msra.mxu0 0.0
    %772 = vmatprep.mubr.f32.mxu0 0.0
    %773 = vmatmul.mubr.f32.gmra.mxu0 %v703
    %v774 = vpop.f32.mrf.mxu0
    %v775 = vadd.f32 %v700, %v774
    %v776 = vpop.f32.mrf.mxu0
    %777 = vmatprep.mubr.f32.mxu0 0.0
    %778 = vmatmul.mubr.f32.gmra.mxu0 %v706
    %v779 = vpop.f32.mrf.mxu0
    %v780 = vadd.f32 %v700, %v779
    %v781 = vpop.f32.mrf.mxu0
    %782 = vdwg.mxu0
    %v784 = vlaneseq
    %v785 = vshrl.u32 %v784, 7
    %v786 = vsub.s32 0, %v785
    %v787 = vrot.slane %v320, %v786
    %vm789 = vcmask 64512
    %v791 = vsel %vm789, %v423, 0
    %v794 = vsel %vm789, %v424, 0
    %796 = vmatprep.subr.mxu0 0.0
    %797 = vmatpush1.msra.mxu0 0.0
    %798 = vmatprep.subr.mxu0 0.0
    %799 = vmatpush1.msra.mxu0 0.0
    %800 = vmatprep.subr.mxu0 0.0
    %801 = vmatpush1.msra.mxu0 0.0
    %802 = vmatprep.subr.mxu0 0.0
    %803 = vmatpush1.msra.mxu0 0.0
    %804 = vmatprep.subr.mxu0 0.0
    %805 = vmatpush1.msra.mxu0 0.0
    %806 = vmatprep.subr.mxu0 0.0
    %807 = vmatpush1.msra.mxu0 0.0
    %808 = vmatprep.subr.mxu0 0.0
    %809 = vmatpush1.msra.mxu0 0.0
    %810 = vmatprep.subr.mxu0 0.0
    %811 = vmatpush1.msra.mxu0 0.0
    %812 = vmatprep.subr.mxu0 0.0
    %813 = vmatpush1.msra.mxu0 0.0
    %814 = vmatprep.subr.mxu0 0.0
    %815 = vmatpush1.msra.mxu0 0.0
    %816 = vmatprep.subr.mxu0 0.0
    %817 = vmatpush1.msra.mxu0 0.0
    %818 = vmatprep.subr.mxu0 0.0
    %819 = vmatpush1.msra.mxu0 0.0
    %820 = vmatprep.subr.mxu0 0.0
    %821 = vmatpush1.msra.mxu0 0.0
    %822 = vmatprep.subr.mxu0 0.0
    %823 = vmatpush1.msra.mxu0 0.0
    %824 = vmatprep.subr.mxu0 0.0
    %825 = vmatpush1.msra.mxu0 0.0
    %826 = vmatprep.subr.mxu0 0.0
    %827 = vmatpush1.msra.mxu0 %v321
    %828 = vmatprep.subr.mxu0 0.0
    %829 = vmatpush2.msra.mxu0 0.0
    %830 = vmatprep.subr.mxu0 0.0
    %831 = vmatpush2.msra.mxu0 0.0
    %832 = vmatprep.subr.mxu0 0.0
    %833 = vmatpush2.msra.mxu0 0.0
    %834 = vmatprep.subr.mxu0 0.0
    %835 = vmatpush2.msra.mxu0 0.0
    %836 = vmatprep.subr.mxu0 0.0
    %837 = vmatpush2.msra.mxu0 0.0
    %838 = vmatprep.subr.mxu0 0.0
    %839 = vmatpush2.msra.mxu0 0.0
    %840 = vmatprep.subr.mxu0 0.0
    %841 = vmatpush2.msra.mxu0 0.0
    %842 = vmatprep.subr.mxu0 0.0
    %843 = vmatpush2.msra.mxu0 0.0
    %844 = vmatprep.subr.mxu0 0.0
    %845 = vmatpush2.msra.mxu0 0.0
    %846 = vmatprep.subr.mxu0 0.0
    %847 = vmatpush2.msra.mxu0 0.0
    %848 = vmatprep.subr.mxu0 0.0
    %849 = vmatpush2.msra.mxu0 0.0
    %850 = vmatprep.subr.mxu0 0.0
    %851 = vmatpush2.msra.mxu0 0.0
    %852 = vmatprep.subr.mxu0 0.0
    %853 = vmatpush2.msra.mxu0 0.0
    %854 = vmatprep.subr.mxu0 0.0
    %855 = vmatpush2.msra.mxu0 0.0
    %856 = vmatprep.subr.mxu0 0.0
    %857 = vmatpush2.msra.mxu0 0.0
    %858 = vmatprep.subr.mxu0 0.0
    %859 = vmatpush2.msra.mxu0 0.0
    %860 = vmatprep.mubr.f32.mxu0 0.0
    %861 = vmatmul.mubr.f32.gmra.mxu0 %v791
    %v862 = vpop.f32.mrf.mxu0
    %v863 = vadd.f32 %v787, %v862
    %v864 = vpop.f32.mrf.mxu0
    %865 = vmatprep.mubr.f32.mxu0 0.0
    %866 = vmatmul.mubr.f32.gmra.mxu0 %v794
    %v867 = vpop.f32.mrf.mxu0
    %v868 = vadd.f32 %v787, %v867
    %v869 = vpop.f32.mrf.mxu0
    %870 = vdwg.mxu0
    %v871 = vmax.f32 %v863, 0.0
    %v872 = vmax.f32 %v868, 0.0
    %v874 = vlaneseq
    %v875 = vshrl.u32 %v874, 7
    %v876 = vsub.s32 0, %v875
    %v877 = vrot.slane %v322, %v876
    %v880 = vsel %vm523, %v871, 0
    %v883 = vsel %vm523, %v872, 0
    %885 = vmatprep.subr.mxu0 0.0
    %886 = vmatpush1.msra.mxu0 0.0
    %887 = vmatprep.subr.mxu0 0.0
    %888 = vmatpush1.msra.mxu0 0.0
    %889 = vmatprep.subr.mxu0 0.0
    %890 = vmatpush1.msra.mxu0 0.0
    %891 = vmatprep.subr.mxu0 0.0
    %892 = vmatpush1.msra.mxu0 0.0
    %893 = vmatprep.subr.mxu0 0.0
    %894 = vmatpush1.msra.mxu0 0.0
    %895 = vmatprep.subr.mxu0 0.0
    %896 = vmatpush1.msra.mxu0 0.0
    %897 = vmatprep.subr.mxu0 0.0
    %898 = vmatpush1.msra.mxu0 0.0
    %899 = vmatprep.subr.mxu0 0.0
    %900 = vmatpush1.msra.mxu0 0.0
    %901 = vmatprep.subr.mxu0 0.0
    %902 = vmatpush1.msra.mxu0 0.0
    %903 = vmatprep.subr.mxu0 0.0
    %904 = vmatpush1.msra.mxu0 0.0
    %905 = vmatprep.subr.mxu0 0.0
    %906 = vmatpush1.msra.mxu0 0.0
    %907 = vmatprep.subr.mxu0 0.0
    %908 = vmatpush1.msra.mxu0 0.0
    %909 = vmatprep.subr.mxu0 0.0
    %910 = vmatpush1.msra.mxu0 %v326
    %911 = vmatprep.subr.mxu0 0.0
    %912 = vmatpush1.msra.mxu0 %v325
    %913 = vmatprep.subr.mxu0 0.0
    %914 = vmatpush1.msra.mxu0 %v324
    %915 = vmatprep.subr.mxu0 0.0
    %916 = vmatpush1.msra.mxu0 %v323
    %917 = vmatprep.subr.mxu0 0.0
    %918 = vmatpush2.msra.mxu0 0.0
    %919 = vmatprep.subr.mxu0 0.0
    %920 = vmatpush2.msra.mxu0 0.0
    %921 = vmatprep.subr.mxu0 0.0
    %922 = vmatpush2.msra.mxu0 0.0
    %923 = vmatprep.subr.mxu0 0.0
    %924 = vmatpush2.msra.mxu0 0.0
    %925 = vmatprep.subr.mxu0 0.0
    %926 = vmatpush2.msra.mxu0 0.0
    %927 = vmatprep.subr.mxu0 0.0
    %928 = vmatpush2.msra.mxu0 0.0
    %929 = vmatprep.subr.mxu0 0.0
    %930 = vmatpush2.msra.mxu0 0.0
    %931 = vmatprep.subr.mxu0 0.0
    %932 = vmatpush2.msra.mxu0 0.0
    %933 = vmatprep.subr.mxu0 0.0
    %934 = vmatpush2.msra.mxu0 0.0
    %935 = vmatprep.subr.mxu0 0.0
    %936 = vmatpush2.msra.mxu0 0.0
    %937 = vmatprep.subr.mxu0 0.0
    %938 = vmatpush2.msra.mxu0 0.0
    %939 = vmatprep.subr.mxu0 0.0
    %940 = vmatpush2.msra.mxu0 0.0
    %941 = vmatprep.subr.mxu0 0.0
    %942 = vmatpush2.msra.mxu0 0.0
    %943 = vmatprep.subr.mxu0 0.0
    %944 = vmatpush2.msra.mxu0 0.0
    %945 = vmatprep.subr.mxu0 0.0
    %946 = vmatpush2.msra.mxu0 0.0
    %947 = vmatprep.subr.mxu0 0.0
    %948 = vmatpush2.msra.mxu0 0.0
    %949 = vmatprep.mubr.f32.mxu0 0.0
    %950 = vmatmul.mubr.f32.gmra.mxu0 %v880
    %v951 = vpop.f32.mrf.mxu0
    %v952 = vadd.f32 %v877, %v951
    %v953 = vpop.f32.mrf.mxu0
    %954 = vmatprep.mubr.f32.mxu0 0.0
    %955 = vmatmul.mubr.f32.gmra.mxu0 %v883
    %v956 = vpop.f32.mrf.mxu0
    %v957 = vadd.f32 %v877, %v956
    %v958 = vpop.f32.mrf.mxu0
    %959 = vdwg.mxu0
    %v960 = vmax.f32 %v952, 0.0
    %v961 = vmax.f32 %v957, 0.0
    %v963 = vlaneseq
    %v964 = vshrl.u32 %v963, 7
    %v965 = vsub.s32 0, %v964
    %v966 = vrot.slane %v327, %v965
    %v969 = vsel %vm523, %v960, 0
    %v972 = vsel %vm523, %v961, 0
    %974 = vmatprep.subr.mxu0 0.0
    %975 = vmatpush1.msra.mxu0 0.0
    %976 = vmatprep.subr.mxu0 0.0
    %977 = vmatpush1.msra.mxu0 0.0
    %978 = vmatprep.subr.mxu0 0.0
    %979 = vmatpush1.msra.mxu0 0.0
    %980 = vmatprep.subr.mxu0 0.0
    %981 = vmatpush1.msra.mxu0 0.0
    %982 = vmatprep.subr.mxu0 0.0
    %983 = vmatpush1.msra.mxu0 0.0
    %984 = vmatprep.subr.mxu0 0.0
    %985 = vmatpush1.msra.mxu0 0.0
    %986 = vmatprep.subr.mxu0 0.0
    %987 = vmatpush1.msra.mxu0 0.0
    %988 = vmatprep.subr.mxu0 0.0
    %989 = vmatpush1.msra.mxu0 0.0
    %990 = vmatprep.subr.mxu0 0.0
    %991 = vmatpush1.msra.mxu0 0.0
    %992 = vmatprep.subr.mxu0 0.0
    %993 = vmatpush1.msra.mxu0 0.0
    %994 = vmatprep.subr.mxu0 0.0
    %995 = vmatpush1.msra.mxu0 0.0
    %996 = vmatprep.subr.mxu0 0.0
    %997 = vmatpush1.msra.mxu0 0.0
    %998 = vmatprep.subr.mxu0 0.0
    %999 = vmatpush1.msra.mxu0 %v331
    %1000 = vmatprep.subr.mxu0 0.0
    %1001 = vmatpush1.msra.mxu0 %v330
    %1002 = vmatprep.subr.mxu0 0.0
    %1003 = vmatpush1.msra.mxu0 %v329
    %1004 = vmatprep.subr.mxu0 0.0
    %1005 = vmatpush1.msra.mxu0 %v328
    %1006 = vmatprep.subr.mxu0 0.0
    %1007 = vmatpush2.msra.mxu0 0.0
    %1008 = vmatprep.subr.mxu0 0.0
    %1009 = vmatpush2.msra.mxu0 0.0
    %1010 = vmatprep.subr.mxu0 0.0
    %1011 = vmatpush2.msra.mxu0 0.0
    %1012 = vmatprep.subr.mxu0 0.0
    %1013 = vmatpush2.msra.mxu0 0.0
    %1014 = vmatprep.subr.mxu0 0.0
    %1015 = vmatpush2.msra.mxu0 0.0
    %1016 = vmatprep.subr.mxu0 0.0
    %1017 = vmatpush2.msra.mxu0 0.0
    %1018 = vmatprep.subr.mxu0 0.0
    %1019 = vmatpush2.msra.mxu0 0.0
    %1020 = vmatprep.subr.mxu0 0.0
    %1021 = vmatpush2.msra.mxu0 0.0
    %1022 = vmatprep.subr.mxu0 0.0
    %1023 = vmatpush2.msra.mxu0 0.0
    %1024 = vmatprep.subr.mxu0 0.0
    %1025 = vmatpush2.msra.mxu0 0.0
    %1026 = vmatprep.subr.mxu0 0.0
    %1027 = vmatpush2.msra.mxu0 0.0
    %1028 = vmatprep.subr.mxu0 0.0
    %1029 = vmatpush2.msra.mxu0 0.0
    %1030 = vmatprep.subr.mxu0 0.0
    %1031 = vmatpush2.msra.mxu0 0.0
    %1032 = vmatprep.subr.mxu0 0.0
    %1033 = vmatpush2.msra.mxu0 0.0
    %1034 = vmatprep.subr.mxu0 0.0
    %1035 = vmatpush2.msra.mxu0 0.0
    %1036 = vmatprep.subr.mxu0 0.0
    %1037 = vmatpush2.msra.mxu0 0.0
    %1038 = vmatprep.mubr.f32.mxu0 0.0
    %1039 = vmatmul.mubr.f32.gmra.mxu0 %v969
    %v1040 = vpop.f32.mrf.mxu0
    %v1041 = vadd.f32 %v966, %v1040
    %v1042 = vpop.f32.mrf.mxu0
    %1043 = vmatprep.mubr.f32.mxu0 0.0
    %1044 = vmatmul.mubr.f32.gmra.mxu0 %v972
    %v1045 = vpop.f32.mrf.mxu0
    %v1046 = vadd.f32 %v966, %v1045
    %v1047 = vpop.f32.mrf.mxu0
    %1048 = vdwg.mxu0
    %v1049 = vmax.f32 %v1041, 0.0
    %v1050 = vmax.f32 %v1046, 0.0
    %v1052 = vlaneseq
    %v1053 = vshrl.u32 %v1052, 7
    %v1054 = vsub.s32 0, %v1053
    %v1055 = vrot.slane %v332, %v1054
    %v1058 = vsel %vm523, %v1049, 0
    %v1061 = vsel %vm523, %v1050, 0
    %1063 = vmatprep.subr.mxu0 0.0
    %1064 = vmatpush1.msra.mxu0 0.0
    %1065 = vmatprep.subr.mxu0 0.0
    %1066 = vmatpush1.msra.mxu0 0.0
    %1067 = vmatprep.subr.mxu0 0.0
    %1068 = vmatpush1.msra.mxu0 0.0
    %1069 = vmatprep.subr.mxu0 0.0
    %1070 = vmatpush1.msra.mxu0 0.0
    %1071 = vmatprep.subr.mxu0 0.0
    %1072 = vmatpush1.msra.mxu0 0.0
    %1073 = vmatprep.subr.mxu0 0.0
    %1074 = vmatpush1.msra.mxu0 0.0
    %1075 = vmatprep.subr.mxu0 0.0
    %1076 = vmatpush1.msra.mxu0 0.0
    %1077 = vmatprep.subr.mxu0 0.0
    %1078 = vmatpush1.msra.mxu0 0.0
    %1079 = vmatprep.subr.mxu0 0.0
    %1080 = vmatpush1.msra.mxu0 0.0
    %1081 = vmatprep.subr.mxu0 0.0
    %1082 = vmatpush1.msra.mxu0 0.0
    %1083 = vmatprep.subr.mxu0 0.0
    %1084 = vmatpush1.msra.mxu0 0.0
    %1085 = vmatprep.subr.mxu0 0.0
    %1086 = vmatpush1.msra.mxu0 0.0
    %1087 = vmatprep.subr.mxu0 0.0
    %1088 = vmatpush1.msra.mxu0 %v336
    %1089 = vmatprep.subr.mxu0 0.0
    %1090 = vmatpush1.msra.mxu0 %v335
    %1091 = vmatprep.subr.mxu0 0.0
    %1092 = vmatpush1.msra.mxu0 %v334
    %1093 = vmatprep.subr.mxu0 0.0
    %1094 = vmatpush1.msra.mxu0 %v333
    %1095 = vmatprep.subr.mxu0 0.0
    %1096 = vmatpush2.msra.mxu0 0.0
    %1097 = vmatprep.subr.mxu0 0.0
    %1098 = vmatpush2.msra.mxu0 0.0
    %1099 = vmatprep.subr.mxu0 0.0
    %1100 = vmatpush2.msra.mxu0 0.0
    %1101 = vmatprep.subr.mxu0 0.0
    %1102 = vmatpush2.msra.mxu0 0.0
    %1103 = vmatprep.subr.mxu0 0.0
    %1104 = vmatpush2.msra.mxu0 0.0
    %1105 = vmatprep.subr.mxu0 0.0
    %1106 = vmatpush2.msra.mxu0 0.0
    %1107 = vmatprep.subr.mxu0 0.0
    %1108 = vmatpush2.msra.mxu0 0.0
    %1109 = vmatprep.subr.mxu0 0.0
    %1110 = vmatpush2.msra.mxu0 0.0
    %1111 = vmatprep.subr.mxu0 0.0
    %1112 = vmatpush2.msra.mxu0 0.0
    %1113 = vmatprep.subr.mxu0 0.0
    %1114 = vmatpush2.msra.mxu0 0.0
    %1115 = vmatprep.subr.mxu0 0.0
    %1116 = vmatpush2.msra.mxu0 0.0
    %1117 = vmatprep.subr.mxu0 0.0
    %1118 = vmatpush2.msra.mxu0 0.0
    %1119 = vmatprep.subr.mxu0 0.0
    %1120 = vmatpush2.msra.mxu0 0.0
    %1121 = vmatprep.subr.mxu0 0.0
    %1122 = vmatpush2.msra.mxu0 0.0
    %1123 = vmatprep.subr.mxu0 0.0
    %1124 = vmatpush2.msra.mxu0 0.0
    %1125 = vmatprep.subr.mxu0 0.0
    %1126 = vmatpush2.msra.mxu0 0.0
    %1127 = vmatprep.mubr.f32.mxu0 0.0
    %1128 = vmatmul.mubr.f32.gmra.mxu0 %v1058
    %v1129 = vpop.f32.mrf.mxu0
    %v1130 = vadd.f32 %v1055, %v1129
    %v1131 = vpop.f32.mrf.mxu0
    %1132 = vmatprep.mubr.f32.mxu0 0.0
    %1133 = vmatmul.mubr.f32.gmra.mxu0 %v1061
    %v1134 = vpop.f32.mrf.mxu0
    %v1135 = vadd.f32 %v1055, %v1134
    %v1136 = vpop.f32.mrf.mxu0
    %1137 = vdwg.mxu0
    %v1138 = vmul.f32 %v1130, 0.5
    %v1139 = vmul.f32 %v1135, 0.5
    %v1140 = vmul.f32 %v775, 0.5
    %v1141 = vmul.f32 %v780, 0.5
    %v1142 = vadd.f32 %v1138, %v1140
    %v1143 = vadd.f32 %v1139, %v1141
    %v1145 = vlaneseq
    %v1146 = vshrl.u32 %v1145, 7
    %v1147 = vsub.s32 0, %v1146
    %v1148 = vrot.slane %v318, %v1147
    %v1151 = vsel %vm789, %v421, 0
    %v1154 = vsel %vm789, %v422, 0
    %1156 = vmatprep.subr.mxu0 0.0
    %1157 = vmatpush1.msra.mxu0 0.0
    %1158 = vmatprep.subr.mxu0 0.0
    %1159 = vmatpush1.msra.mxu0 0.0
    %1160 = vmatprep.subr.mxu0 0.0
    %1161 = vmatpush1.msra.mxu0 0.0
    %1162 = vmatprep.subr.mxu0 0.0
    %1163 = vmatpush1.msra.mxu0 0.0
    %1164 = vmatprep.subr.mxu0 0.0
    %1165 = vmatpush1.msra.mxu0 0.0
    %1166 = vmatprep.subr.mxu0 0.0
    %1167 = vmatpush1.msra.mxu0 0.0
    %1168 = vmatprep.subr.mxu0 0.0
    %1169 = vmatpush1.msra.mxu0 0.0
    %1170 = vmatprep.subr.mxu0 0.0
    %1171 = vmatpush1.msra.mxu0 0.0
    %1172 = vmatprep.subr.mxu0 0.0
    %1173 = vmatpush1.msra.mxu0 0.0
    %1174 = vmatprep.subr.mxu0 0.0
    %1175 = vmatpush1.msra.mxu0 0.0
    %1176 = vmatprep.subr.mxu0 0.0
    %1177 = vmatpush1.msra.mxu0 0.0
    %1178 = vmatprep.subr.mxu0 0.0
    %1179 = vmatpush1.msra.mxu0 0.0
    %1180 = vmatprep.subr.mxu0 0.0
    %1181 = vmatpush1.msra.mxu0 0.0
    %1182 = vmatprep.subr.mxu0 0.0
    %1183 = vmatpush1.msra.mxu0 0.0
    %1184 = vmatprep.subr.mxu0 0.0
    %1185 = vmatpush1.msra.mxu0 0.0
    %1186 = vmatprep.subr.mxu0 0.0
    %1187 = vmatpush1.msra.mxu0 %v319
    %1188 = vmatprep.subr.mxu0 0.0
    %1189 = vmatpush2.msra.mxu0 0.0
    %1190 = vmatprep.subr.mxu0 0.0
    %1191 = vmatpush2.msra.mxu0 0.0
    %1192 = vmatprep.subr.mxu0 0.0
    %1193 = vmatpush2.msra.mxu0 0.0
    %1194 = vmatprep.subr.mxu0 0.0
    %1195 = vmatpush2.msra.mxu0 0.0
    %1196 = vmatprep.subr.mxu0 0.0
    %1197 = vmatpush2.msra.mxu0 0.0
    %1198 = vmatprep.subr.mxu0 0.0
    %1199 = vmatpush2.msra.mxu0 0.0
    %1200 = vmatprep.subr.mxu0 0.0
    %1201 = vmatpush2.msra.mxu0 0.0
    %1202 = vmatprep.subr.mxu0 0.0
    %1203 = vmatpush2.msra.mxu0 0.0
    %1204 = vmatprep.subr.mxu0 0.0
    %1205 = vmatpush2.msra.mxu0 0.0
    %1206 = vmatprep.subr.mxu0 0.0
    %1207 = vmatpush2.msra.mxu0 0.0
    %1208 = vmatprep.subr.mxu0 0.0
    %1209 = vmatpush2.msra.mxu0 0.0
    %1210 = vmatprep.subr.mxu0 0.0
    %1211 = vmatpush2.msra.mxu0 0.0
    %1212 = vmatprep.subr.mxu0 0.0
    %1213 = vmatpush2.msra.mxu0 0.0
    %1214 = vmatprep.subr.mxu0 0.0
    %1215 = vmatpush2.msra.mxu0 0.0
    %1216 = vmatprep.subr.mxu0 0.0
    %1217 = vmatpush2.msra.mxu0 0.0
    %1218 = vmatprep.subr.mxu0 0.0
    %1219 = vmatpush2.msra.mxu0 0.0
    %1220 = vmatprep.mubr.f32.mxu0 0.0
    %1221 = vmatmul.mubr.f32.gmra.mxu0 %v1151
    %v1222 = vpop.f32.mrf.mxu0
    %v1223 = vadd.f32 %v1148, %v1222
    %v1224 = vpop.f32.mrf.mxu0
    %1225 = vmatprep.mubr.f32.mxu0 0.0
    %1226 = vmatmul.mubr.f32.gmra.mxu0 %v1154
    %v1227 = vpop.f32.mrf.mxu0
    %v1228 = vadd.f32 %v1148, %v1227
    %v1229 = vpop.f32.mrf.mxu0
    %1230 = vdwg.mxu0
    %1231 = vst.msk [vmem:[#allocation2] sm:$0xff] %vm433, %v1223
    %1232 = vst.msk [vmem:[#allocation2 + $0x8] sm:$0xff] %vm433, %v1228
    %1235 = vrot.lane.b32.xlu0 %v1142, 16
    %v1236 = vpop.permute.xlu0 %1235
    %1237 = vrot.lane.b32.xlu0 %v1143, 16
    %v1238 = vpop.permute.xlu0 %1237
    %vm1241 = vcmask 261248
    %1242 = vst.msk [vmem:[#allocation2] sm:$0xff] %vm1241, %v1236
    %1243 = vst.msk [vmem:[#allocation2 + $0x8] sm:$0xff] %vm1241, %v1238
    %v1244 = vld [vmem:[#allocation2] sm:$0xff]
    %v1245 = vld [vmem:[#allocation2 + $0x8] sm:$0xff]
    %v1247 = vlaneseq
    %v1248 = vshrl.u32 %v1247, 7
    %v1249 = vsub.s32 0, %v1248
    %v1250 = vrot.slane %v355, %v1249
    %v1253 = vsel %vm523, %v1244, 0
    %v1256 = vsel %vm523, %v1245, 0
    %1258 = vmatprep.subr.mxu0 0.0
    %1259 = vmatpush1.msra.mxu0 0.0
    %1260 = vmatprep.subr.mxu0 0.0
    %1261 = vmatpush1.msra.mxu0 0.0
    %1262 = vmatprep.subr.mxu0 0.0
    %1263 = vmatpush1.msra.mxu0 0.0
    %1264 = vmatprep.subr.mxu0 0.0
    %1265 = vmatpush1.msra.mxu0 0.0
    %1266 = vmatprep.subr.mxu0 0.0
    %1267 = vmatpush1.msra.mxu0 0.0
    %1268 = vmatprep.subr.mxu0 0.0
    %1269 = vmatpush1.msra.mxu0 0.0
    %1270 = vmatprep.subr.mxu0 0.0
    %1271 = vmatpush1.msra.mxu0 0.0
    %1272 = vmatprep.subr.mxu0 0.0
    %1273 = vmatpush1.msra.mxu0 0.0
    %1274 = vmatprep.subr.mxu0 0.0
    %1275 = vmatpush1.msra.mxu0 0.0
    %1276 = vmatprep.subr.mxu0 0.0
    %1277 = vmatpush1.msra.mxu0 0.0
    %1278 = vmatprep.subr.mxu0 0.0
    %1279 = vmatpush1.msra.mxu0 0.0
    %1280 = vmatprep.subr.mxu0 0.0
    %1281 = vmatpush1.msra.mxu0 0.0
    %1282 = vmatprep.subr.mxu0 0.0
    %1283 = vmatpush1.msra.mxu0 %v382
    %1284 = vmatprep.subr.mxu0 0.0
    %1285 = vmatpush1.msra.mxu0 %v381
    %1286 = vmatprep.subr.mxu0 0.0
    %1287 = vmatpush1.msra.mxu0 %v380
    %1288 = vmatprep.subr.mxu0 0.0
    %1289 = vmatpush1.msra.mxu0 %v379
    %1290 = vmatprep.subr.mxu0 0.0
    %1291 = vmatpush2.msra.mxu0 0.0
    %1292 = vmatprep.subr.mxu0 0.0
    %1293 = vmatpush2.msra.mxu0 0.0
    %1294 = vmatprep.subr.mxu0 0.0
    %1295 = vmatpush2.msra.mxu0 0.0
    %1296 = vmatprep.subr.mxu0 0.0
    %1297 = vmatpush2.msra.mxu0 0.0
    %1298 = vmatprep.subr.mxu0 0.0
    %1299 = vmatpush2.msra.mxu0 0.0
    %1300 = vmatprep.subr.mxu0 0.0
    %1301 = vmatpush2.msra.mxu0 0.0
    %1302 = vmatprep.subr.mxu0 0.0
    %1303 = vmatpush2.msra.mxu0 0.0
    %1304 = vmatprep.subr.mxu0 0.0
    %1305 = vmatpush2.msra.mxu0 0.0
    %1306 = vmatprep.subr.mxu0 0.0
    %1307 = vmatpush2.msra.mxu0 0.0
    %1308 = vmatprep.subr.mxu0 0.0
    %1309 = vmatpush2.msra.mxu0 0.0
    %1310 = vmatprep.subr.mxu0 0.0
    %1311 = vmatpush2.msra.mxu0 0.0
    %1312 = vmatprep.subr.mxu0 0.0
    %1313 = vmatpush2.msra.mxu0 0.0
    %1314 = vmatprep.subr.mxu0 0.0
    %1315 = vmatpush2.msra.mxu0 0.0
    %1316 = vmatprep.subr.mxu0 0.0
    %1317 = vmatpush2.msra.mxu0 0.0
    %1318 = vmatprep.subr.mxu0 0.0
    %1319 = vmatpush2.msra.mxu0 0.0
    %1320 = vmatprep.subr.mxu0 0.0
    %1321 = vmatpush2.msra.mxu0 0.0
    %1322 = vmatprep.mubr.f32.mxu0 0.0
    %1323 = vmatmul.mubr.f32.gmra.mxu0 %v1253
    %v1324 = vpop.f32.mrf.mxu0
    %v1325 = vadd.f32 %v1250, %v1324
    %v1326 = vpop.f32.mrf.mxu0
    %1327 = vmatprep.mubr.f32.mxu0 0.0
    %1328 = vmatmul.mubr.f32.gmra.mxu0 %v1256
    %v1329 = vpop.f32.mrf.mxu0
    %v1330 = vadd.f32 %v1250, %v1329
    %v1331 = vpop.f32.mrf.mxu0
    %1332 = vdwg.mxu0
    %1335 = vrot.lane.b32.xlu0 %v1325, 96
    %v1336 = vpop.permute.xlu0 %1335
    %1337 = vrot.lane.b32.xlu0 %v1330, 96
    %v1338 = vpop.permute.xlu0 %1337
    %v1339 = vsel %vm789, %v1325, 0
    %v1341 = vsel %vm789, %v1330, 0
    %v1343 = vsel %vm789, %v1336, 0
    %v1345 = vsel %vm789, %v1338, 0
    %1347 = vmatprep.subr.mxu0 0.0
    %1348 = vmatpush1.xpose.msra.mxu0 0.0
    %1349 = vmatprep.subr.mxu0 0.0
    %1350 = vmatpush1.xpose.msra.mxu0 0.0
    %1351 = vmatprep.subr.mxu0 0.0
    %1352 = vmatpush1.xpose.msra.mxu0 0.0
    %1353 = vmatprep.subr.mxu0 0.0
    %1354 = vmatpush1.xpose.msra.mxu0 0.0
    %1355 = vmatprep.subr.mxu0 0.0
    %1356 = vmatpush1.xpose.msra.mxu0 0.0
    %1357 = vmatprep.subr.mxu0 0.0
    %1358 = vmatpush1.xpose.msra.mxu0 0.0
    %1359 = vmatprep.subr.mxu0 0.0
    %1360 = vmatpush1.xpose.msra.mxu0 0.0
    %1361 = vmatprep.subr.mxu0 0.0
    %1362 = vmatpush1.xpose.msra.mxu0 0.0
    %1363 = vmatprep.subr.mxu0 0.0
    %1364 = vmatpush1.xpose.msra.mxu0 0.0
    %1365 = vmatprep.subr.mxu0 0.0
    %1366 = vmatpush1.xpose.msra.mxu0 0.0
    %1367 = vmatprep.subr.mxu0 0.0
    %1368 = vmatpush1.xpose.msra.mxu0 0.0
    %1369 = vmatprep.subr.mxu0 0.0
    %1370 = vmatpush1.xpose.msra.mxu0 0.0
    %1371 = vmatprep.subr.mxu0 0.0
    %1372 = vmatpush1.xpose.msra.mxu0 0.0
    %1373 = vmatprep.subr.mxu0 0.0
    %1374 = vmatpush1.xpose.msra.mxu0 0.0
    %1375 = vmatprep.subr.mxu0 0.0
    %1376 = vmatpush1.xpose.msra.mxu0 %v1345
    %1377 = vmatprep.subr.mxu0 0.0
    %1378 = vmatpush1.xpose.msra.mxu0 %v1343
    %1379 = vmatprep.subr.mxu0 0.0
    %1380 = vmatpush2.xpose.msra.mxu0 0.0
    %1381 = vmatprep.subr.mxu0 0.0
    %1382 = vmatpush2.xpose.msra.mxu0 0.0
    %1383 = vmatprep.subr.mxu0 0.0
    %1384 = vmatpush2.xpose.msra.mxu0 0.0
    %1385 = vmatprep.subr.mxu0 0.0
    %1386 = vmatpush2.xpose.msra.mxu0 0.0
    %1387 = vmatprep.subr.mxu0 0.0
    %1388 = vmatpush2.xpose.msra.mxu0 0.0
    %1389 = vmatprep.subr.mxu0 0.0
    %1390 = vmatpush2.xpose.msra.mxu0 0.0
    %1391 = vmatprep.subr.mxu0 0.0
    %1392 = vmatpush2.xpose.msra.mxu0 0.0
    %1393 = vmatprep.subr.mxu0 0.0
    %1394 = vmatpush2.xpose.msra.mxu0 0.0
    %1395 = vmatprep.subr.mxu0 0.0
    %1396 = vmatpush2.xpose.msra.mxu0 0.0
    %1397 = vmatprep.subr.mxu0 0.0
    %1398 = vmatpush2.xpose.msra.mxu0 0.0
    %1399 = vmatprep.subr.mxu0 0.0
    %1400 = vmatpush2.xpose.msra.mxu0 0.0
    %1401 = vmatprep.subr.mxu0 0.0
    %1402 = vmatpush2.xpose.msra.mxu0 0.0
    %1403 = vmatprep.subr.mxu0 0.0
    %1404 = vmatpush2.xpose.msra.mxu0 0.0
    %1405 = vmatprep.subr.mxu0 0.0
    %1406 = vmatpush2.xpose.msra.mxu0 0.0
    %1407 = vmatprep.subr.mxu0 0.0
    %1408 = vmatpush2.xpose.msra.mxu0 0.0
    %1409 = vmatprep.subr.mxu0 0.0
    %1410 = vmatpush2.xpose.msra.mxu0 0.0
    %1411 = vmatprep.mubr.f32.mxu0 0.0
    %1412 = vmatmul.mubr.f32.gmra.mxu0 %v1339
    %v1413 = vpop.f32.mrf.mxu0
    %v1414 = vadd.f32 0.0, %v1413
    %v1415 = vpop.f32.mrf.mxu0
    %1416 = vmatprep.mubr.f32.mxu0 0.0
    %1417 = vmatmul.mubr.f32.gmra.mxu0 %v1341
    %v1418 = vpop.f32.mrf.mxu0
    %v1419 = vadd.f32 0.0, %v1418
    %v1420 = vpop.f32.mrf.mxu0
    %1421 = vdwg.mxu0
    %v1422 = vmul.f32 %v1414, 0.35355338
    %v1423 = vmul.f32 %v1419, 0.35355338
    %v1424 = vmax.f32 %v1422, -5.0
    %v1425 = vmax.f32 %v1423, -5.0
    %v1426 = vmin.f32 %v1424, 5.0
    %v1427 = vmin.f32 %v1425, 5.0
    %v1428 = vmul.f32 %v1426, 1.442695
    %v1429 = vpow.pop %v1428
    %v1430 = vmul.f32 %v1427, 1.442695
    %v1431 = vpow.pop %v1430
    %v1432 = vsel %vm433, %v1429, 0.0
    %1433 = vadd.xlane.f32.xlu0 %v1432
    %v1434 = vpop.xlane.xlu0 %1433
    %v1435 = vsel %vm433, %v1431, 0.0
    %1436 = vadd.xlane.f32.xlu0 %v1435
    %v1437 = vpop.xlane.xlu0 %1436
    %v1438 = vrcp.pop %v1434
    %v1439 = vmul.f32 %v1429, %v1438
    %v1440 = vrcp.pop %v1437
    %v1441 = vmul.f32 %v1431, %v1440
    %1442 = vrot.lane.b32.xlu0 %v1325, 64
    %v1443 = vpop.permute.xlu0 %1442
    %1444 = vrot.lane.b32.xlu0 %v1330, 64
    %v1445 = vpop.permute.xlu0 %1444
    %v1449 = vsel %vm433, %v1439, 0
    %v1452 = vsel %vm433, %v1441, 0
    %1454 = vmatprep.subr.mxu0 0.0
    %1455 = vmatpush1.msra.mxu0 0.0
    %1456 = vmatprep.subr.mxu0 0.0
    %1457 = vmatpush1.msra.mxu0 0.0
    %1458 = vmatprep.subr.mxu0 0.0
    %1459 = vmatpush1.msra.mxu0 0.0
    %1460 = vmatprep.subr.mxu0 0.0
    %1461 = vmatpush1.msra.mxu0 0.0
    %1462 = vmatprep.subr.mxu0 0.0
    %1463 = vmatpush1.msra.mxu0 0.0
    %1464 = vmatprep.subr.mxu0 0.0
    %1465 = vmatpush1.msra.mxu0 0.0
    %1466 = vmatprep.subr.mxu0 0.0
    %1467 = vmatpush1.msra.mxu0 0.0
    %1468 = vmatprep.subr.mxu0 0.0
    %1469 = vmatpush1.msra.mxu0 0.0
    %1470 = vmatprep.subr.mxu0 0.0
    %1471 = vmatpush1.msra.mxu0 0.0
    %1472 = vmatprep.subr.mxu0 0.0
    %1473 = vmatpush1.msra.mxu0 0.0
    %1474 = vmatprep.subr.mxu0 0.0
    %1475 = vmatpush1.msra.mxu0 0.0
    %1476 = vmatprep.subr.mxu0 0.0
    %1477 = vmatpush1.msra.mxu0 0.0
    %1478 = vmatprep.subr.mxu0 0.0
    %1479 = vmatpush1.msra.mxu0 0.0
    %1480 = vmatprep.subr.mxu0 0.0
    %1481 = vmatpush1.msra.mxu0 0.0
    %1482 = vmatprep.subr.mxu0 0.0
    %1483 = vmatpush1.msra.mxu0 %v1445
    %1484 = vmatprep.subr.mxu0 0.0
    %1485 = vmatpush1.msra.mxu0 %v1443
    %1486 = vmatprep.subr.mxu0 0.0
    %1487 = vmatpush2.msra.mxu0 0.0
    %1488 = vmatprep.subr.mxu0 0.0
    %1489 = vmatpush2.msra.mxu0 0.0
    %1490 = vmatprep.subr.mxu0 0.0
    %1491 = vmatpush2.msra.mxu0 0.0
    %1492 = vmatprep.subr.mxu0 0.0
    %1493 = vmatpush2.msra.mxu0 0.0
    %1494 = vmatprep.subr.mxu0 0.0
    %1495 = vmatpush2.msra.mxu0 0.0
    %1496 = vmatprep.subr.mxu0 0.0
    %1497 = vmatpush2.msra.mxu0 0.0
    %1498 = vmatprep.subr.mxu0 0.0
    %1499 = vmatpush2.msra.mxu0 0.0
    %1500 = vmatprep.subr.mxu0 0.0
    %1501 = vmatpush2.msra.mxu0 0.0
    %1502 = vmatprep.subr.mxu0 0.0
    %1503 = vmatpush2.msra.mxu0 0.0
    %1504 = vmatprep.subr.mxu0 0.0
    %1505 = vmatpush2.msra.mxu0 0.0
    %1506 = vmatprep.subr.mxu0 0.0
    %1507 = vmatpush2.msra.mxu0 0.0
    %1508 = vmatprep.subr.mxu0 0.0
    %1509 = vmatpush2.msra.mxu0 0.0
    %1510 = vmatprep.subr.mxu0 0.0
    %1511 = vmatpush2.msra.mxu0 0.0
    %1512 = vmatprep.subr.mxu0 0.0
    %1513 = vmatpush2.msra.mxu0 0.0
    %1514 = vmatprep.subr.mxu0 0.0
    %1515 = vmatpush2.msra.mxu0 0.0
    %1516 = vmatprep.subr.mxu0 0.0
    %1517 = vmatpush2.msra.mxu0 0.0
    %1518 = vmatprep.mubr.f32.mxu0 0.0
    %1519 = vmatmul.mubr.f32.gmra.mxu0 %v1449
    %v1520 = vpop.f32.mrf.mxu0
    %v1521 = vadd.f32 0.0, %v1520
    %v1522 = vpop.f32.mrf.mxu0
    %1523 = vmatprep.mubr.f32.mxu0 0.0
    %1524 = vmatmul.mubr.f32.gmra.mxu0 %v1452
    %v1525 = vpop.f32.mrf.mxu0
    %v1526 = vadd.f32 0.0, %v1525
    %v1527 = vpop.f32.mrf.mxu0
    %1528 = vdwg.mxu0
    %1529 = vrot.lane.b32.xlu0 %v1325, 120
    %v1530 = vpop.permute.xlu0 %1529
    %1531 = vrot.lane.b32.xlu0 %v1330, 120
    %v1532 = vpop.permute.xlu0 %1531
    %1533 = vrot.lane.b32.xlu0 %v1325, 88
    %v1534 = vpop.permute.xlu0 %1533
    %1535 = vrot.lane.b32.xlu0 %v1330, 88
    %v1536 = vpop.permute.xlu0 %1535
    %v1537 = vsel %vm789, %v1530, 0
    %v1539 = vsel %vm789, %v1532, 0
    %v1541 = vsel %vm789, %v1534, 0
    %v1543 = vsel %vm789, %v1536, 0
    %1545 = vmatprep.subr.mxu0 0.0
    %1546 = vmatpush1.xpose.msra.mxu0 0.0
    %1547 = vmatprep.subr.mxu0 0.0
    %1548 = vmatpush1.xpose.msra.mxu0 0.0
    %1549 = vmatprep.subr.mxu0 0.0
    %1550 = vmatpush1.xpose.msra.mxu0 0.0
    %1551 = vmatprep.subr.mxu0 0.0
    %1552 = vmatpush1.xpose.msra.mxu0 0.0
    %1553 = vmatprep.subr.mxu0 0.0
    %1554 = vmatpush1.xpose.msra.mxu0 0.0
    %1555 = vmatprep.subr.mxu0 0.0
    %1556 = vmatpush1.xpose.msra.mxu0 0.0
    %1557 = vmatprep.subr.mxu0 0.0
    %1558 = vmatpush1.xpose.msra.mxu0 0.0
    %1559 = vmatprep.subr.mxu0 0.0
    %1560 = vmatpush1.xpose.msra.mxu0 0.0
    %1561 = vmatprep.subr.mxu0 0.0
    %1562 = vmatpush1.xpose.msra.mxu0 0.0
    %1563 = vmatprep.subr.mxu0 0.0
    %1564 = vmatpush1.xpose.msra.mxu0 0.0
    %1565 = vmatprep.subr.mxu0 0.0
    %1566 = vmatpush1.xpose.msra.mxu0 0.0
    %1567 = vmatprep.subr.mxu0 0.0
    %1568 = vmatpush1.xpose.msra.mxu0 0.0
    %1569 = vmatprep.subr.mxu0 0.0
    %1570 = vmatpush1.xpose.msra.mxu0 0.0
    %1571 = vmatprep.subr.mxu0 0.0
    %1572 = vmatpush1.xpose.msra.mxu0 0.0
    %1573 = vmatprep.subr.mxu0 0.0
    %1574 = vmatpush1.xpose.msra.mxu0 %v1543
    %1575 = vmatprep.subr.mxu0 0.0
    %1576 = vmatpush1.xpose.msra.mxu0 %v1541
    %1577 = vmatprep.subr.mxu0 0.0
    %1578 = vmatpush2.xpose.msra.mxu0 0.0
    %1579 = vmatprep.subr.mxu0 0.0
    %1580 = vmatpush2.xpose.msra.mxu0 0.0
    %1581 = vmatprep.subr.mxu0 0.0
    %1582 = vmatpush2.xpose.msra.mxu0 0.0
    %1583 = vmatprep.subr.mxu0 0.0
    %1584 = vmatpush2.xpose.msra.mxu0 0.0
    %1585 = vmatprep.subr.mxu0 0.0
    %1586 = vmatpush2.xpose.msra.mxu0 0.0
    %1587 = vmatprep.subr.mxu0 0.0
    %1588 = vmatpush2.xpose.msra.mxu0 0.0
    %1589 = vmatprep.subr.mxu0 0.0
    %1590 = vmatpush2.xpose.msra.mxu0 0.0
    %1591 = vmatprep.subr.mxu0 0.0
    %1592 = vmatpush2.xpose.msra.mxu0 0.0
    %1593 = vmatprep.subr.mxu0 0.0
    %1594 = vmatpush2.xpose.msra.mxu0 0.0
    %1595 = vmatprep.subr.mxu0 0.0
    %1596 = vmatpush2.xpose.msra.mxu0 0.0
    %1597 = vmatprep.subr.mxu0 0.0
    %1598 = vmatpush2.xpose.msra.mxu0 0.0
    %1599 = vmatprep.subr.mxu0 0.0
    %1600 = vmatpush2.xpose.msra.mxu0 0.0
    %1601 = vmatprep.subr.mxu0 0.0
    %1602 = vmatpush2.xpose.msra.mxu0 0.0
    %1603 = vmatprep.subr.mxu0 0.0
    %1604 = vmatpush2.xpose.msra.mxu0 0.0
    %1605 = vmatprep.subr.mxu0 0.0
    %1606 = vmatpush2.xpose.msra.mxu0 0.0
    %1607 = vmatprep.subr.mxu0 0.0
    %1608 = vmatpush2.xpose.msra.mxu0 0.0
    %1609 = vmatprep.mubr.f32.mxu0 0.0
    %1610 = vmatmul.mubr.f32.gmra.mxu0 %v1537
    %v1611 = vpop.f32.mrf.mxu0
    %v1612 = vadd.f32 0.0, %v1611
    %v1613 = vpop.f32.mrf.mxu0
    %1614 = vmatprep.mubr.f32.mxu0 0.0
    %1615 = vmatmul.mubr.f32.gmra.mxu0 %v1539
    %v1616 = vpop.f32.mrf.mxu0
    %v1617 = vadd.f32 0.0, %v1616
    %v1618 = vpop.f32.mrf.mxu0
    %1619 = vdwg.mxu0
    %v1620 = vmul.f32 %v1612, 0.35355338
    %v1621 = vmul.f32 %v1617, 0.35355338
    %v1622 = vmax.f32 %v1620, -5.0
    %v1623 = vmax.f32 %v1621, -5.0
    %v1624 = vmin.f32 %v1622, 5.0
    %v1625 = vmin.f32 %v1623, 5.0
    %v1626 = vmul.f32 %v1624, 1.442695
    %v1627 = vpow.pop %v1626
    %v1628 = vmul.f32 %v1625, 1.442695
    %v1629 = vpow.pop %v1628
    %v1630 = vsel %vm433, %v1627, 0.0
    %1631 = vadd.xlane.f32.xlu0 %v1630
    %v1632 = vpop.xlane.xlu0 %1631
    %v1633 = vsel %vm433, %v1629, 0.0
    %1634 = vadd.xlane.f32.xlu0 %v1633
    %v1635 = vpop.xlane.xlu0 %1634
    %v1636 = vrcp.pop %v1632
    %v1637 = vmul.f32 %v1627, %v1636
    %v1638 = vrcp.pop %v1635
    %v1639 = vmul.f32 %v1629, %v1638
    %1640 = vrot.lane.b32.xlu0 %v1325, 56
    %v1641 = vpop.permute.xlu0 %1640
    %1642 = vrot.lane.b32.xlu0 %v1330, 56
    %v1643 = vpop.permute.xlu0 %1642
    %v1647 = vsel %vm433, %v1637, 0
    %v1650 = vsel %vm433, %v1639, 0
    %1652 = vmatprep.subr.mxu0 0.0
    %1653 = vmatpush1.msra.mxu0 0.0
    %1654 = vmatprep.subr.mxu0 0.0
    %1655 = vmatpush1.msra.mxu0 0.0
    %1656 = vmatprep.subr.mxu0 0.0
    %1657 = vmatpush1.msra.mxu0 0.0
    %1658 = vmatprep.subr.mxu0 0.0
    %1659 = vmatpush1.msra.mxu0 0.0
    %1660 = vmatprep.subr.mxu0 0.0
    %1661 = vmatpush1.msra.mxu0 0.0
    %1662 = vmatprep.subr.mxu0 0.0
    %1663 = vmatpush1.msra.mxu0 0.0
    %1664 = vmatprep.subr.mxu0 0.0
    %1665 = vmatpush1.msra.mxu0 0.0
    %1666 = vmatprep.subr.mxu0 0.0
    %1667 = vmatpush1.msra.mxu0 0.0
    %1668 = vmatprep.subr.mxu0 0.0
    %1669 = vmatpush1.msra.mxu0 0.0
    %1670 = vmatprep.subr.mxu0 0.0
    %1671 = vmatpush1.msra.mxu0 0.0
    %1672 = vmatprep.subr.mxu0 0.0
    %1673 = vmatpush1.msra.mxu0 0.0
    %1674 = vmatprep.subr.mxu0 0.0
    %1675 = vmatpush1.msra.mxu0 0.0
    %1676 = vmatprep.subr.mxu0 0.0
    %1677 = vmatpush1.msra.mxu0 0.0
    %1678 = vmatprep.subr.mxu0 0.0
    %1679 = vmatpush1.msra.mxu0 0.0
    %1680 = vmatprep.subr.mxu0 0.0
    %1681 = vmatpush1.msra.mxu0 %v1643
    %1682 = vmatprep.subr.mxu0 0.0
    %1683 = vmatpush1.msra.mxu0 %v1641
    %1684 = vmatprep.subr.mxu0 0.0
    %1685 = vmatpush2.msra.mxu0 0.0
    %1686 = vmatprep.subr.mxu0 0.0
    %1687 = vmatpush2.msra.mxu0 0.0
    %1688 = vmatprep.subr.mxu0 0.0
    %1689 = vmatpush2.msra.mxu0 0.0
    %1690 = vmatprep.subr.mxu0 0.0
    %1691 = vmatpush2.msra.mxu0 0.0
    %1692 = vmatprep.subr.mxu0 0.0
    %1693 = vmatpush2.msra.mxu0 0.0
    %1694 = vmatprep.subr.mxu0 0.0
    %1695 = vmatpush2.msra.mxu0 0.0
    %1696 = vmatprep.subr.mxu0 0.0
    %1697 = vmatpush2.msra.mxu0 0.0
    %1698 = vmatprep.subr.mxu0 0.0
    %1699 = vmatpush2.msra.mxu0 0.0
    %1700 = vmatprep.subr.mxu0 0.0
    %1701 = vmatpush2.msra.mxu0 0.0
    %1702 = vmatprep.subr.mxu0 0.0
    %1703 = vmatpush2.msra.mxu0 0.0
    %1704 = vmatprep.subr.mxu0 0.0
    %1705 = vmatpush2.msra.mxu0 0.0
    %1706 = vmatprep.subr.mxu0 0.0
    %1707 = vmatpush2.msra.mxu0 0.0
    %1708 = vmatprep.subr.mxu0 0.0
    %1709 = vmatpush2.msra.mxu0 0.0
    %1710 = vmatprep.subr.mxu0 0.0
    %1711 = vmatpush2.msra.mxu0 0.0
    %1712 = vmatprep.subr.mxu0 0.0
    %1713 = vmatpush2.msra.mxu0 0.0
    %1714 = vmatprep.subr.mxu0 0.0
    %1715 = vmatpush2.msra.mxu0 0.0
    %1716 = vmatprep.mubr.f32.mxu0 0.0
    %1717 = vmatmul.mubr.f32.gmra.mxu0 %v1647
    %v1718 = vpop.f32.mrf.mxu0
    %v1719 = vadd.f32 0.0, %v1718
    %v1720 = vpop.f32.mrf.mxu0
    %1721 = vmatprep.mubr.f32.mxu0 0.0
    %1722 = vmatmul.mubr.f32.gmra.mxu0 %v1650
    %v1723 = vpop.f32.mrf.mxu0
    %v1724 = vadd.f32 0.0, %v1723
    %v1725 = vpop.f32.mrf.mxu0
    %1726 = vdwg.mxu0
    %v1728 = vsel %vm789, %v1719, 0
    %v1731 = vsel %vm789, %v1724, 0
    %1733 = vmatprep.subr.mxu0 0.0
    %1734 = vmatpush1.msra.mxu0 0.0
    %1735 = vmatprep.subr.mxu0 0.0
    %1736 = vmatpush1.msra.mxu0 0.0
    %1737 = vmatprep.subr.mxu0 0.0
    %1738 = vmatpush1.msra.mxu0 0.0
    %1739 = vmatprep.subr.mxu0 0.0
    %1740 = vmatpush1.msra.mxu0 0.0
    %1741 = vmatprep.subr.mxu0 0.0
    %1742 = vmatpush1.msra.mxu0 0.0
    %1743 = vmatprep.subr.mxu0 0.0
    %1744 = vmatpush1.msra.mxu0 0.0
    %1745 = vmatprep.subr.mxu0 0.0
    %1746 = vmatpush1.msra.mxu0 0.0
    %1747 = vmatprep.subr.mxu0 0.0
    %1748 = vmatpush1.msra.mxu0 0.0
    %1749 = vmatprep.subr.mxu0 0.0
    %1750 = vmatpush1.msra.mxu0 0.0
    %1751 = vmatprep.subr.mxu0 0.0
    %1752 = vmatpush1.msra.mxu0 0.0
    %1753 = vmatprep.subr.mxu0 0.0
    %1754 = vmatpush1.msra.mxu0 0.0
    %1755 = vmatprep.subr.mxu0 0.0
    %1756 = vmatpush1.msra.mxu0 0.0
    %1757 = vmatprep.subr.mxu0 0.0
    %1758 = vmatpush1.msra.mxu0 0.0
    %1759 = vmatprep.subr.mxu0 0.0
    %1760 = vmatpush1.msra.mxu0 0.0
    %1761 = vmatprep.subr.mxu0 0.0
    %1762 = vmatpush1.msra.mxu0 0.0
    %1763 = vmatprep.subr.mxu0 0.0
    %1764 = vmatpush1.msra.mxu0 %v376
    %1765 = vmatprep.subr.mxu0 0.0
    %1766 = vmatpush2.msra.mxu0 0.0
    %1767 = vmatprep.subr.mxu0 0.0
    %1768 = vmatpush2.msra.mxu0 0.0
    %1769 = vmatprep.subr.mxu0 0.0
    %1770 = vmatpush2.msra.mxu0 0.0
    %1771 = vmatprep.subr.mxu0 0.0
    %1772 = vmatpush2.msra.mxu0 0.0
    %1773 = vmatprep.subr.mxu0 0.0
    %1774 = vmatpush2.msra.mxu0 0.0
    %1775 = vmatprep.subr.mxu0 0.0
    %1776 = vmatpush2.msra.mxu0 0.0
    %1777 = vmatprep.subr.mxu0 0.0
    %1778 = vmatpush2.msra.mxu0 0.0
    %1779 = vmatprep.subr.mxu0 0.0
    %1780 = vmatpush2.msra.mxu0 0.0
    %1781 = vmatprep.subr.mxu0 0.0
    %1782 = vmatpush2.msra.mxu0 0.0
    %1783 = vmatprep.subr.mxu0 0.0
    %1784 = vmatpush2.msra.mxu0 0.0
    %1785 = vmatprep.subr.mxu0 0.0
    %1786 = vmatpush2.msra.mxu0 0.0
    %1787 = vmatprep.subr.mxu0 0.0
    %1788 = vmatpush2.msra.mxu0 0.0
    %1789 = vmatprep.subr.mxu0 0.0
    %1790 = vmatpush2.msra.mxu0 0.0
    %1791 = vmatprep.subr.mxu0 0.0
    %1792 = vmatpush2.msra.mxu0 0.0
    %1793 = vmatprep.subr.mxu0 0.0
    %1794 = vmatpush2.msra.mxu0 0.0
    %1795 = vmatprep.subr.mxu0 0.0
    %1796 = vmatpush2.msra.mxu0 0.0
    %1797 = vmatprep.mubr.f32.mxu0 0.0
    %1798 = vmatmul.mubr.f32.gmra.mxu0 %v1728
    %v1799 = vpop.f32.mrf.mxu0
    %v1800 = vadd.f32 0.0, %v1799
    %v1801 = vpop.f32.mrf.mxu0
    %1802 = vmatprep.mubr.f32.mxu0 0.0
    %1803 = vmatmul.mubr.f32.gmra.mxu0 %v1731
    %v1804 = vpop.f32.mrf.mxu0
    %v1805 = vadd.f32 0.0, %v1804
    %v1806 = vpop.f32.mrf.mxu0
    %1807 = vdwg.mxu0
    %v1809 = vsel %vm789, %v1521, 0
    %v1812 = vsel %vm789, %v1526, 0
    %1814 = vmatprep.subr.mxu0 0.0
    %1815 = vmatpush1.msra.mxu0 0.0
    %1816 = vmatprep.subr.mxu0 0.0
    %1817 = vmatpush1.msra.mxu0 0.0
    %1818 = vmatprep.subr.mxu0 0.0
    %1819 = vmatpush1.msra.mxu0 0.0
    %1820 = vmatprep.subr.mxu0 0.0
    %1821 = vmatpush1.msra.mxu0 0.0
    %1822 = vmatprep.subr.mxu0 0.0
    %1823 = vmatpush1.msra.mxu0 0.0
    %1824 = vmatprep.subr.mxu0 0.0
    %1825 = vmatpush1.msra.mxu0 0.0
    %1826 = vmatprep.subr.mxu0 0.0
    %1827 = vmatpush1.msra.mxu0 0.0
    %1828 = vmatprep.subr.mxu0 0.0
    %1829 = vmatpush1.msra.mxu0 0.0
    %1830 = vmatprep.subr.mxu0 0.0
    %1831 = vmatpush1.msra.mxu0 0.0
    %1832 = vmatprep.subr.mxu0 0.0
    %1833 = vmatpush1.msra.mxu0 0.0
    %1834 = vmatprep.subr.mxu0 0.0
    %1835 = vmatpush1.msra.mxu0 0.0
    %1836 = vmatprep.subr.mxu0 0.0
    %1837 = vmatpush1.msra.mxu0 0.0
    %1838 = vmatprep.subr.mxu0 0.0
    %1839 = vmatpush1.msra.mxu0 0.0
    %1840 = vmatprep.subr.mxu0 0.0
    %1841 = vmatpush1.msra.mxu0 0.0
    %1842 = vmatprep.subr.mxu0 0.0
    %1843 = vmatpush1.msra.mxu0 0.0
    %1844 = vmatprep.subr.mxu0 0.0
    %1845 = vmatpush1.msra.mxu0 %v375
    %1846 = vmatprep.subr.mxu0 0.0
    %1847 = vmatpush2.msra.mxu0 0.0
    %1848 = vmatprep.subr.mxu0 0.0
    %1849 = vmatpush2.msra.mxu0 0.0
    %1850 = vmatprep.subr.mxu0 0.0
    %1851 = vmatpush2.msra.mxu0 0.0
    %1852 = vmatprep.subr.mxu0 0.0
    %1853 = vmatpush2.msra.mxu0 0.0
    %1854 = vmatprep.subr.mxu0 0.0
    %1855 = vmatpush2.msra.mxu0 0.0
    %1856 = vmatprep.subr.mxu0 0.0
    %1857 = vmatpush2.msra.mxu0 0.0
    %1858 = vmatprep.subr.mxu0 0.0
    %1859 = vmatpush2.msra.mxu0 0.0
    %1860 = vmatprep.subr.mxu0 0.0
    %1861 = vmatpush2.msra.mxu0 0.0
    %1862 = vmatprep.subr.mxu0 0.0
    %1863 = vmatpush2.msra.mxu0 0.0
    %1864 = vmatprep.subr.mxu0 0.0
    %1865 = vmatpush2.msra.mxu0 0.0
    %1866 = vmatprep.subr.mxu0 0.0
    %1867 = vmatpush2.msra.mxu0 0.0
    %1868 = vmatprep.subr.mxu0 0.0
    %1869 = vmatpush2.msra.mxu0 0.0
    %1870 = vmatprep.subr.mxu0 0.0
    %1871 = vmatpush2.msra.mxu0 0.0
    %1872 = vmatprep.subr.mxu0 0.0
    %1873 = vmatpush2.msra.mxu0 0.0
    %1874 = vmatprep.subr.mxu0 0.0
    %1875 = vmatpush2.msra.mxu0 0.0
    %1876 = vmatprep.subr.mxu0 0.0
    %1877 = vmatpush2.msra.mxu0 0.0
    %1878 = vmatprep.mubr.f32.mxu0 0.0
    %1879 = vmatmul.mubr.f32.gmra.mxu0 %v1809
    %v1880 = vpop.f32.mrf.mxu0
    %v1881 = vadd.f32 %v1800, %v1880
    %v1882 = vpop.f32.mrf.mxu0
    %1883 = vmatprep.mubr.f32.mxu0 0.0
    %1884 = vmatmul.mubr.f32.gmra.mxu0 %v1812
    %v1885 = vpop.f32.mrf.mxu0
    %v1886 = vadd.f32 %v1805, %v1885
    %v1887 = vpop.f32.mrf.mxu0
    %1888 = vdwg.mxu0
    %1889 = vrot.lane.b32.xlu0 %v1325, 112
    %v1890 = vpop.permute.xlu0 %1889
    %1891 = vrot.lane.b32.xlu0 %v1330, 112
    %v1892 = vpop.permute.xlu0 %1891
    %1893 = vrot.lane.b32.xlu0 %v1325, 80
    %v1894 = vpop.permute.xlu0 %1893
    %1895 = vrot.lane.b32.xlu0 %v1330, 80
    %v1896 = vpop.permute.xlu0 %1895
    %v1897 = vsel %vm789, %v1890, 0
    %v1899 = vsel %vm789, %v1892, 0
    %v1901 = vsel %vm789, %v1894, 0
    %v1903 = vsel %vm789, %v1896, 0
    %1905 = vmatprep.subr.mxu0 0.0
    %1906 = vmatpush1.xpose.msra.mxu0 0.0
    %1907 = vmatprep.subr.mxu0 0.0
    %1908 = vmatpush1.xpose.msra.mxu0 0.0
    %1909 = vmatprep.subr.mxu0 0.0
    %1910 = vmatpush1.xpose.msra.mxu0 0.0
    %1911 = vmatprep.subr.mxu0 0.0
    %1912 = vmatpush1.xpose.msra.mxu0 0.0
    %1913 = vmatprep.subr.mxu0 0.0
    %1914 = vmatpush1.xpose.msra.mxu0 0.0
    %1915 = vmatprep.subr.mxu0 0.0
    %1916 = vmatpush1.xpose.msra.mxu0 0.0
    %1917 = vmatprep.subr.mxu0 0.0
    %1918 = vmatpush1.xpose.msra.mxu0 0.0
    %1919 = vmatprep.subr.mxu0 0.0
    %1920 = vmatpush1.xpose.msra.mxu0 0.0
    %1921 = vmatprep.subr.mxu0 0.0
    %1922 = vmatpush1.xpose.msra.mxu0 0.0
    %1923 = vmatprep.subr.mxu0 0.0
    %1924 = vmatpush1.xpose.msra.mxu0 0.0
    %1925 = vmatprep.subr.mxu0 0.0
    %1926 = vmatpush1.xpose.msra.mxu0 0.0
    %1927 = vmatprep.subr.mxu0 0.0
    %1928 = vmatpush1.xpose.msra.mxu0 0.0
    %1929 = vmatprep.subr.mxu0 0.0
    %1930 = vmatpush1.xpose.msra.mxu0 0.0
    %1931 = vmatprep.subr.mxu0 0.0
    %1932 = vmatpush1.xpose.msra.mxu0 0.0
    %1933 = vmatprep.subr.mxu0 0.0
    %1934 = vmatpush1.xpose.msra.mxu0 %v1903
    %1935 = vmatprep.subr.mxu0 0.0
    %1936 = vmatpush1.xpose.msra.mxu0 %v1901
    %1937 = vmatprep.subr.mxu0 0.0
    %1938 = vmatpush2.xpose.msra.mxu0 0.0
    %1939 = vmatprep.subr.mxu0 0.0
    %1940 = vmatpush2.xpose.msra.mxu0 0.0
    %1941 = vmatprep.subr.mxu0 0.0
    %1942 = vmatpush2.xpose.msra.mxu0 0.0
    %1943 = vmatprep.subr.mxu0 0.0
    %1944 = vmatpush2.xpose.msra.mxu0 0.0
    %1945 = vmatprep.subr.mxu0 0.0
    %1946 = vmatpush2.xpose.msra.mxu0 0.0
    %1947 = vmatprep.subr.mxu0 0.0
    %1948 = vmatpush2.xpose.msra.mxu0 0.0
    %1949 = vmatprep.subr.mxu0 0.0
    %1950 = vmatpush2.xpose.msra.mxu0 0.0
    %1951 = vmatprep.subr.mxu0 0.0
    %1952 = vmatpush2.xpose.msra.mxu0 0.0
    %1953 = vmatprep.subr.mxu0 0.0
    %1954 = vmatpush2.xpose.msra.mxu0 0.0
    %1955 = vmatprep.subr.mxu0 0.0
    %1956 = vmatpush2.xpose.msra.mxu0 0.0
    %1957 = vmatprep.subr.mxu0 0.0
    %1958 = vmatpush2.xpose.msra.mxu0 0.0
    %1959 = vmatprep.subr.mxu0 0.0
    %1960 = vmatpush2.xpose.msra.mxu0 0.0
    %1961 = vmatprep.subr.mxu0 0.0
    %1962 = vmatpush2.xpose.msra.mxu0 0.0
    %1963 = vmatprep.subr.mxu0 0.0
    %1964 = vmatpush2.xpose.msra.mxu0 0.0
    %1965 = vmatprep.subr.mxu0 0.0
    %1966 = vmatpush2.xpose.msra.mxu0 0.0
    %1967 = vmatprep.subr.mxu0 0.0
    %1968 = vmatpush2.xpose.msra.mxu0 0.0
    %1969 = vmatprep.mubr.f32.mxu0 0.0
    %1970 = vmatmul.mubr.f32.gmra.mxu0 %v1897
    %v1971 = vpop.f32.mrf.mxu0
    %v1972 = vadd.f32 0.0, %v1971
    %v1973 = vpop.f32.mrf.mxu0
    %1974 = vmatprep.mubr.f32.mxu0 0.0
    %1975 = vmatmul.mubr.f32.gmra.mxu0 %v1899
    %v1976 = vpop.f32.mrf.mxu0
    %v1977 = vadd.f32 0.0, %v1976
    %v1978 = vpop.f32.mrf.mxu0
    %1979 = vdwg.mxu0
    %v1980 = vmul.f32 %v1972, 0.35355338
    %v1981 = vmul.f32 %v1977, 0.35355338
    %v1982 = vmax.f32 %v1980, -5.0
    %v1983 = vmax.f32 %v1981, -5.0
    %v1984 = vmin.f32 %v1982, 5.0
    %v1985 = vmin.f32 %v1983, 5.0
    %v1986 = vmul.f32 %v1984, 1.442695
    %v1987 = vpow.pop %v1986
    %v1988 = vmul.f32 %v1985, 1.442695
    %v1989 = vpow.pop %v1988
    %v1990 = vsel %vm433, %v1987, 0.0
    %1991 = vadd.xlane.f32.xlu0 %v1990
    %v1992 = vpop.xlane.xlu0 %1991
    %v1993 = vsel %vm433, %v1989, 0.0
    %1994 = vadd.xlane.f32.xlu0 %v1993
    %v1995 = vpop.xlane.xlu0 %1994
    %v1996 = vrcp.pop %v1992
    %v1997 = vmul.f32 %v1987, %v1996
    %v1998 = vrcp.pop %v1995
    %v1999 = vmul.f32 %v1989, %v1998
    %2000 = vrot.lane.b32.xlu0 %v1325, 48
    %v2001 = vpop.permute.xlu0 %2000
    %2002 = vrot.lane.b32.xlu0 %v1330, 48
    %v2003 = vpop.permute.xlu0 %2002
    %v2007 = vsel %vm433, %v1997, 0
    %v2010 = vsel %vm433, %v1999, 0
    %2012 = vmatprep.subr.mxu0 0.0
    %2013 = vmatpush1.msra.mxu0 0.0
    %2014 = vmatprep.subr.mxu0 0.0
    %2015 = vmatpush1.msra.mxu0 0.0
    %2016 = vmatprep.subr.mxu0 0.0
    %2017 = vmatpush1.msra.mxu0 0.0
    %2018 = vmatprep.subr.mxu0 0.0
    %2019 = vmatpush1.msra.mxu0 0.0
    %2020 = vmatprep.subr.mxu0 0.0
    %2021 = vmatpush1.msra.mxu0 0.0
    %2022 = vmatprep.subr.mxu0 0.0
    %2023 = vmatpush1.msra.mxu0 0.0
    %2024 = vmatprep.subr.mxu0 0.0
    %2025 = vmatpush1.msra.mxu0 0.0
    %2026 = vmatprep.subr.mxu0 0.0
    %2027 = vmatpush1.msra.mxu0 0.0
    %2028 = vmatprep.subr.mxu0 0.0
    %2029 = vmatpush1.msra.mxu0 0.0
    %2030 = vmatprep.subr.mxu0 0.0
    %2031 = vmatpush1.msra.mxu0 0.0
    %2032 = vmatprep.subr.mxu0 0.0
    %2033 = vmatpush1.msra.mxu0 0.0
    %2034 = vmatprep.subr.mxu0 0.0
    %2035 = vmatpush1.msra.mxu0 0.0
    %2036 = vmatprep.subr.mxu0 0.0
    %2037 = vmatpush1.msra.mxu0 0.0
    %2038 = vmatprep.subr.mxu0 0.0
    %2039 = vmatpush1.msra.mxu0 0.0
    %2040 = vmatprep.subr.mxu0 0.0
    %2041 = vmatpush1.msra.mxu0 %v2003
    %2042 = vmatprep.subr.mxu0 0.0
    %2043 = vmatpush1.msra.mxu0 %v2001
    %2044 = vmatprep.subr.mxu0 0.0
    %2045 = vmatpush2.msra.mxu0 0.0
    %2046 = vmatprep.subr.mxu0 0.0
    %2047 = vmatpush2.msra.mxu0 0.0
    %2048 = vmatprep.subr.mxu0 0.0
    %2049 = vmatpush2.msra.mxu0 0.0
    %2050 = vmatprep.subr.mxu0 0.0
    %2051 = vmatpush2.msra.mxu0 0.0
    %2052 = vmatprep.subr.mxu0 0.0
    %2053 = vmatpush2.msra.mxu0 0.0
    %2054 = vmatprep.subr.mxu0 0.0
    %2055 = vmatpush2.msra.mxu0 0.0
    %2056 = vmatprep.subr.mxu0 0.0
    %2057 = vmatpush2.msra.mxu0 0.0
    %2058 = vmatprep.subr.mxu0 0.0
    %2059 = vmatpush2.msra.mxu0 0.0
    %2060 = vmatprep.subr.mxu0 0.0
    %2061 = vmatpush2.msra.mxu0 0.0
    %2062 = vmatprep.subr.mxu0 0.0
    %2063 = vmatpush2.msra.mxu0 0.0
    %2064 = vmatprep.subr.mxu0 0.0
    %2065 = vmatpush2.msra.mxu0 0.0
    %2066 = vmatprep.subr.mxu0 0.0
    %2067 = vmatpush2.msra.mxu0 0.0
    %2068 = vmatprep.subr.mxu0 0.0
    %2069 = vmatpush2.msra.mxu0 0.0
    %2070 = vmatprep.subr.mxu0 0.0
    %2071 = vmatpush2.msra.mxu0 0.0
    %2072 = vmatprep.subr.mxu0 0.0
    %2073 = vmatpush2.msra.mxu0 0.0
    %2074 = vmatprep.subr.mxu0 0.0
    %2075 = vmatpush2.msra.mxu0 0.0
    %2076 = vmatprep.mubr.f32.mxu0 0.0
    %2077 = vmatmul.mubr.f32.gmra.mxu0 %v2007
    %v2078 = vpop.f32.mrf.mxu0
    %v2079 = vadd.f32 0.0, %v2078
    %v2080 = vpop.f32.mrf.mxu0
    %2081 = vmatprep.mubr.f32.mxu0 0.0
    %2082 = vmatmul.mubr.f32.gmra.mxu0 %v2010
    %v2083 = vpop.f32.mrf.mxu0
    %v2084 = vadd.f32 0.0, %v2083
    %v2085 = vpop.f32.mrf.mxu0
    %2086 = vdwg.mxu0
    %v2088 = vsel %vm789, %v2079, 0
    %v2091 = vsel %vm789, %v2084, 0
    %2093 = vmatprep.subr.mxu0 0.0
    %2094 = vmatpush1.msra.mxu0 0.0
    %2095 = vmatprep.subr.mxu0 0.0
    %2096 = vmatpush1.msra.mxu0 0.0
    %2097 = vmatprep.subr.mxu0 0.0
    %2098 = vmatpush1.msra.mxu0 0.0
    %2099 = vmatprep.subr.mxu0 0.0
    %2100 = vmatpush1.msra.mxu0 0.0
    %2101 = vmatprep.subr.mxu0 0.0
    %2102 = vmatpush1.msra.mxu0 0.0
    %2103 = vmatprep.subr.mxu0 0.0
    %2104 = vmatpush1.msra.mxu0 0.0
    %2105 = vmatprep.subr.mxu0 0.0
    %2106 = vmatpush1.msra.mxu0 0.0
    %2107 = vmatprep.subr.mxu0 0.0
    %2108 = vmatpush1.msra.mxu0 0.0
    %2109 = vmatprep.subr.mxu0 0.0
    %2110 = vmatpush1.msra.mxu0 0.0
    %2111 = vmatprep.subr.mxu0 0.0
    %2112 = vmatpush1.msra.mxu0 0.0
    %2113 = vmatprep.subr.mxu0 0.0
    %2114 = vmatpush1.msra.mxu0 0.0
    %2115 = vmatprep.subr.mxu0 0.0
    %2116 = vmatpush1.msra.mxu0 0.0
    %2117 = vmatprep.subr.mxu0 0.0
    %2118 = vmatpush1.msra.mxu0 0.0
    %2119 = vmatprep.subr.mxu0 0.0
    %2120 = vmatpush1.msra.mxu0 0.0
    %2121 = vmatprep.subr.mxu0 0.0
    %2122 = vmatpush1.msra.mxu0 0.0
    %2123 = vmatprep.subr.mxu0 0.0
    %2124 = vmatpush1.msra.mxu0 %v377
    %2125 = vmatprep.subr.mxu0 0.0
    %2126 = vmatpush2.msra.mxu0 0.0
    %2127 = vmatprep.subr.mxu0 0.0
    %2128 = vmatpush2.msra.mxu0 0.0
    %2129 = vmatprep.subr.mxu0 0.0
    %2130 = vmatpush2.msra.mxu0 0.0
    %2131 = vmatprep.subr.mxu0 0.0
    %2132 = vmatpush2.msra.mxu0 0.0
    %2133 = vmatprep.subr.mxu0 0.0
    %2134 = vmatpush2.msra.mxu0 0.0
    %2135 = vmatprep.subr.mxu0 0.0
    %2136 = vmatpush2.msra.mxu0 0.0
    %2137 = vmatprep.subr.mxu0 0.0
    %2138 = vmatpush2.msra.mxu0 0.0
    %2139 = vmatprep.subr.mxu0 0.0
    %2140 = vmatpush2.msra.mxu0 0.0
    %2141 = vmatprep.subr.mxu0 0.0
    %2142 = vmatpush2.msra.mxu0 0.0
    %2143 = vmatprep.subr.mxu0 0.0
    %2144 = vmatpush2.msra.mxu0 0.0
    %2145 = vmatprep.subr.mxu0 0.0
    %2146 = vmatpush2.msra.mxu0 0.0
    %2147 = vmatprep.subr.mxu0 0.0
    %2148 = vmatpush2.msra.mxu0 0.0
    %2149 = vmatprep.subr.mxu0 0.0
    %2150 = vmatpush2.msra.mxu0 0.0
    %2151 = vmatprep.subr.mxu0 0.0
    %2152 = vmatpush2.msra.mxu0 0.0
    %2153 = vmatprep.subr.mxu0 0.0
    %2154 = vmatpush2.msra.mxu0 0.0
    %2155 = vmatprep.subr.mxu0 0.0
    %2156 = vmatpush2.msra.mxu0 0.0
    %2157 = vmatprep.mubr.f32.mxu0 0.0
    %2158 = vmatmul.mubr.f32.gmra.mxu0 %v2088
    %v2159 = vpop.f32.mrf.mxu0
    %v2160 = vadd.f32 0.0, %v2159
    %v2161 = vpop.f32.mrf.mxu0
    %2162 = vmatprep.mubr.f32.mxu0 0.0
    %2163 = vmatmul.mubr.f32.gmra.mxu0 %v2091
    %v2164 = vpop.f32.mrf.mxu0
    %v2165 = vadd.f32 0.0, %v2164
    %v2166 = vpop.f32.mrf.mxu0
    %2167 = vdwg.mxu0
    %v2168 = vadd.f32 %v1881, %v2160
    %v2169 = vadd.f32 %v1886, %v2165
    %2170 = vrot.lane.b32.xlu0 %v1325, 104
    %v2171 = vpop.permute.xlu0 %2170
    %2172 = vrot.lane.b32.xlu0 %v1330, 104
    %v2173 = vpop.permute.xlu0 %2172
    %2174 = vrot.lane.b32.xlu0 %v1325, 72
    %v2175 = vpop.permute.xlu0 %2174
    %2176 = vrot.lane.b32.xlu0 %v1330, 72
    %v2177 = vpop.permute.xlu0 %2176
    %v2178 = vsel %vm789, %v2171, 0
    %v2180 = vsel %vm789, %v2173, 0
    %v2182 = vsel %vm789, %v2175, 0
    %v2184 = vsel %vm789, %v2177, 0
    %2186 = vmatprep.subr.mxu0 0.0
    %2187 = vmatpush1.xpose.msra.mxu0 0.0
    %2188 = vmatprep.subr.mxu0 0.0
    %2189 = vmatpush1.xpose.msra.mxu0 0.0
    %2190 = vmatprep.subr.mxu0 0.0
    %2191 = vmatpush1.xpose.msra.mxu0 0.0
    %2192 = vmatprep.subr.mxu0 0.0
    %2193 = vmatpush1.xpose.msra.mxu0 0.0
    %2194 = vmatprep.subr.mxu0 0.0
    %2195 = vmatpush1.xpose.msra.mxu0 0.0
    %2196 = vmatprep.subr.mxu0 0.0
    %2197 = vmatpush1.xpose.msra.mxu0 0.0
    %2198 = vmatprep.subr.mxu0 0.0
    %2199 = vmatpush1.xpose.msra.mxu0 0.0
    %2200 = vmatprep.subr.mxu0 0.0
    %2201 = vmatpush1.xpose.msra.mxu0 0.0
    %2202 = vmatprep.subr.mxu0 0.0
    %2203 = vmatpush1.xpose.msra.mxu0 0.0
    %2204 = vmatprep.subr.mxu0 0.0
    %2205 = vmatpush1.xpose.msra.mxu0 0.0
    %2206 = vmatprep.subr.mxu0 0.0
    %2207 = vmatpush1.xpose.msra.mxu0 0.0
    %2208 = vmatprep.subr.mxu0 0.0
    %2209 = vmatpush1.xpose.msra.mxu0 0.0
    %2210 = vmatprep.subr.mxu0 0.0
    %2211 = vmatpush1.xpose.msra.mxu0 0.0
    %2212 = vmatprep.subr.mxu0 0.0
    %2213 = vmatpush1.xpose.msra.mxu0 0.0
    %2214 = vmatprep.subr.mxu0 0.0
    %2215 = vmatpush1.xpose.msra.mxu0 %v2184
    %2216 = vmatprep.subr.mxu0 0.0
    %2217 = vmatpush1.xpose.msra.mxu0 %v2182
    %2218 = vmatprep.subr.mxu0 0.0
    %2219 = vmatpush2.xpose.msra.mxu0 0.0
    %2220 = vmatprep.subr.mxu0 0.0
    %2221 = vmatpush2.xpose.msra.mxu0 0.0
    %2222 = vmatprep.subr.mxu0 0.0
    %2223 = vmatpush2.xpose.msra.mxu0 0.0
    %2224 = vmatprep.subr.mxu0 0.0
    %2225 = vmatpush2.xpose.msra.mxu0 0.0
    %2226 = vmatprep.subr.mxu0 0.0
    %2227 = vmatpush2.xpose.msra.mxu0 0.0
    %2228 = vmatprep.subr.mxu0 0.0
    %2229 = vmatpush2.xpose.msra.mxu0 0.0
    %2230 = vmatprep.subr.mxu0 0.0
    %2231 = vmatpush2.xpose.msra.mxu0 0.0
    %2232 = vmatprep.subr.mxu0 0.0
    %2233 = vmatpush2.xpose.msra.mxu0 0.0
    %2234 = vmatprep.subr.mxu0 0.0
    %2235 = vmatpush2.xpose.msra.mxu0 0.0
    %2236 = vmatprep.subr.mxu0 0.0
    %2237 = vmatpush2.xpose.msra.mxu0 0.0
    %2238 = vmatprep.subr.mxu0 0.0
    %2239 = vmatpush2.xpose.msra.mxu0 0.0
    %2240 = vmatprep.subr.mxu0 0.0
    %2241 = vmatpush2.xpose.msra.mxu0 0.0
    %2242 = vmatprep.subr.mxu0 0.0
    %2243 = vmatpush2.xpose.msra.mxu0 0.0
    %2244 = vmatprep.subr.mxu0 0.0
    %2245 = vmatpush2.xpose.msra.mxu0 0.0
    %2246 = vmatprep.subr.mxu0 0.0
    %2247 = vmatpush2.xpose.msra.mxu0 0.0
    %2248 = vmatprep.subr.mxu0 0.0
    %2249 = vmatpush2.xpose.msra.mxu0 0.0
    %2250 = vmatprep.mubr.f32.mxu0 0.0
    %2251 = vmatmul.mubr.f32.gmra.mxu0 %v2178
    %v2252 = vpop.f32.mrf.mxu0
    %v2253 = vadd.f32 0.0, %v2252
    %v2254 = vpop.f32.mrf.mxu0
    %2255 = vmatprep.mubr.f32.mxu0 0.0
    %2256 = vmatmul.mubr.f32.gmra.mxu0 %v2180
    %v2257 = vpop.f32.mrf.mxu0
    %v2258 = vadd.f32 0.0, %v2257
    %v2259 = vpop.f32.mrf.mxu0
    %2260 = vdwg.mxu0
    %v2261 = vmul.f32 %v2253, 0.35355338
    %v2262 = vmul.f32 %v2258, 0.35355338
    %v2263 = vmax.f32 %v2261, -5.0
    %v2264 = vmax.f32 %v2262, -5.0
    %v2265 = vmin.f32 %v2263, 5.0
    %v2266 = vmin.f32 %v2264, 5.0
    %v2267 = vmul.f32 %v2265, 1.442695
    %v2268 = vpow.pop %v2267
    %v2269 = vmul.f32 %v2266, 1.442695
    %v2270 = vpow.pop %v2269
    %v2271 = vsel %vm433, %v2268, 0.0
    %2272 = vadd.xlane.f32.xlu0 %v2271
    %v2273 = vpop.xlane.xlu0 %2272
    %v2274 = vsel %vm433, %v2270, 0.0
    %2275 = vadd.xlane.f32.xlu0 %v2274
    %v2276 = vpop.xlane.xlu0 %2275
    %v2277 = vrcp.pop %v2273
    %v2278 = vmul.f32 %v2268, %v2277
    %v2279 = vrcp.pop %v2276
    %v2280 = vmul.f32 %v2270, %v2279
    %2281 = vrot.lane.b32.xlu0 %v1325, 40
    %v2282 = vpop.permute.xlu0 %2281
    %2283 = vrot.lane.b32.xlu0 %v1330, 40
    %v2284 = vpop.permute.xlu0 %2283
    %v2288 = vsel %vm433, %v2278, 0
    %v2291 = vsel %vm433, %v2280, 0
    %2293 = vmatprep.subr.mxu0 0.0
    %2294 = vmatpush1.msra.mxu0 0.0
    %2295 = vmatprep.subr.mxu0 0.0
    %2296 = vmatpush1.msra.mxu0 0.0
    %2297 = vmatprep.subr.mxu0 0.0
    %2298 = vmatpush1.msra.mxu0 0.0
    %2299 = vmatprep.subr.mxu0 0.0
    %2300 = vmatpush1.msra.mxu0 0.0
    %2301 = vmatprep.subr.mxu0 0.0
    %2302 = vmatpush1.msra.mxu0 0.0
    %2303 = vmatprep.subr.mxu0 0.0
    %2304 = vmatpush1.msra.mxu0 0.0
    %2305 = vmatprep.subr.mxu0 0.0
    %2306 = vmatpush1.msra.mxu0 0.0
    %2307 = vmatprep.subr.mxu0 0.0
    %2308 = vmatpush1.msra.mxu0 0.0
    %2309 = vmatprep.subr.mxu0 0.0
    %2310 = vmatpush1.msra.mxu0 0.0
    %2311 = vmatprep.subr.mxu0 0.0
    %2312 = vmatpush1.msra.mxu0 0.0
    %2313 = vmatprep.subr.mxu0 0.0
    %2314 = vmatpush1.msra.mxu0 0.0
    %2315 = vmatprep.subr.mxu0 0.0
    %2316 = vmatpush1.msra.mxu0 0.0
    %2317 = vmatprep.subr.mxu0 0.0
    %2318 = vmatpush1.msra.mxu0 0.0
    %2319 = vmatprep.subr.mxu0 0.0
    %2320 = vmatpush1.msra.mxu0 0.0
    %2321 = vmatprep.subr.mxu0 0.0
    %2322 = vmatpush1.msra.mxu0 %v2284
    %2323 = vmatprep.subr.mxu0 0.0
    %2324 = vmatpush1.msra.mxu0 %v2282
    %2325 = vmatprep.subr.mxu0 0.0
    %2326 = vmatpush2.msra.mxu0 0.0
    %2327 = vmatprep.subr.mxu0 0.0
    %2328 = vmatpush2.msra.mxu0 0.0
    %2329 = vmatprep.subr.mxu0 0.0
    %2330 = vmatpush2.msra.mxu0 0.0
    %2331 = vmatprep.subr.mxu0 0.0
    %2332 = vmatpush2.msra.mxu0 0.0
    %2333 = vmatprep.subr.mxu0 0.0
    %2334 = vmatpush2.msra.mxu0 0.0
    %2335 = vmatprep.subr.mxu0 0.0
    %2336 = vmatpush2.msra.mxu0 0.0
    %2337 = vmatprep.subr.mxu0 0.0
    %2338 = vmatpush2.msra.mxu0 0.0
    %2339 = vmatprep.subr.mxu0 0.0
    %2340 = vmatpush2.msra.mxu0 0.0
    %2341 = vmatprep.subr.mxu0 0.0
    %2342 = vmatpush2.msra.mxu0 0.0
    %2343 = vmatprep.subr.mxu0 0.0
    %2344 = vmatpush2.msra.mxu0 0.0
    %2345 = vmatprep.subr.mxu0 0.0
    %2346 = vmatpush2.msra.mxu0 0.0
    %2347 = vmatprep.subr.mxu0 0.0
    %2348 = vmatpush2.msra.mxu0 0.0
    %2349 = vmatprep.subr.mxu0 0.0
    %2350 = vmatpush2.msra.mxu0 0.0
    %2351 = vmatprep.subr.mxu0 0.0
    %2352 = vmatpush2.msra.mxu0 0.0
    %2353 = vmatprep.subr.mxu0 0.0
    %2354 = vmatpush2.msra.mxu0 0.0
    %2355 = vmatprep.subr.mxu0 0.0
    %2356 = vmatpush2.msra.mxu0 0.0
    %2357 = vmatprep.mubr.f32.mxu0 0.0
    %2358 = vmatmul.mubr.f32.gmra.mxu0 %v2288
    %v2359 = vpop.f32.mrf.mxu0
    %v2360 = vadd.f32 0.0, %v2359
    %v2361 = vpop.f32.mrf.mxu0
    %2362 = vmatprep.mubr.f32.mxu0 0.0
    %2363 = vmatmul.mubr.f32.gmra.mxu0 %v2291
    %v2364 = vpop.f32.mrf.mxu0
    %v2365 = vadd.f32 0.0, %v2364
    %v2366 = vpop.f32.mrf.mxu0
    %2367 = vdwg.mxu0
    %v2369 = vsel %vm789, %v2360, 0
    %v2372 = vsel %vm789, %v2365, 0
    %2374 = vmatprep.subr.mxu0 0.0
    %2375 = vmatpush1.msra.mxu0 0.0
    %2376 = vmatprep.subr.mxu0 0.0
    %2377 = vmatpush1.msra.mxu0 0.0
    %2378 = vmatprep.subr.mxu0 0.0
    %2379 = vmatpush1.msra.mxu0 0.0
    %2380 = vmatprep.subr.mxu0 0.0
    %2381 = vmatpush1.msra.mxu0 0.0
    %2382 = vmatprep.subr.mxu0 0.0
    %2383 = vmatpush1.msra.mxu0 0.0
    %2384 = vmatprep.subr.mxu0 0.0
    %2385 = vmatpush1.msra.mxu0 0.0
    %2386 = vmatprep.subr.mxu0 0.0
    %2387 = vmatpush1.msra.mxu0 0.0
    %2388 = vmatprep.subr.mxu0 0.0
    %2389 = vmatpush1.msra.mxu0 0.0
    %2390 = vmatprep.subr.mxu0 0.0
    %2391 = vmatpush1.msra.mxu0 0.0
    %2392 = vmatprep.subr.mxu0 0.0
    %2393 = vmatpush1.msra.mxu0 0.0
    %2394 = vmatprep.subr.mxu0 0.0
    %2395 = vmatpush1.msra.mxu0 0.0
    %2396 = vmatprep.subr.mxu0 0.0
    %2397 = vmatpush1.msra.mxu0 0.0
    %2398 = vmatprep.subr.mxu0 0.0
    %2399 = vmatpush1.msra.mxu0 0.0
    %2400 = vmatprep.subr.mxu0 0.0
    %2401 = vmatpush1.msra.mxu0 0.0
    %2402 = vmatprep.subr.mxu0 0.0
    %2403 = vmatpush1.msra.mxu0 0.0
    %2404 = vmatprep.subr.mxu0 0.0
    %2405 = vmatpush1.msra.mxu0 %v378
    %2406 = vmatprep.subr.mxu0 0.0
    %2407 = vmatpush2.msra.mxu0 0.0
    %2408 = vmatprep.subr.mxu0 0.0
    %2409 = vmatpush2.msra.mxu0 0.0
    %2410 = vmatprep.subr.mxu0 0.0
    %2411 = vmatpush2.msra.mxu0 0.0
    %2412 = vmatprep.subr.mxu0 0.0
    %2413 = vmatpush2.msra.mxu0 0.0
    %2414 = vmatprep.subr.mxu0 0.0
    %2415 = vmatpush2.msra.mxu0 0.0
    %2416 = vmatprep.subr.mxu0 0.0
    %2417 = vmatpush2.msra.mxu0 0.0
    %2418 = vmatprep.subr.mxu0 0.0
    %2419 = vmatpush2.msra.mxu0 0.0
    %2420 = vmatprep.subr.mxu0 0.0
    %2421 = vmatpush2.msra.mxu0 0.0
    %2422 = vmatprep.subr.mxu0 0.0
    %2423 = vmatpush2.msra.mxu0 0.0
    %2424 = vmatprep.subr.mxu0 0.0
    %2425 = vmatpush2.msra.mxu0 0.0
    %2426 = vmatprep.subr.mxu0 0.0
    %2427 = vmatpush2.msra.mxu0 0.0
    %2428 = vmatprep.subr.mxu0 0.0
    %2429 = vmatpush2.msra.mxu0 0.0
    %2430 = vmatprep.subr.mxu0 0.0
    %2431 = vmatpush2.msra.mxu0 0.0
    %2432 = vmatprep.subr.mxu0 0.0
    %2433 = vmatpush2.msra.mxu0 0.0
    %2434 = vmatprep.subr.mxu0 0.0
    %2435 = vmatpush2.msra.mxu0 0.0
    %2436 = vmatprep.subr.mxu0 0.0
    %2437 = vmatpush2.msra.mxu0 0.0
    %2438 = vmatprep.mubr.f32.mxu0 0.0
    %2439 = vmatmul.mubr.f32.gmra.mxu0 %v2369
    %v2440 = vpop.f32.mrf.mxu0
    %v2441 = vadd.f32 0.0, %v2440
    %v2442 = vpop.f32.mrf.mxu0
    %2443 = vmatprep.mubr.f32.mxu0 0.0
    %2444 = vmatmul.mubr.f32.gmra.mxu0 %v2372
    %v2445 = vpop.f32.mrf.mxu0
    %v2446 = vadd.f32 0.0, %v2445
    %v2447 = vpop.f32.mrf.mxu0
    %2448 = vdwg.mxu0
    %v2449 = vadd.f32 %v2168, %v2441
    %v2450 = vadd.f32 %v2169, %v2446
    %v2452 = vlaneseq
    %v2453 = vshrl.u32 %v2452, 7
    %v2454 = vsub.s32 0, %v2453
    %v2455 = vrot.slane %v374, %v2454
    %v2457 = vadd.f32 %v2449, %v2455
    %v2458 = vadd.f32 %v2450, %v2455
    %v2459 = vadd.f32 %v1244, %v2457
    %v2460 = vadd.f32 %v1245, %v2458
    %v2461 = vsel %vm523, %v2459, 0.0
    %2462 = vadd.xlane.f32.xlu0 %v2461
    %v2463 = vpop.xlane.xlu0 %2462
    %v2464 = vsel %vm523, %v2460, 0.0
    %2465 = vadd.xlane.f32.xlu0 %v2464
    %v2466 = vpop.xlane.xlu0 %2465
    %v2467 = vrcp.pop 32.0
    %v2468 = vmul.f32 %v2463, %v2467
    %v2469 = vmul.f32 %v2466, %v2467
    %v2470 = vsub.f32 %v2459, %v2468
    %v2471 = vsub.f32 %v2460, %v2469
    %v2472 = vmul.f32 %v2470, %v2470
    %v2473 = vmul.f32 %v2471, %v2471
    %v2474 = vsel %vm523, %v2472, 0.0
    %2475 = vadd.xlane.f32.xlu0 %v2474
    %v2476 = vpop.xlane.xlu0 %2475
    %v2477 = vsel %vm523, %v2473, 0.0
    %2478 = vadd.xlane.f32.xlu0 %v2477
    %v2479 = vpop.xlane.xlu0 %2478
    %v2480 = vmul.f32 %v2476, %v2467
    %v2481 = vmul.f32 %v2479, %v2467
    %v2482 = vadd.f32 %v2480, 1e-05
    %v2483 = vadd.f32 %v2481, 1e-05
    %v2484 = vrsqrt.pop %v2482
    %v2485 = vrsqrt.pop %v2483
    %v2486 = vmul.f32 %v2470, %v2484
    %v2487 = vmul.f32 %v2471, %v2485
    %v2489 = vlaneseq
    %v2490 = vshrl.u32 %v2489, 7
    %v2491 = vsub.s32 0, %v2490
    %v2492 = vrot.slane %v371, %v2491
    %v2494 = vmul.f32 %v2486, %v2492
    %v2495 = vmul.f32 %v2487, %v2492
    %v2497 = vlaneseq
    %v2498 = vshrl.u32 %v2497, 7
    %v2499 = vsub.s32 0, %v2498
    %v2500 = vrot.slane %v370, %v2499
    %v2502 = vadd.f32 %v2494, %v2500
    %v2503 = vadd.f32 %v2495, %v2500
    %v2505 = vlaneseq
    %v2506 = vshrl.u32 %v2505, 7
    %v2507 = vsub.s32 0, %v2506
    %v2508 = vrot.slane %v356, %v2507
    %v2511 = vsel %vm523, %v2502, 0
    %v2514 = vsel %vm523, %v2503, 0
    %2516 = vmatprep.subr.mxu0 0.0
    %2517 = vmatpush1.msra.mxu0 0.0
    %2518 = vmatprep.subr.mxu0 0.0
    %2519 = vmatpush1.msra.mxu0 0.0
    %2520 = vmatprep.subr.mxu0 0.0
    %2521 = vmatpush1.msra.mxu0 0.0
    %2522 = vmatprep.subr.mxu0 0.0
    %2523 = vmatpush1.msra.mxu0 0.0
    %2524 = vmatprep.subr.mxu0 0.0
    %2525 = vmatpush1.msra.mxu0 0.0
    %2526 = vmatprep.subr.mxu0 0.0
    %2527 = vmatpush1.msra.mxu0 0.0
    %2528 = vmatprep.subr.mxu0 0.0
    %2529 = vmatpush1.msra.mxu0 0.0
    %2530 = vmatprep.subr.mxu0 0.0
    %2531 = vmatpush1.msra.mxu0 0.0
    %2532 = vmatprep.subr.mxu0 0.0
    %2533 = vmatpush1.msra.mxu0 0.0
    %2534 = vmatprep.subr.mxu0 0.0
    %2535 = vmatpush1.msra.mxu0 0.0
    %2536 = vmatprep.subr.mxu0 0.0
    %2537 = vmatpush1.msra.mxu0 0.0
    %2538 = vmatprep.subr.mxu0 0.0
    %2539 = vmatpush1.msra.mxu0 0.0
    %2540 = vmatprep.subr.mxu0 0.0
    %2541 = vmatpush1.msra.mxu0 %v360
    %2542 = vmatprep.subr.mxu0 0.0
    %2543 = vmatpush1.msra.mxu0 %v359
    %2544 = vmatprep.subr.mxu0 0.0
    %2545 = vmatpush1.msra.mxu0 %v358
    %2546 = vmatprep.subr.mxu0 0.0
    %2547 = vmatpush1.msra.mxu0 %v357
    %2548 = vmatprep.subr.mxu0 0.0
    %2549 = vmatpush2.msra.mxu0 0.0
    %2550 = vmatprep.subr.mxu0 0.0
    %2551 = vmatpush2.msra.mxu0 0.0
    %2552 = vmatprep.subr.mxu0 0.0
    %2553 = vmatpush2.msra.mxu0 0.0
    %2554 = vmatprep.subr.mxu0 0.0
    %2555 = vmatpush2.msra.mxu0 0.0
    %2556 = vmatprep.subr.mxu0 0.0
    %2557 = vmatpush2.msra.mxu0 0.0
    %2558 = vmatprep.subr.mxu0 0.0
    %2559 = vmatpush2.msra.mxu0 0.0
    %2560 = vmatprep.subr.mxu0 0.0
    %2561 = vmatpush2.msra.mxu0 0.0
    %2562 = vmatprep.subr.mxu0 0.0
    %2563 = vmatpush2.msra.mxu0 0.0
    %2564 = vmatprep.subr.mxu0 0.0
    %2565 = vmatpush2.msra.mxu0 0.0
    %2566 = vmatprep.subr.mxu0 0.0
    %2567 = vmatpush2.msra.mxu0 0.0
    %2568 = vmatprep.subr.mxu0 0.0
    %2569 = vmatpush2.msra.mxu0 0.0
    %2570 = vmatprep.subr.mxu0 0.0
    %2571 = vmatpush2.msra.mxu0 0.0
    %2572 = vmatprep.subr.mxu0 0.0
    %2573 = vmatpush2.msra.mxu0 0.0
    %2574 = vmatprep.subr.mxu0 0.0
    %2575 = vmatpush2.msra.mxu0 0.0
    %2576 = vmatprep.subr.mxu0 0.0
    %2577 = vmatpush2.msra.mxu0 0.0
    %2578 = vmatprep.subr.mxu0 0.0
    %2579 = vmatpush2.msra.mxu0 0.0
    %2580 = vmatprep.mubr.f32.mxu0 0.0
    %2581 = vmatmul.mubr.f32.gmra.mxu0 %v2511
    %v2582 = vpop.f32.mrf.mxu0
    %v2583 = vadd.f32 %v2508, %v2582
    %v2584 = vpop.f32.mrf.mxu0
    %2585 = vmatprep.mubr.f32.mxu0 0.0
    %2586 = vmatmul.mubr.f32.gmra.mxu0 %v2514
    %v2587 = vpop.f32.mrf.mxu0
    %v2588 = vadd.f32 %v2508, %v2587
    %v2589 = vpop.f32.mrf.mxu0
    %2590 = vdwg.mxu0
    %v2591 = vmax.f32 %v2583, 0.0
    %v2592 = vmax.f32 %v2588, 0.0
    %v2594 = vlaneseq
    %v2595 = vshrl.u32 %v2594, 7
    %v2596 = vsub.s32 0, %v2595
    %v2597 = vrot.slane %v361, %v2596
    %vm2599 = vcmask 523264
    %v2601 = vsel %vm2599, %v2591, 0
    %v2604 = vsel %vm2599, %v2592, 0
    %2606 = vmatprep.subr.mxu0 0.0
    %2607 = vmatpush1.msra.mxu0 0.0
    %2608 = vmatprep.subr.mxu0 0.0
    %2609 = vmatpush1.msra.mxu0 0.0
    %2610 = vmatprep.subr.mxu0 0.0
    %2611 = vmatpush1.msra.mxu0 0.0
    %2612 = vmatprep.subr.mxu0 0.0
    %2613 = vmatpush1.msra.mxu0 0.0
    %2614 = vmatprep.subr.mxu0 0.0
    %2615 = vmatpush1.msra.mxu0 0.0
    %2616 = vmatprep.subr.mxu0 0.0
    %2617 = vmatpush1.msra.mxu0 0.0
    %2618 = vmatprep.subr.mxu0 0.0
    %2619 = vmatpush1.msra.mxu0 0.0
    %2620 = vmatprep.subr.mxu0 0.0
    %2621 = vmatpush1.msra.mxu0 0.0
    %2622 = vmatprep.subr.mxu0 0.0
    %2623 = vmatpush1.msra.mxu0 %v369
    %2624 = vmatprep.subr.mxu0 0.0
    %2625 = vmatpush1.msra.mxu0 %v368
    %2626 = vmatprep.subr.mxu0 0.0
    %2627 = vmatpush1.msra.mxu0 %v367
    %2628 = vmatprep.subr.mxu0 0.0
    %2629 = vmatpush1.msra.mxu0 %v366
    %2630 = vmatprep.subr.mxu0 0.0
    %2631 = vmatpush1.msra.mxu0 %v365
    %2632 = vmatprep.subr.mxu0 0.0
    %2633 = vmatpush1.msra.mxu0 %v364
    %2634 = vmatprep.subr.mxu0 0.0
    %2635 = vmatpush1.msra.mxu0 %v363
    %2636 = vmatprep.subr.mxu0 0.0
    %2637 = vmatpush1.msra.mxu0 %v362
    %2638 = vmatprep.subr.mxu0 0.0
    %2639 = vmatpush2.msra.mxu0 0.0
    %2640 = vmatprep.subr.mxu0 0.0
    %2641 = vmatpush2.msra.mxu0 0.0
    %2642 = vmatprep.subr.mxu0 0.0
    %2643 = vmatpush2.msra.mxu0 0.0
    %2644 = vmatprep.subr.mxu0 0.0
    %2645 = vmatpush2.msra.mxu0 0.0
    %2646 = vmatprep.subr.mxu0 0.0
    %2647 = vmatpush2.msra.mxu0 0.0
    %2648 = vmatprep.subr.mxu0 0.0
    %2649 = vmatpush2.msra.mxu0 0.0
    %2650 = vmatprep.subr.mxu0 0.0
    %2651 = vmatpush2.msra.mxu0 0.0
    %2652 = vmatprep.subr.mxu0 0.0
    %2653 = vmatpush2.msra.mxu0 0.0
    %2654 = vmatprep.subr.mxu0 0.0
    %2655 = vmatpush2.msra.mxu0 0.0
    %2656 = vmatprep.subr.mxu0 0.0
    %2657 = vmatpush2.msra.mxu0 0.0
    %2658 = vmatprep.subr.mxu0 0.0
    %2659 = vmatpush2.msra.mxu0 0.0
    %2660 = vmatprep.subr.mxu0 0.0
    %2661 = vmatpush2.msra.mxu0 0.0
    %2662 = vmatprep.subr.mxu0 0.0
    %2663 = vmatpush2.msra.mxu0 0.0
    %2664 = vmatprep.subr.mxu0 0.0
    %2665 = vmatpush2.msra.mxu0 0.0
    %2666 = vmatprep.subr.mxu0 0.0
    %2667 = vmatpush2.msra.mxu0 0.0
    %2668 = vmatprep.subr.mxu0 0.0
    %2669 = vmatpush2.msra.mxu0 0.0
    %2670 = vmatprep.mubr.f32.mxu0 0.0
    %2671 = vmatmul.mubr.f32.gmra.mxu0 %v2601
    %v2672 = vpop.f32.mrf.mxu0
    %v2673 = vadd.f32 %v2597, %v2672
    %v2674 = vpop.f32.mrf.mxu0
    %2675 = vmatprep.mubr.f32.mxu0 0.0
    %2676 = vmatmul.mubr.f32.gmra.mxu0 %v2604
    %v2677 = vpop.f32.mrf.mxu0
    %v2678 = vadd.f32 %v2597, %v2677
    %v2679 = vpop.f32.mrf.mxu0
    %2680 = vdwg.mxu0
    %v2681 = vadd.f32 %v2502, %v2673
    %v2682 = vadd.f32 %v2503, %v2678
    %v2683 = vsel %vm523, %v2681, 0.0
    %2684 = vadd.xlane.f32.xlu0 %v2683
    %v2685 = vpop.xlane.xlu0 %2684
    %v2686 = vsel %vm523, %v2682, 0.0
    %2687 = vadd.xlane.f32.xlu0 %v2686
    %v2688 = vpop.xlane.xlu0 %2687
    %v2689 = vmul.f32 %v2685, %v2467
    %v2690 = vmul.f32 %v2688, %v2467
    %v2691 = vsub.f32 %v2681, %v2689
    %v2692 = vsub.f32 %v2682, %v2690
    %v2693 = vmul.f32 %v2691, %v2691
    %v2694 = vmul.f32 %v2692, %v2692
    %v2695 = vsel %vm523, %v2693, 0.0
    %2696 = vadd.xlane.f32.xlu0 %v2695
    %v2697 = vpop.xlane.xlu0 %2696
    %v2698 = vsel %vm523, %v2694, 0.0
    %2699 = vadd.xlane.f32.xlu0 %v2698
    %v2700 = vpop.xlane.xlu0 %2699
    %v2701 = vmul.f32 %v2697, %v2467
    %v2702 = vmul.f32 %v2700, %v2467
    %v2703 = vadd.f32 %v2701, 1e-05
    %v2704 = vadd.f32 %v2702, 1e-05
    %v2705 = vrsqrt.pop %v2703
    %v2706 = vrsqrt.pop %v2704
    %v2707 = vmul.f32 %v2691, %v2705
    %v2708 = vmul.f32 %v2692, %v2706
    %v2710 = vlaneseq
    %v2711 = vshrl.u32 %v2710, 7
    %v2712 = vsub.s32 0, %v2711
    %v2713 = vrot.slane %v373, %v2712
    %v2715 = vmul.f32 %v2707, %v2713
    %v2716 = vmul.f32 %v2708, %v2713
    %v2718 = vlaneseq
    %v2719 = vshrl.u32 %v2718, 7
    %v2720 = vsub.s32 0, %v2719
    %v2721 = vrot.slane %v372, %v2720
    %v2723 = vadd.f32 %v2715, %v2721
    %v2724 = vadd.f32 %v2716, %v2721
    %v2726 = vlaneseq
    %v2727 = vshrl.u32 %v2726, 7
    %v2728 = vsub.s32 0, %v2727
    %v2729 = vrot.slane %v383, %v2728
    %v2732 = vsel %vm523, %v2723, 0
    %v2735 = vsel %vm523, %v2724, 0
    %2737 = vmatprep.subr.mxu0 0.0
    %2738 = vmatpush1.msra.mxu0 0.0
    %2739 = vmatprep.subr.mxu0 0.0
    %2740 = vmatpush1.msra.mxu0 0.0
    %2741 = vmatprep.subr.mxu0 0.0
    %2742 = vmatpush1.msra.mxu0 0.0
    %2743 = vmatprep.subr.mxu0 0.0
    %2744 = vmatpush1.msra.mxu0 0.0
    %2745 = vmatprep.subr.mxu0 0.0
    %2746 = vmatpush1.msra.mxu0 0.0
    %2747 = vmatprep.subr.mxu0 0.0
    %2748 = vmatpush1.msra.mxu0 0.0
    %2749 = vmatprep.subr.mxu0 0.0
    %2750 = vmatpush1.msra.mxu0 0.0
    %2751 = vmatprep.subr.mxu0 0.0
    %2752 = vmatpush1.msra.mxu0 0.0
    %2753 = vmatprep.subr.mxu0 0.0
    %2754 = vmatpush1.msra.mxu0 0.0
    %2755 = vmatprep.subr.mxu0 0.0
    %2756 = vmatpush1.msra.mxu0 0.0
    %2757 = vmatprep.subr.mxu0 0.0
    %2758 = vmatpush1.msra.mxu0 0.0
    %2759 = vmatprep.subr.mxu0 0.0
    %2760 = vmatpush1.msra.mxu0 0.0
    %2761 = vmatprep.subr.mxu0 0.0
    %2762 = vmatpush1.msra.mxu0 %v410
    %2763 = vmatprep.subr.mxu0 0.0
    %2764 = vmatpush1.msra.mxu0 %v409
    %2765 = vmatprep.subr.mxu0 0.0
    %2766 = vmatpush1.msra.mxu0 %v408
    %2767 = vmatprep.subr.mxu0 0.0
    %2768 = vmatpush1.msra.mxu0 %v407
    %2769 = vmatprep.subr.mxu0 0.0
    %2770 = vmatpush2.msra.mxu0 0.0
    %2771 = vmatprep.subr.mxu0 0.0
    %2772 = vmatpush2.msra.mxu0 0.0
    %2773 = vmatprep.subr.mxu0 0.0
    %2774 = vmatpush2.msra.mxu0 0.0
    %2775 = vmatprep.subr.mxu0 0.0
    %2776 = vmatpush2.msra.mxu0 0.0
    %2777 = vmatprep.subr.mxu0 0.0
    %2778 = vmatpush2.msra.mxu0 0.0
    %2779 = vmatprep.subr.mxu0 0.0
    %2780 = vmatpush2.msra.mxu0 0.0
    %2781 = vmatprep.subr.mxu0 0.0
    %2782 = vmatpush2.msra.mxu0 0.0
    %2783 = vmatprep.subr.mxu0 0.0
    %2784 = vmatpush2.msra.mxu0 0.0
    %2785 = vmatprep.subr.mxu0 0.0
    %2786 = vmatpush2.msra.mxu0 0.0
    %2787 = vmatprep.subr.mxu0 0.0
    %2788 = vmatpush2.msra.mxu0 0.0
    %2789 = vmatprep.subr.mxu0 0.0
    %2790 = vmatpush2.msra.mxu0 0.0
    %2791 = vmatprep.subr.mxu0 0.0
    %2792 = vmatpush2.msra.mxu0 0.0
    %2793 = vmatprep.subr.mxu0 0.0
    %2794 = vmatpush2.msra.mxu0 0.0
    %2795 = vmatprep.subr.mxu0 0.0
    %2796 = vmatpush2.msra.mxu0 0.0
    %2797 = vmatprep.subr.mxu0 0.0
    %2798 = vmatpush2.msra.mxu0 0.0
    %2799 = vmatprep.subr.mxu0 0.0
    %2800 = vmatpush2.msra.mxu0 0.0
    %2801 = vmatprep.mubr.f32.mxu0 0.0
    %2802 = vmatmul.mubr.f32.gmra.mxu0 %v2732
    %v2803 = vpop.f32.mrf.mxu0
    %v2804 = vadd.f32 %v2729, %v2803
    %v2805 = vpop.f32.mrf.mxu0
    %2806 = vmatprep.mubr.f32.mxu0 0.0
    %2807 = vmatmul.mubr.f32.gmra.mxu0 %v2735
    %v2808 = vpop.f32.mrf.mxu0
    %v2809 = vadd.f32 %v2729, %v2808
    %v2810 = vpop.f32.mrf.mxu0
    %2811 = vdwg.mxu0
    %2814 = vrot.lane.b32.xlu0 %v2804, 96
    %v2815 = vpop.permute.xlu0 %2814
    %2816 = vrot.lane.b32.xlu0 %v2809, 96
    %v2817 = vpop.permute.xlu0 %2816
    %v2818 = vsel %vm789, %v2804, 0
    %v2820 = vsel %vm789, %v2809, 0
    %v2822 = vsel %vm789, %v2815, 0
    %v2824 = vsel %vm789, %v2817, 0
    %2826 = vmatprep.subr.mxu0 0.0
    %2827 = vmatpush1.xpose.msra.mxu0 0.0
    %2828 = vmatprep.subr.mxu0 0.0
    %2829 = vmatpush1.xpose.msra.mxu0 0.0
    %2830 = vmatprep.subr.mxu0 0.0
    %2831 = vmatpush1.xpose.msra.mxu0 0.0
    %2832 = vmatprep.subr.mxu0 0.0
    %2833 = vmatpush1.xpose.msra.mxu0 0.0
    %2834 = vmatprep.subr.mxu0 0.0
    %2835 = vmatpush1.xpose.msra.mxu0 0.0
    %2836 = vmatprep.subr.mxu0 0.0
    %2837 = vmatpush1.xpose.msra.mxu0 0.0
    %2838 = vmatprep.subr.mxu0 0.0
    %2839 = vmatpush1.xpose.msra.mxu0 0.0
    %2840 = vmatprep.subr.mxu0 0.0
    %2841 = vmatpush1.xpose.msra.mxu0 0.0
    %2842 = vmatprep.subr.mxu0 0.0
    %2843 = vmatpush1.xpose.msra.mxu0 0.0
    %2844 = vmatprep.subr.mxu0 0.0
    %2845 = vmatpush1.xpose.msra.mxu0 0.0
    %2846 = vmatprep.subr.mxu0 0.0
    %2847 = vmatpush1.xpose.msra.mxu0 0.0
    %2848 = vmatprep.subr.mxu0 0.0
    %2849 = vmatpush1.xpose.msra.mxu0 0.0
    %2850 = vmatprep.subr.mxu0 0.0
    %2851 = vmatpush1.xpose.msra.mxu0 0.0
    %2852 = vmatprep.subr.mxu0 0.0
    %2853 = vmatpush1.xpose.msra.mxu0 0.0
    %2854 = vmatprep.subr.mxu0 0.0
    %2855 = vmatpush1.xpose.msra.mxu0 %v2824
    %2856 = vmatprep.subr.mxu0 0.0
    %2857 = vmatpush1.xpose.msra.mxu0 %v2822
    %2858 = vmatprep.subr.mxu0 0.0
    %2859 = vmatpush2.xpose.msra.mxu0 0.0
    %2860 = vmatprep.subr.mxu0 0.0
    %2861 = vmatpush2.xpose.msra.mxu0 0.0
    %2862 = vmatprep.subr.mxu0 0.0
    %2863 = vmatpush2.xpose.msra.mxu0 0.0
    %2864 = vmatprep.subr.mxu0 0.0
    %2865 = vmatpush2.xpose.msra.mxu0 0.0
    %2866 = vmatprep.subr.mxu0 0.0
    %2867 = vmatpush2.xpose.msra.mxu0 0.0
    %2868 = vmatprep.subr.mxu0 0.0
    %2869 = vmatpush2.xpose.msra.mxu0 0.0
    %2870 = vmatprep.subr.mxu0 0.0
    %2871 = vmatpush2.xpose.msra.mxu0 0.0
    %2872 = vmatprep.subr.mxu0 0.0
    %2873 = vmatpush2.xpose.msra.mxu0 0.0
    %2874 = vmatprep.subr.mxu0 0.0
    %2875 = vmatpush2.xpose.msra.mxu0 0.0
    %2876 = vmatprep.subr.mxu0 0.0
    %2877 = vmatpush2.xpose.msra.mxu0 0.0
    %2878 = vmatprep.subr.mxu0 0.0
    %2879 = vmatpush2.xpose.msra.mxu0 0.0
    %2880 = vmatprep.subr.mxu0 0.0
    %2881 = vmatpush2.xpose.msra.mxu0 0.0
    %2882 = vmatprep.subr.mxu0 0.0
    %2883 = vmatpush2.xpose.msra.mxu0 0.0
    %2884 = vmatprep.subr.mxu0 0.0
    %2885 = vmatpush2.xpose.msra.mxu0 0.0
    %2886 = vmatprep.subr.mxu0 0.0
    %2887 = vmatpush2.xpose.msra.mxu0 0.0
    %2888 = vmatprep.subr.mxu0 0.0
    %2889 = vmatpush2.xpose.msra.mxu0 0.0
    %2890 = vmatprep.mubr.f32.mxu0 0.0
    %2891 = vmatmul.mubr.f32.gmra.mxu0 %v2818
    %v2892 = vpop.f32.mrf.mxu0
    %v2893 = vadd.f32 0.0, %v2892
    %v2894 = vpop.f32.mrf.mxu0
    %2895 = vmatprep.mubr.f32.mxu0 0.0
    %2896 = vmatmul.mubr.f32.gmra.mxu0 %v2820
    %v2897 = vpop.f32.mrf.mxu0
    %v2898 = vadd.f32 0.0, %v2897
    %v2899 = vpop.f32.mrf.mxu0
    %2900 = vdwg.mxu0
    %v2901 = vmul.f32 %v2893, 0.35355338
    %v2902 = vmul.f32 %v2898, 0.35355338
    %v2903 = vmax.f32 %v2901, -5.0
    %v2904 = vmax.f32 %v2902, -5.0
    %v2905 = vmin.f32 %v2903, 5.0
    %v2906 = vmin.f32 %v2904, 5.0
    %v2907 = vmul.f32 %v2905, 1.442695
    %v2908 = vpow.pop %v2907
    %v2909 = vmul.f32 %v2906, 1.442695
    %v2910 = vpow.pop %v2909
    %v2911 = vsel %vm433, %v2908, 0.0
    %2912 = vadd.xlane.f32.xlu0 %v2911
    %v2913 = vpop.xlane.xlu0 %2912
    %v2914 = vsel %vm433, %v2910, 0.0
    %2915 = vadd.xlane.f32.xlu0 %v2914
    %v2916 = vpop.xlane.xlu0 %2915
    %v2917 = vrcp.pop %v2913
    %v2918 = vmul.f32 %v2908, %v2917
    %v2919 = vrcp.pop %v2916
    %v2920 = vmul.f32 %v2910, %v2919
    %2921 = vrot.lane.b32.xlu0 %v2804, 64
    %v2922 = vpop.permute.xlu0 %2921
    %2923 = vrot.lane.b32.xlu0 %v2809, 64
    %v2924 = vpop.permute.xlu0 %2923
    %v2928 = vsel %vm433, %v2918, 0
    %v2931 = vsel %vm433, %v2920, 0
    %2933 = vmatprep.subr.mxu0 0.0
    %2934 = vmatpush1.msra.mxu0 0.0
    %2935 = vmatprep.subr.mxu0 0.0
    %2936 = vmatpush1.msra.mxu0 0.0
    %2937 = vmatprep.subr.mxu0 0.0
    %2938 = vmatpush1.msra.mxu0 0.0
    %2939 = vmatprep.subr.mxu0 0.0
    %2940 = vmatpush1.msra.mxu0 0.0
    %2941 = vmatprep.subr.mxu0 0.0
    %2942 = vmatpush1.msra.mxu0 0.0
    %2943 = vmatprep.subr.mxu0 0.0
    %2944 = vmatpush1.msra.mxu0 0.0
    %2945 = vmatprep.subr.mxu0 0.0
    %2946 = vmatpush1.msra.mxu0 0.0
    %2947 = vmatprep.subr.mxu0 0.0
    %2948 = vmatpush1.msra.mxu0 0.0
    %2949 = vmatprep.subr.mxu0 0.0
    %2950 = vmatpush1.msra.mxu0 0.0
    %2951 = vmatprep.subr.mxu0 0.0
    %2952 = vmatpush1.msra.mxu0 0.0
    %2953 = vmatprep.subr.mxu0 0.0
    %2954 = vmatpush1.msra.mxu0 0.0
    %2955 = vmatprep.subr.mxu0 0.0
    %2956 = vmatpush1.msra.mxu0 0.0
    %2957 = vmatprep.subr.mxu0 0.0
    %2958 = vmatpush1.msra.mxu0 0.0
    %2959 = vmatprep.subr.mxu0 0.0
    %2960 = vmatpush1.msra.mxu0 0.0
    %2961 = vmatprep.subr.mxu0 0.0
    %2962 = vmatpush1.msra.mxu0 %v2924
    %2963 = vmatprep.subr.mxu0 0.0
    %2964 = vmatpush1.msra.mxu0 %v2922
    %2965 = vmatprep.subr.mxu0 0.0
    %2966 = vmatpush2.msra.mxu0 0.0
    %2967 = vmatprep.subr.mxu0 0.0
    %2968 = vmatpush2.msra.mxu0 0.0
    %2969 = vmatprep.subr.mxu0 0.0
    %2970 = vmatpush2.msra.mxu0 0.0
    %2971 = vmatprep.subr.mxu0 0.0
    %2972 = vmatpush2.msra.mxu0 0.0
    %2973 = vmatprep.subr.mxu0 0.0
    %2974 = vmatpush2.msra.mxu0 0.0
    %2975 = vmatprep.subr.mxu0 0.0
    %2976 = vmatpush2.msra.mxu0 0.0
    %2977 = vmatprep.subr.mxu0 0.0
    %2978 = vmatpush2.msra.mxu0 0.0
    %2979 = vmatprep.subr.mxu0 0.0
    %2980 = vmatpush2.msra.mxu0 0.0
    %2981 = vmatprep.subr.mxu0 0.0
    %2982 = vmatpush2.msra.mxu0 0.0
    %2983 = vmatprep.subr.mxu0 0.0
    %2984 = vmatpush2.msra.mxu0 0.0
    %2985 = vmatprep.subr.mxu0 0.0
    %2986 = vmatpush2.msra.mxu0 0.0
    %2987 = vmatprep.subr.mxu0 0.0
    %2988 = vmatpush2.msra.mxu0 0.0
    %2989 = vmatprep.subr.mxu0 0.0
    %2990 = vmatpush2.msra.mxu0 0.0
    %2991 = vmatprep.subr.mxu0 0.0
    %2992 = vmatpush2.msra.mxu0 0.0
    %2993 = vmatprep.subr.mxu0 0.0
    %2994 = vmatpush2.msra.mxu0 0.0
    %2995 = vmatprep.subr.mxu0 0.0
    %2996 = vmatpush2.msra.mxu0 0.0
    %2997 = vmatprep.mubr.f32.mxu0 0.0
    %2998 = vmatmul.mubr.f32.gmra.mxu0 %v2928
    %v2999 = vpop.f32.mrf.mxu0
    %v3000 = vadd.f32 0.0, %v2999
    %v3001 = vpop.f32.mrf.mxu0
    %3002 = vmatprep.mubr.f32.mxu0 0.0
    %3003 = vmatmul.mubr.f32.gmra.mxu0 %v2931
    %v3004 = vpop.f32.mrf.mxu0
    %v3005 = vadd.f32 0.0, %v3004
    %v3006 = vpop.f32.mrf.mxu0
    %3007 = vdwg.mxu0
    %3008 = vrot.lane.b32.xlu0 %v2804, 120
    %v3009 = vpop.permute.xlu0 %3008
    %3010 = vrot.lane.b32.xlu0 %v2809, 120
    %v3011 = vpop.permute.xlu0 %3010
    %3012 = vrot.lane.b32.xlu0 %v2804, 88
    %v3013 = vpop.permute.xlu0 %3012
    %3014 = vrot.lane.b32.xlu0 %v2809, 88
    %v3015 = vpop.permute.xlu0 %3014
    %v3016 = vsel %vm789, %v3009, 0
    %v3018 = vsel %vm789, %v3011, 0
    %v3020 = vsel %vm789, %v3013, 0
    %v3022 = vsel %vm789, %v3015, 0
    %3024 = vmatprep.subr.mxu0 0.0
    %3025 = vmatpush1.xpose.msra.mxu0 0.0
    %3026 = vmatprep.subr.mxu0 0.0
    %3027 = vmatpush1.xpose.msra.mxu0 0.0
    %3028 = vmatprep.subr.mxu0 0.0
    %3029 = vmatpush1.xpose.msra.mxu0 0.0
    %3030 = vmatprep.subr.mxu0 0.0
    %3031 = vmatpush1.xpose.msra.mxu0 0.0
    %3032 = vmatprep.subr.mxu0 0.0
    %3033 = vmatpush1.xpose.msra.mxu0 0.0
    %3034 = vmatprep.subr.mxu0 0.0
    %3035 = vmatpush1.xpose.msra.mxu0 0.0
    %3036 = vmatprep.subr.mxu0 0.0
    %3037 = vmatpush1.xpose.msra.mxu0 0.0
    %3038 = vmatprep.subr.mxu0 0.0
    %3039 = vmatpush1.xpose.msra.mxu0 0.0
    %3040 = vmatprep.subr.mxu0 0.0
    %3041 = vmatpush1.xpose.msra.mxu0 0.0
    %3042 = vmatprep.subr.mxu0 0.0
    %3043 = vmatpush1.xpose.msra.mxu0 0.0
    %3044 = vmatprep.subr.mxu0 0.0
    %3045 = vmatpush1.xpose.msra.mxu0 0.0
    %3046 = vmatprep.subr.mxu0 0.0
    %3047 = vmatpush1.xpose.msra.mxu0 0.0
    %3048 = vmatprep.subr.mxu0 0.0
    %3049 = vmatpush1.xpose.msra.mxu0 0.0
    %3050 = vmatprep.subr.mxu0 0.0
    %3051 = vmatpush1.xpose.msra.mxu0 0.0
    %3052 = vmatprep.subr.mxu0 0.0
    %3053 = vmatpush1.xpose.msra.mxu0 %v3022
    %3054 = vmatprep.subr.mxu0 0.0
    %3055 = vmatpush1.xpose.msra.mxu0 %v3020
    %3056 = vmatprep.subr.mxu0 0.0
    %3057 = vmatpush2.xpose.msra.mxu0 0.0
    %3058 = vmatprep.subr.mxu0 0.0
    %3059 = vmatpush2.xpose.msra.mxu0 0.0
    %3060 = vmatprep.subr.mxu0 0.0
    %3061 = vmatpush2.xpose.msra.mxu0 0.0
    %3062 = vmatprep.subr.mxu0 0.0
    %3063 = vmatpush2.xpose.msra.mxu0 0.0
    %3064 = vmatprep.subr.mxu0 0.0
    %3065 = vmatpush2.xpose.msra.mxu0 0.0
    %3066 = vmatprep.subr.mxu0 0.0
    %3067 = vmatpush2.xpose.msra.mxu0 0.0
    %3068 = vmatprep.subr.mxu0 0.0
    %3069 = vmatpush2.xpose.msra.mxu0 0.0
    %3070 = vmatprep.subr.mxu0 0.0
    %3071 = vmatpush2.xpose.msra.mxu0 0.0
    %3072 = vmatprep.subr.mxu0 0.0
    %3073 = vmatpush2.xpose.msra.mxu0 0.0
    %3074 = vmatprep.subr.mxu0 0.0
    %3075 = vmatpush2.xpose.msra.mxu0 0.0
    %3076 = vmatprep.subr.mxu0 0.0
    %3077 = vmatpush2.xpose.msra.mxu0 0.0
    %3078 = vmatprep.subr.mxu0 0.0
    %3079 = vmatpush2.xpose.msra.mxu0 0.0
    %3080 = vmatprep.subr.mxu0 0.0
    %3081 = vmatpush2.xpose.msra.mxu0 0.0
    %3082 = vmatprep.subr.mxu0 0.0
    %3083 = vmatpush2.xpose.msra.mxu0 0.0
    %3084 = vmatprep.subr.mxu0 0.0
    %3085 = vmatpush2.xpose.msra.mxu0 0.0
    %3086 = vmatprep.subr.mxu0 0.0
    %3087 = vmatpush2.xpose.msra.mxu0 0.0
    %3088 = vmatprep.mubr.f32.mxu0 0.0
    %3089 = vmatmul.mubr.f32.gmra.mxu0 %v3016
    %v3090 = vpop.f32.mrf.mxu0
    %v3091 = vadd.f32 0.0, %v3090
    %v3092 = vpop.f32.mrf.mxu0
    %3093 = vmatprep.mubr.f32.mxu0 0.0
    %3094 = vmatmul.mubr.f32.gmra.mxu0 %v3018
    %v3095 = vpop.f32.mrf.mxu0
    %v3096 = vadd.f32 0.0, %v3095
    %v3097 = vpop.f32.mrf.mxu0
    %3098 = vdwg.mxu0
    %v3099 = vmul.f32 %v3091, 0.35355338
    %v3100 = vmul.f32 %v3096, 0.35355338
    %v3101 = vmax.f32 %v3099, -5.0
    %v3102 = vmax.f32 %v3100, -5.0
    %v3103 = vmin.f32 %v3101, 5.0
    %v3104 = vmin.f32 %v3102, 5.0
    %v3105 = vmul.f32 %v3103, 1.442695
    %v3106 = vpow.pop %v3105
    %v3107 = vmul.f32 %v3104, 1.442695
    %v3108 = vpow.pop %v3107
    %v3109 = vsel %vm433, %v3106, 0.0
    %3110 = vadd.xlane.f32.xlu0 %v3109
    %v3111 = vpop.xlane.xlu0 %3110
    %v3112 = vsel %vm433, %v3108, 0.0
    %3113 = vadd.xlane.f32.xlu0 %v3112
    %v3114 = vpop.xlane.xlu0 %3113
    %v3115 = vrcp.pop %v3111
    %v3116 = vmul.f32 %v3106, %v3115
    %v3117 = vrcp.pop %v3114
    %v3118 = vmul.f32 %v3108, %v3117
    %3119 = vrot.lane.b32.xlu0 %v2804, 56
    %v3120 = vpop.permute.xlu0 %3119
    %3121 = vrot.lane.b32.xlu0 %v2809, 56
    %v3122 = vpop.permute.xlu0 %3121
    %v3126 = vsel %vm433, %v3116, 0
    %v3129 = vsel %vm433, %v3118, 0
    %3131 = vmatprep.subr.mxu0 0.0
    %3132 = vmatpush1.msra.mxu0 0.0
    %3133 = vmatprep.subr.mxu0 0.0
    %3134 = vmatpush1.msra.mxu0 0.0
    %3135 = vmatprep.subr.mxu0 0.0
    %3136 = vmatpush1.msra.mxu0 0.0
    %3137 = vmatprep.subr.mxu0 0.0
    %3138 = vmatpush1.msra.mxu0 0.0
    %3139 = vmatprep.subr.mxu0 0.0
    %3140 = vmatpush1.msra.mxu0 0.0
    %3141 = vmatprep.subr.mxu0 0.0
    %3142 = vmatpush1.msra.mxu0 0.0
    %3143 = vmatprep.subr.mxu0 0.0
    %3144 = vmatpush1.msra.mxu0 0.0
    %3145 = vmatprep.subr.mxu0 0.0
    %3146 = vmatpush1.msra.mxu0 0.0
    %3147 = vmatprep.subr.mxu0 0.0
    %3148 = vmatpush1.msra.mxu0 0.0
    %3149 = vmatprep.subr.mxu0 0.0
    %3150 = vmatpush1.msra.mxu0 0.0
    %3151 = vmatprep.subr.mxu0 0.0
    %3152 = vmatpush1.msra.mxu0 0.0
    %3153 = vmatprep.subr.mxu0 0.0
    %3154 = vmatpush1.msra.mxu0 0.0
    %3155 = vmatprep.subr.mxu0 0.0
    %3156 = vmatpush1.msra.mxu0 0.0
    %3157 = vmatprep.subr.mxu0 0.0
    %3158 = vmatpush1.msra.mxu0 0.0
    %3159 = vmatprep.subr.mxu0 0.0
    %3160 = vmatpush1.msra.mxu0 %v3122
    %3161 = vmatprep.subr.mxu0 0.0
    %3162 = vmatpush1.msra.mxu0 %v3120
    %3163 = vmatprep.subr.mxu0 0.0
    %3164 = vmatpush2.msra.mxu0 0.0
    %3165 = vmatprep.subr.mxu0 0.0
    %3166 = vmatpush2.msra.mxu0 0.0
    %3167 = vmatprep.subr.mxu0 0.0
    %3168 = vmatpush2.msra.mxu0 0.0
    %3169 = vmatprep.subr.mxu0 0.0
    %3170 = vmatpush2.msra.mxu0 0.0
    %3171 = vmatprep.subr.mxu0 0.0
    %3172 = vmatpush2.msra.mxu0 0.0
    %3173 = vmatprep.subr.mxu0 0.0
    %3174 = vmatpush2.msra.mxu0 0.0
    %3175 = vmatprep.subr.mxu0 0.0
    %3176 = vmatpush2.msra.mxu0 0.0
    %3177 = vmatprep.subr.mxu0 0.0
    %3178 = vmatpush2.msra.mxu0 0.0
    %3179 = vmatprep.subr.mxu0 0.0
    %3180 = vmatpush2.msra.mxu0 0.0
    %3181 = vmatprep.subr.mxu0 0.0
    %3182 = vmatpush2.msra.mxu0 0.0
    %3183 = vmatprep.subr.mxu0 0.0
    %3184 = vmatpush2.msra.mxu0 0.0
    %3185 = vmatprep.subr.mxu0 0.0
    %3186 = vmatpush2.msra.mxu0 0.0
    %3187 = vmatprep.subr.mxu0 0.0
    %3188 = vmatpush2.msra.mxu0 0.0
    %3189 = vmatprep.subr.mxu0 0.0
    %3190 = vmatpush2.msra.mxu0 0.0
    %3191 = vmatprep.subr.mxu0 0.0
    %3192 = vmatpush2.msra.mxu0 0.0
    %3193 = vmatprep.subr.mxu0 0.0
    %3194 = vmatpush2.msra.mxu0 0.0
    %3195 = vmatprep.mubr.f32.mxu0 0.0
    %3196 = vmatmul.mubr.f32.gmra.mxu0 %v3126
    %v3197 = vpop.f32.mrf.mxu0
    %v3198 = vadd.f32 0.0, %v3197
    %v3199 = vpop.f32.mrf.mxu0
    %3200 = vmatprep.mubr.f32.mxu0 0.0
    %3201 = vmatmul.mubr.f32.gmra.mxu0 %v3129
    %v3202 = vpop.f32.mrf.mxu0
    %v3203 = vadd.f32 0.0, %v3202
    %v3204 = vpop.f32.mrf.mxu0
    %3205 = vdwg.mxu0
    %v3207 = vsel %vm789, %v3198, 0
    %v3210 = vsel %vm789, %v3203, 0
    %3212 = vmatprep.subr.mxu0 0.0
    %3213 = vmatpush1.msra.mxu0 0.0
    %3214 = vmatprep.subr.mxu0 0.0
    %3215 = vmatpush1.msra.mxu0 0.0
    %3216 = vmatprep.subr.mxu0 0.0
    %3217 = vmatpush1.msra.mxu0 0.0
    %3218 = vmatprep.subr.mxu0 0.0
    %3219 = vmatpush1.msra.mxu0 0.0
    %3220 = vmatprep.subr.mxu0 0.0
    %3221 = vmatpush1.msra.mxu0 0.0
    %3222 = vmatprep.subr.mxu0 0.0
    %3223 = vmatpush1.msra.mxu0 0.0
    %3224 = vmatprep.subr.mxu0 0.0
    %3225 = vmatpush1.msra.mxu0 0.0
    %3226 = vmatprep.subr.mxu0 0.0
    %3227 = vmatpush1.msra.mxu0 0.0
    %3228 = vmatprep.subr.mxu0 0.0
    %3229 = vmatpush1.msra.mxu0 0.0
    %3230 = vmatprep.subr.mxu0 0.0
    %3231 = vmatpush1.msra.mxu0 0.0
    %3232 = vmatprep.subr.mxu0 0.0
    %3233 = vmatpush1.msra.mxu0 0.0
    %3234 = vmatprep.subr.mxu0 0.0
    %3235 = vmatpush1.msra.mxu0 0.0
    %3236 = vmatprep.subr.mxu0 0.0
    %3237 = vmatpush1.msra.mxu0 0.0
    %3238 = vmatprep.subr.mxu0 0.0
    %3239 = vmatpush1.msra.mxu0 0.0
    %3240 = vmatprep.subr.mxu0 0.0
    %3241 = vmatpush1.msra.mxu0 0.0
    %3242 = vmatprep.subr.mxu0 0.0
    %3243 = vmatpush1.msra.mxu0 %v404
    %3244 = vmatprep.subr.mxu0 0.0
    %3245 = vmatpush2.msra.mxu0 0.0
    %3246 = vmatprep.subr.mxu0 0.0
    %3247 = vmatpush2.msra.mxu0 0.0
    %3248 = vmatprep.subr.mxu0 0.0
    %3249 = vmatpush2.msra.mxu0 0.0
    %3250 = vmatprep.subr.mxu0 0.0
    %3251 = vmatpush2.msra.mxu0 0.0
    %3252 = vmatprep.subr.mxu0 0.0
    %3253 = vmatpush2.msra.mxu0 0.0
    %3254 = vmatprep.subr.mxu0 0.0
    %3255 = vmatpush2.msra.mxu0 0.0
    %3256 = vmatprep.subr.mxu0 0.0
    %3257 = vmatpush2.msra.mxu0 0.0
    %3258 = vmatprep.subr.mxu0 0.0
    %3259 = vmatpush2.msra.mxu0 0.0
    %3260 = vmatprep.subr.mxu0 0.0
    %3261 = vmatpush2.msra.mxu0 0.0
    %3262 = vmatprep.subr.mxu0 0.0
    %3263 = vmatpush2.msra.mxu0 0.0
    %3264 = vmatprep.subr.mxu0 0.0
    %3265 = vmatpush2.msra.mxu0 0.0
    %3266 = vmatprep.subr.mxu0 0.0
    %3267 = vmatpush2.msra.mxu0 0.0
    %3268 = vmatprep.subr.mxu0 0.0
    %3269 = vmatpush2.msra.mxu0 0.0
    %3270 = vmatprep.subr.mxu0 0.0
    %3271 = vmatpush2.msra.mxu0 0.0
    %3272 = vmatprep.subr.mxu0 0.0
    %3273 = vmatpush2.msra.mxu0 0.0
    %3274 = vmatprep.subr.mxu0 0.0
    %3275 = vmatpush2.msra.mxu0 0.0
    %3276 = vmatprep.mubr.f32.mxu0 0.0
    %3277 = vmatmul.mubr.f32.gmra.mxu0 %v3207
    %v3278 = vpop.f32.mrf.mxu0
    %v3279 = vadd.f32 0.0, %v3278
    %v3280 = vpop.f32.mrf.mxu0
    %3281 = vmatprep.mubr.f32.mxu0 0.0
    %3282 = vmatmul.mubr.f32.gmra.mxu0 %v3210
    %v3283 = vpop.f32.mrf.mxu0
    %v3284 = vadd.f32 0.0, %v3283
    %v3285 = vpop.f32.mrf.mxu0
    %3286 = vdwg.mxu0
    %v3288 = vsel %vm789, %v3000, 0
    %v3291 = vsel %vm789, %v3005, 0
    %3293 = vmatprep.subr.mxu0 0.0
    %3294 = vmatpush1.msra.mxu0 0.0
    %3295 = vmatprep.subr.mxu0 0.0
    %3296 = vmatpush1.msra.mxu0 0.0
    %3297 = vmatprep.subr.mxu0 0.0
    %3298 = vmatpush1.msra.mxu0 0.0
    %3299 = vmatprep.subr.mxu0 0.0
    %3300 = vmatpush1.msra.mxu0 0.0
    %3301 = vmatprep.subr.mxu0 0.0
    %3302 = vmatpush1.msra.mxu0 0.0
    %3303 = vmatprep.subr.mxu0 0.0
    %3304 = vmatpush1.msra.mxu0 0.0
    %3305 = vmatprep.subr.mxu0 0.0
    %3306 = vmatpush1.msra.mxu0 0.0
    %3307 = vmatprep.subr.mxu0 0.0
    %3308 = vmatpush1.msra.mxu0 0.0
    %3309 = vmatprep.subr.mxu0 0.0
    %3310 = vmatpush1.msra.mxu0 0.0
    %3311 = vmatprep.subr.mxu0 0.0
    %3312 = vmatpush1.msra.mxu0 0.0
    %3313 = vmatprep.subr.mxu0 0.0
    %3314 = vmatpush1.msra.mxu0 0.0
    %3315 = vmatprep.subr.mxu0 0.0
    %3316 = vmatpush1.msra.mxu0 0.0
    %3317 = vmatprep.subr.mxu0 0.0
    %3318 = vmatpush1.msra.mxu0 0.0
    %3319 = vmatprep.subr.mxu0 0.0
    %3320 = vmatpush1.msra.mxu0 0.0
    %3321 = vmatprep.subr.mxu0 0.0
    %3322 = vmatpush1.msra.mxu0 0.0
    %3323 = vmatprep.subr.mxu0 0.0
    %3324 = vmatpush1.msra.mxu0 %v403
    %3325 = vmatprep.subr.mxu0 0.0
    %3326 = vmatpush2.msra.mxu0 0.0
    %3327 = vmatprep.subr.mxu0 0.0
    %3328 = vmatpush2.msra.mxu0 0.0
    %3329 = vmatprep.subr.mxu0 0.0
    %3330 = vmatpush2.msra.mxu0 0.0
    %3331 = vmatprep.subr.mxu0 0.0
    %3332 = vmatpush2.msra.mxu0 0.0
    %3333 = vmatprep.subr.mxu0 0.0
    %3334 = vmatpush2.msra.mxu0 0.0
    %3335 = vmatprep.subr.mxu0 0.0
    %3336 = vmatpush2.msra.mxu0 0.0
    %3337 = vmatprep.subr.mxu0 0.0
    %3338 = vmatpush2.msra.mxu0 0.0
    %3339 = vmatprep.subr.mxu0 0.0
    %3340 = vmatpush2.msra.mxu0 0.0
    %3341 = vmatprep.subr.mxu0 0.0
    %3342 = vmatpush2.msra.mxu0 0.0
    %3343 = vmatprep.subr.mxu0 0.0
    %3344 = vmatpush2.msra.mxu0 0.0
    %3345 = vmatprep.subr.mxu0 0.0
    %3346 = vmatpush2.msra.mxu0 0.0
    %3347 = vmatprep.subr.mxu0 0.0
    %3348 = vmatpush2.msra.mxu0 0.0
    %3349 = vmatprep.subr.mxu0 0.0
    %3350 = vmatpush2.msra.mxu0 0.0
    %3351 = vmatprep.subr.mxu0 0.0
    %3352 = vmatpush2.msra.mxu0 0.0
    %3353 = vmatprep.subr.mxu0 0.0
    %3354 = vmatpush2.msra.mxu0 0.0
    %3355 = vmatprep.subr.mxu0 0.0
    %3356 = vmatpush2.msra.mxu0 0.0
    %3357 = vmatprep.mubr.f32.mxu0 0.0
    %3358 = vmatmul.mubr.f32.gmra.mxu0 %v3288
    %v3359 = vpop.f32.mrf.mxu0
    %v3360 = vadd.f32 %v3279, %v3359
    %v3361 = vpop.f32.mrf.mxu0
    %3362 = vmatprep.mubr.f32.mxu0 0.0
    %3363 = vmatmul.mubr.f32.gmra.mxu0 %v3291
    %v3364 = vpop.f32.mrf.mxu0
    %v3365 = vadd.f32 %v3284, %v3364
    %v3366 = vpop.f32.mrf.mxu0
    %3367 = vdwg.mxu0
    %3368 = vrot.lane.b32.xlu0 %v2804, 112
    %v3369 = vpop.permute.xlu0 %3368
    %3370 = vrot.lane.b32.xlu0 %v2809, 112
    %v3371 = vpop.permute.xlu0 %3370
    %3372 = vrot.lane.b32.xlu0 %v2804, 80
    %v3373 = vpop.permute.xlu0 %3372
    %3374 = vrot.lane.b32.xlu0 %v2809, 80
    %v3375 = vpop.permute.xlu0 %3374
    %v3376 = vsel %vm789, %v3369, 0
    %v3378 = vsel %vm789, %v3371, 0
    %v3380 = vsel %vm789, %v3373, 0
    %v3382 = vsel %vm789, %v3375, 0
    %3384 = vmatprep.subr.mxu0 0.0
    %3385 = vmatpush1.xpose.msra.mxu0 0.0
    %3386 = vmatprep.subr.mxu0 0.0
    %3387 = vmatpush1.xpose.msra.mxu0 0.0
    %3388 = vmatprep.subr.mxu0 0.0
    %3389 = vmatpush1.xpose.msra.mxu0 0.0
    %3390 = vmatprep.subr.mxu0 0.0
    %3391 = vmatpush1.xpose.msra.mxu0 0.0
    %3392 = vmatprep.subr.mxu0 0.0
    %3393 = vmatpush1.xpose.msra.mxu0 0.0
    %3394 = vmatprep.subr.mxu0 0.0
    %3395 = vmatpush1.xpose.msra.mxu0 0.0
    %3396 = vmatprep.subr.mxu0 0.0
    %3397 = vmatpush1.xpose.msra.mxu0 0.0
    %3398 = vmatprep.subr.mxu0 0.0
    %3399 = vmatpush1.xpose.msra.mxu0 0.0
    %3400 = vmatprep.subr.mxu0 0.0
    %3401 = vmatpush1.xpose.msra.mxu0 0.0
    %3402 = vmatprep.subr.mxu0 0.0
    %3403 = vmatpush1.xpose.msra.mxu0 0.0
    %3404 = vmatprep.subr.mxu0 0.0
    %3405 = vmatpush1.xpose.msra.mxu0 0.0
    %3406 = vmatprep.subr.mxu0 0.0
    %3407 = vmatpush1.xpose.msra.mxu0 0.0
    %3408 = vmatprep.subr.mxu0 0.0
    %3409 = vmatpush1.xpose.msra.mxu0 0.0
    %3410 = vmatprep.subr.mxu0 0.0
    %3411 = vmatpush1.xpose.msra.mxu0 0.0
    %3412 = vmatprep.subr.mxu0 0.0
    %3413 = vmatpush1.xpose.msra.mxu0 %v3382
    %3414 = vmatprep.subr.mxu0 0.0
    %3415 = vmatpush1.xpose.msra.mxu0 %v3380
    %3416 = vmatprep.subr.mxu0 0.0
    %3417 = vmatpush2.xpose.msra.mxu0 0.0
    %3418 = vmatprep.subr.mxu0 0.0
    %3419 = vmatpush2.xpose.msra.mxu0 0.0
    %3420 = vmatprep.subr.mxu0 0.0
    %3421 = vmatpush2.xpose.msra.mxu0 0.0
    %3422 = vmatprep.subr.mxu0 0.0
    %3423 = vmatpush2.xpose.msra.mxu0 0.0
    %3424 = vmatprep.subr.mxu0 0.0
    %3425 = vmatpush2.xpose.msra.mxu0 0.0
    %3426 = vmatprep.subr.mxu0 0.0
    %3427 = vmatpush2.xpose.msra.mxu0 0.0
    %3428 = vmatprep.subr.mxu0 0.0
    %3429 = vmatpush2.xpose.msra.mxu0 0.0
    %3430 = vmatprep.subr.mxu0 0.0
    %3431 = vmatpush2.xpose.msra.mxu0 0.0
    %3432 = vmatprep.subr.mxu0 0.0
    %3433 = vmatpush2.xpose.msra.mxu0 0.0
    %3434 = vmatprep.subr.mxu0 0.0
    %3435 = vmatpush2.xpose.msra.mxu0 0.0
    %3436 = vmatprep.subr.mxu0 0.0
    %3437 = vmatpush2.xpose.msra.mxu0 0.0
    %3438 = vmatprep.subr.mxu0 0.0
    %3439 = vmatpush2.xpose.msra.mxu0 0.0
    %3440 = vmatprep.subr.mxu0 0.0
    %3441 = vmatpush2.xpose.msra.mxu0 0.0
    %3442 = vmatprep.subr.mxu0 0.0
    %3443 = vmatpush2.xpose.msra.mxu0 0.0
    %3444 = vmatprep.subr.mxu0 0.0
    %3445 = vmatpush2.xpose.msra.mxu0 0.0
    %3446 = vmatprep.subr.mxu0 0.0
    %3447 = vmatpush2.xpose.msra.mxu0 0.0
    %3448 = vmatprep.mubr.f32.mxu0 0.0
    %3449 = vmatmul.mubr.f32.gmra.mxu0 %v3376
    %v3450 = vpop.f32.mrf.mxu0
    %v3451 = vadd.f32 0.0, %v3450
    %v3452 = vpop.f32.mrf.mxu0
    %3453 = vmatprep.mubr.f32.mxu0 0.0
    %3454 = vmatmul.mubr.f32.gmra.mxu0 %v3378
    %v3455 = vpop.f32.mrf.mxu0
    %v3456 = vadd.f32 0.0, %v3455
    %v3457 = vpop.f32.mrf.mxu0
    %3458 = vdwg.mxu0
    %v3459 = vmul.f32 %v3451, 0.35355338
    %v3460 = vmul.f32 %v3456, 0.35355338
    %v3461 = vmax.f32 %v3459, -5.0
    %v3462 = vmax.f32 %v3460, -5.0
    %v3463 = vmin.f32 %v3461, 5.0
    %v3464 = vmin.f32 %v3462, 5.0
    %v3465 = vmul.f32 %v3463, 1.442695
    %v3466 = vpow.pop %v3465
    %v3467 = vmul.f32 %v3464, 1.442695
    %v3468 = vpow.pop %v3467
    %v3469 = vsel %vm433, %v3466, 0.0
    %3470 = vadd.xlane.f32.xlu0 %v3469
    %v3471 = vpop.xlane.xlu0 %3470
    %v3472 = vsel %vm433, %v3468, 0.0
    %3473 = vadd.xlane.f32.xlu0 %v3472
    %v3474 = vpop.xlane.xlu0 %3473
    %v3475 = vrcp.pop %v3471
    %v3476 = vmul.f32 %v3466, %v3475
    %v3477 = vrcp.pop %v3474
    %v3478 = vmul.f32 %v3468, %v3477
    %3479 = vrot.lane.b32.xlu0 %v2804, 48
    %v3480 = vpop.permute.xlu0 %3479
    %3481 = vrot.lane.b32.xlu0 %v2809, 48
    %v3482 = vpop.permute.xlu0 %3481
    %v3486 = vsel %vm433, %v3476, 0
    %v3489 = vsel %vm433, %v3478, 0
    %3491 = vmatprep.subr.mxu0 0.0
    %3492 = vmatpush1.msra.mxu0 0.0
    %3493 = vmatprep.subr.mxu0 0.0
    %3494 = vmatpush1.msra.mxu0 0.0
    %3495 = vmatprep.subr.mxu0 0.0
    %3496 = vmatpush1.msra.mxu0 0.0
    %3497 = vmatprep.subr.mxu0 0.0
    %3498 = vmatpush1.msra.mxu0 0.0
    %3499 = vmatprep.subr.mxu0 0.0
    %3500 = vmatpush1.msra.mxu0 0.0
    %3501 = vmatprep.subr.mxu0 0.0
    %3502 = vmatpush1.msra.mxu0 0.0
    %3503 = vmatprep.subr.mxu0 0.0
    %3504 = vmatpush1.msra.mxu0 0.0
    %3505 = vmatprep.subr.mxu0 0.0
    %3506 = vmatpush1.msra.mxu0 0.0
    %3507 = vmatprep.subr.mxu0 0.0
    %3508 = vmatpush1.msra.mxu0 0.0
    %3509 = vmatprep.subr.mxu0 0.0
    %3510 = vmatpush1.msra.mxu0 0.0
    %3511 = vmatprep.subr.mxu0 0.0
    %3512 = vmatpush1.msra.mxu0 0.0
    %3513 = vmatprep.subr.mxu0 0.0
    %3514 = vmatpush1.msra.mxu0 0.0
    %3515 = vmatprep.subr.mxu0 0.0
    %3516 = vmatpush1.msra.mxu0 0.0
    %3517 = vmatprep.subr.mxu0 0.0
    %3518 = vmatpush1.msra.mxu0 0.0
    %3519 = vmatprep.subr.mxu0 0.0
    %3520 = vmatpush1.msra.mxu0 %v3482
    %3521 = vmatprep.subr.mxu0 0.0
    %3522 = vmatpush1.msra.mxu0 %v3480
    %3523 = vmatprep.subr.mxu0 0.0
    %3524 = vmatpush2.msra.mxu0 0.0
    %3525 = vmatprep.subr.mxu0 0.0
    %3526 = vmatpush2.msra.mxu0 0.0
    %3527 = vmatprep.subr.mxu0 0.0
    %3528 = vmatpush2.msra.mxu0 0.0
    %3529 = vmatprep.subr.mxu0 0.0
    %3530 = vmatpush2.msra.mxu0 0.0
    %3531 = vmatprep.subr.mxu0 0.0
    %3532 = vmatpush2.msra.mxu0 0.0
    %3533 = vmatprep.subr.mxu0 0.0
    %3534 = vmatpush2.msra.mxu0 0.0
    %3535 = vmatprep.subr.mxu0 0.0
    %3536 = vmatpush2.msra.mxu0 0.0
    %3537 = vmatprep.subr.mxu0 0.0
    %3538 = vmatpush2.msra.mxu0 0.0
    %3539 = vmatprep.subr.mxu0 0.0
    %3540 = vmatpush2.msra.mxu0 0.0
    %3541 = vmatprep.subr.mxu0 0.0
    %3542 = vmatpush2.msra.mxu0 0.0
    %3543 = vmatprep.subr.mxu0 0.0
    %3544 = vmatpush2.msra.mxu0 0.0
    %3545 = vmatprep.subr.mxu0 0.0
    %3546 = vmatpush2.msra.mxu0 0.0
    %3547 = vmatprep.subr.mxu0 0.0
    %3548 = vmatpush2.msra.mxu0 0.0
    %3549 = vmatprep.subr.mxu0 0.0
    %3550 = vmatpush2.msra.mxu0 0.0
    %3551 = vmatprep.subr.mxu0 0.0
    %3552 = vmatpush2.msra.mxu0 0.0
    %3553 = vmatprep.subr.mxu0 0.0
    %3554 = vmatpush2.msra.mxu0 0.0
    %3555 = vmatprep.mubr.f32.mxu0 0.0
    %3556 = vmatmul.mubr.f32.gmra.mxu0 %v3486
    %v3557 = vpop.f32.mrf.mxu0
    %v3558 = vadd.f32 0.0, %v3557
    %v3559 = vpop.f32.mrf.mxu0
    %3560 = vmatprep.mubr.f32.mxu0 0.0
    %3561 = vmatmul.mubr.f32.gmra.mxu0 %v3489
    %v3562 = vpop.f32.mrf.mxu0
    %v3563 = vadd.f32 0.0, %v3562
    %v3564 = vpop.f32.mrf.mxu0
    %3565 = vdwg.mxu0
    %v3567 = vsel %vm789, %v3558, 0
    %v3570 = vsel %vm789, %v3563, 0
    %3572 = vmatprep.subr.mxu0 0.0
    %3573 = vmatpush1.msra.mxu0 0.0
    %3574 = vmatprep.subr.mxu0 0.0
    %3575 = vmatpush1.msra.mxu0 0.0
    %3576 = vmatprep.subr.mxu0 0.0
    %3577 = vmatpush1.msra.mxu0 0.0
    %3578 = vmatprep.subr.mxu0 0.0
    %3579 = vmatpush1.msra.mxu0 0.0
    %3580 = vmatprep.subr.mxu0 0.0
    %3581 = vmatpush1.msra.mxu0 0.0
    %3582 = vmatprep.subr.mxu0 0.0
    %3583 = vmatpush1.msra.mxu0 0.0
    %3584 = vmatprep.subr.mxu0 0.0
    %3585 = vmatpush1.msra.mxu0 0.0
    %3586 = vmatprep.subr.mxu0 0.0
    %3587 = vmatpush1.msra.mxu0 0.0
    %3588 = vmatprep.subr.mxu0 0.0
    %3589 = vmatpush1.msra.mxu0 0.0
    %3590 = vmatprep.subr.mxu0 0.0
    %3591 = vmatpush1.msra.mxu0 0.0
    %3592 = vmatprep.subr.mxu0 0.0
    %3593 = vmatpush1.msra.mxu0 0.0
    %3594 = vmatprep.subr.mxu0 0.0
    %3595 = vmatpush1.msra.mxu0 0.0
    %3596 = vmatprep.subr.mxu0 0.0
    %3597 = vmatpush1.msra.mxu0 0.0
    %3598 = vmatprep.subr.mxu0 0.0
    %3599 = vmatpush1.msra.mxu0 0.0
    %3600 = vmatprep.subr.mxu0 0.0
    %3601 = vmatpush1.msra.mxu0 0.0
    %3602 = vmatprep.subr.mxu0 0.0
    %3603 = vmatpush1.msra.mxu0 %v405
    %3604 = vmatprep.subr.mxu0 0.0
    %3605 = vmatpush2.msra.mxu0 0.0
    %3606 = vmatprep.subr.mxu0 0.0
    %3607 = vmatpush2.msra.mxu0 0.0
    %3608 = vmatprep.subr.mxu0 0.0
    %3609 = vmatpush2.msra.mxu0 0.0
    %3610 = vmatprep.subr.mxu0 0.0
    %3611 = vmatpush2.msra.mxu0 0.0
    %3612 = vmatprep.subr.mxu0 0.0
    %3613 = vmatpush2.msra.mxu0 0.0
    %3614 = vmatprep.subr.mxu0 0.0
    %3615 = vmatpush2.msra.mxu0 0.0
    %3616 = vmatprep.subr.mxu0 0.0
    %3617 = vmatpush2.msra.mxu0 0.0
    %3618 = vmatprep.subr.mxu0 0.0
    %3619 = vmatpush2.msra.mxu0 0.0
    %3620 = vmatprep.subr.mxu0 0.0
    %3621 = vmatpush2.msra.mxu0 0.0
    %3622 = vmatprep.subr.mxu0 0.0
    %3623 = vmatpush2.msra.mxu0 0.0
    %3624 = vmatprep.subr.mxu0 0.0
    %3625 = vmatpush2.msra.mxu0 0.0
    %3626 = vmatprep.subr.mxu0 0.0
    %3627 = vmatpush2.msra.mxu0 0.0
    %3628 = vmatprep.subr.mxu0 0.0
    %3629 = vmatpush2.msra.mxu0 0.0
    %3630 = vmatprep.subr.mxu0 0.0
    %3631 = vmatpush2.msra.mxu0 0.0
    %3632 = vmatprep.subr.mxu0 0.0
    %3633 = vmatpush2.msra.mxu0 0.0
    %3634 = vmatprep.subr.mxu0 0.0
    %3635 = vmatpush2.msra.mxu0 0.0
    %3636 = vmatprep.mubr.f32.mxu0 0.0
    %3637 = vmatmul.mubr.f32.gmra.mxu0 %v3567
    %v3638 = vpop.f32.mrf.mxu0
    %v3639 = vadd.f32 0.0, %v3638
    %v3640 = vpop.f32.mrf.mxu0
    %3641 = vmatprep.mubr.f32.mxu0 0.0
    %3642 = vmatmul.mubr.f32.gmra.mxu0 %v3570
    %v3643 = vpop.f32.mrf.mxu0
    %v3644 = vadd.f32 0.0, %v3643
    %v3645 = vpop.f32.mrf.mxu0
    %3646 = vdwg.mxu0
    %v3647 = vadd.f32 %v3360, %v3639
    %v3648 = vadd.f32 %v3365, %v3644
    %3649 = vrot.lane.b32.xlu0 %v2804, 104
    %v3650 = vpop.permute.xlu0 %3649
    %3651 = vrot.lane.b32.xlu0 %v2809, 104
    %v3652 = vpop.permute.xlu0 %3651
    %3653 = vrot.lane.b32.xlu0 %v2804, 72
    %v3654 = vpop.permute.xlu0 %3653
    %3655 = vrot.lane.b32.xlu0 %v2809, 72
    %v3656 = vpop.permute.xlu0 %3655
    %v3657 = vsel %vm789, %v3650, 0
    %v3659 = vsel %vm789, %v3652, 0
    %v3661 = vsel %vm789, %v3654, 0
    %v3663 = vsel %vm789, %v3656, 0
    %3665 = vmatprep.subr.mxu0 0.0
    %3666 = vmatpush1.xpose.msra.mxu0 0.0
    %3667 = vmatprep.subr.mxu0 0.0
    %3668 = vmatpush1.xpose.msra.mxu0 0.0
    %3669 = vmatprep.subr.mxu0 0.0
    %3670 = vmatpush1.xpose.msra.mxu0 0.0
    %3671 = vmatprep.subr.mxu0 0.0
    %3672 = vmatpush1.xpose.msra.mxu0 0.0
    %3673 = vmatprep.subr.mxu0 0.0
    %3674 = vmatpush1.xpose.msra.mxu0 0.0
    %3675 = vmatprep.subr.mxu0 0.0
    %3676 = vmatpush1.xpose.msra.mxu0 0.0
    %3677 = vmatprep.subr.mxu0 0.0
    %3678 = vmatpush1.xpose.msra.mxu0 0.0
    %3679 = vmatprep.subr.mxu0 0.0
    %3680 = vmatpush1.xpose.msra.mxu0 0.0
    %3681 = vmatprep.subr.mxu0 0.0
    %3682 = vmatpush1.xpose.msra.mxu0 0.0
    %3683 = vmatprep.subr.mxu0 0.0
    %3684 = vmatpush1.xpose.msra.mxu0 0.0
    %3685 = vmatprep.subr.mxu0 0.0
    %3686 = vmatpush1.xpose.msra.mxu0 0.0
    %3687 = vmatprep.subr.mxu0 0.0
    %3688 = vmatpush1.xpose.msra.mxu0 0.0
    %3689 = vmatprep.subr.mxu0 0.0
    %3690 = vmatpush1.xpose.msra.mxu0 0.0
    %3691 = vmatprep.subr.mxu0 0.0
    %3692 = vmatpush1.xpose.msra.mxu0 0.0
    %3693 = vmatprep.subr.mxu0 0.0
    %3694 = vmatpush1.xpose.msra.mxu0 %v3663
    %3695 = vmatprep.subr.mxu0 0.0
    %3696 = vmatpush1.xpose.msra.mxu0 %v3661
    %3697 = vmatprep.subr.mxu0 0.0
    %3698 = vmatpush2.xpose.msra.mxu0 0.0
    %3699 = vmatprep.subr.mxu0 0.0
    %3700 = vmatpush2.xpose.msra.mxu0 0.0
    %3701 = vmatprep.subr.mxu0 0.0
    %3702 = vmatpush2.xpose.msra.mxu0 0.0
    %3703 = vmatprep.subr.mxu0 0.0
    %3704 = vmatpush2.xpose.msra.mxu0 0.0
    %3705 = vmatprep.subr.mxu0 0.0
    %3706 = vmatpush2.xpose.msra.mxu0 0.0
    %3707 = vmatprep.subr.mxu0 0.0
    %3708 = vmatpush2.xpose.msra.mxu0 0.0
    %3709 = vmatprep.subr.mxu0 0.0
    %3710 = vmatpush2.xpose.msra.mxu0 0.0
    %3711 = vmatprep.subr.mxu0 0.0
    %3712 = vmatpush2.xpose.msra.mxu0 0.0
    %3713 = vmatprep.subr.mxu0 0.0
    %3714 = vmatpush2.xpose.msra.mxu0 0.0
    %3715 = vmatprep.subr.mxu0 0.0
    %3716 = vmatpush2.xpose.msra.mxu0 0.0
    %3717 = vmatprep.subr.mxu0 0.0
    %3718 = vmatpush2.xpose.msra.mxu0 0.0
    %3719 = vmatprep.subr.mxu0 0.0
    %3720 = vmatpush2.xpose.msra.mxu0 0.0
    %3721 = vmatprep.subr.mxu0 0.0
    %3722 = vmatpush2.xpose.msra.mxu0 0.0
    %3723 = vmatprep.subr.mxu0 0.0
    %3724 = vmatpush2.xpose.msra.mxu0 0.0
    %3725 = vmatprep.subr.mxu0 0.0
    %3726 = vmatpush2.xpose.msra.mxu0 0.0
    %3727 = vmatprep.subr.mxu0 0.0
    %3728 = vmatpush2.xpose.msra.mxu0 0.0
    %3729 = vmatprep.mubr.f32.mxu0 0.0
    %3730 = vmatmul.mubr.f32.gmra.mxu0 %v3657
    %v3731 = vpop.f32.mrf.mxu0
    %v3732 = vadd.f32 0.0, %v3731
    %v3733 = vpop.f32.mrf.mxu0
    %3734 = vmatprep.mubr.f32.mxu0 0.0
    %3735 = vmatmul.mubr.f32.gmra.mxu0 %v3659
    %v3736 = vpop.f32.mrf.mxu0
    %v3737 = vadd.f32 0.0, %v3736
    %v3738 = vpop.f32.mrf.mxu0
    %3739 = vdwg.mxu0
    %v3740 = vmul.f32 %v3732, 0.35355338
    %v3741 = vmul.f32 %v3737, 0.35355338
    %v3742 = vmax.f32 %v3740, -5.0
    %v3743 = vmax.f32 %v3741, -5.0
    %v3744 = vmin.f32 %v3742, 5.0
    %v3745 = vmin.f32 %v3743, 5.0
    %v3746 = vmul.f32 %v3744, 1.442695
    %v3747 = vpow.pop %v3746
    %v3748 = vmul.f32 %v3745, 1.442695
    %v3749 = vpow.pop %v3748
    %v3750 = vsel %vm433, %v3747, 0.0
    %3751 = vadd.xlane.f32.xlu0 %v3750
    %v3752 = vpop.xlane.xlu0 %3751
    %v3753 = vsel %vm433, %v3749, 0.0
    %3754 = vadd.xlane.f32.xlu0 %v3753
    %v3755 = vpop.xlane.xlu0 %3754
    %v3756 = vrcp.pop %v3752
    %v3757 = vmul.f32 %v3747, %v3756
    %v3758 = vrcp.pop %v3755
    %v3759 = vmul.f32 %v3749, %v3758
    %3760 = vrot.lane.b32.xlu0 %v2804, 40
    %v3761 = vpop.permute.xlu0 %3760
    %3762 = vrot.lane.b32.xlu0 %v2809, 40
    %v3763 = vpop.permute.xlu0 %3762
    %v3767 = vsel %vm433, %v3757, 0
    %v3770 = vsel %vm433, %v3759, 0
    %3772 = vmatprep.subr.mxu0 0.0
    %3773 = vmatpush1.msra.mxu0 0.0
    %3774 = vmatprep.subr.mxu0 0.0
    %3775 = vmatpush1.msra.mxu0 0.0
    %3776 = vmatprep.subr.mxu0 0.0
    %3777 = vmatpush1.msra.mxu0 0.0
    %3778 = vmatprep.subr.mxu0 0.0
    %3779 = vmatpush1.msra.mxu0 0.0
    %3780 = vmatprep.subr.mxu0 0.0
    %3781 = vmatpush1.msra.mxu0 0.0
    %3782 = vmatprep.subr.mxu0 0.0
    %3783 = vmatpush1.msra.mxu0 0.0
    %3784 = vmatprep.subr.mxu0 0.0
    %3785 = vmatpush1.msra.mxu0 0.0
    %3786 = vmatprep.subr.mxu0 0.0
    %3787 = vmatpush1.msra.mxu0 0.0
    %3788 = vmatprep.subr.mxu0 0.0
    %3789 = vmatpush1.msra.mxu0 0.0
    %3790 = vmatprep.subr.mxu0 0.0
    %3791 = vmatpush1.msra.mxu0 0.0
    %3792 = vmatprep.subr.mxu0 0.0
    %3793 = vmatpush1.msra.mxu0 0.0
    %3794 = vmatprep.subr.mxu0 0.0
    %3795 = vmatpush1.msra.mxu0 0.0
    %3796 = vmatprep.subr.mxu0 0.0
    %3797 = vmatpush1.msra.mxu0 0.0
    %3798 = vmatprep.subr.mxu0 0.0
    %3799 = vmatpush1.msra.mxu0 0.0
    %3800 = vmatprep.subr.mxu0 0.0
    %3801 = vmatpush1.msra.mxu0 %v3763
    %3802 = vmatprep.subr.mxu0 0.0
    %3803 = vmatpush1.msra.mxu0 %v3761
    %3804 = vmatprep.subr.mxu0 0.0
    %3805 = vmatpush2.msra.mxu0 0.0
    %3806 = vmatprep.subr.mxu0 0.0
    %3807 = vmatpush2.msra.mxu0 0.0
    %3808 = vmatprep.subr.mxu0 0.0
    %3809 = vmatpush2.msra.mxu0 0.0
    %3810 = vmatprep.subr.mxu0 0.0
    %3811 = vmatpush2.msra.mxu0 0.0
    %3812 = vmatprep.subr.mxu0 0.0
    %3813 = vmatpush2.msra.mxu0 0.0
    %3814 = vmatprep.subr.mxu0 0.0
    %3815 = vmatpush2.msra.mxu0 0.0
    %3816 = vmatprep.subr.mxu0 0.0
    %3817 = vmatpush2.msra.mxu0 0.0
    %3818 = vmatprep.subr.mxu0 0.0
    %3819 = vmatpush2.msra.mxu0 0.0
    %3820 = vmatprep.subr.mxu0 0.0
    %3821 = vmatpush2.msra.mxu0 0.0
    %3822 = vmatprep.subr.mxu0 0.0
    %3823 = vmatpush2.msra.mxu0 0.0
    %3824 = vmatprep.subr.mxu0 0.0
    %3825 = vmatpush2.msra.mxu0 0.0
    %3826 = vmatprep.subr.mxu0 0.0
    %3827 = vmatpush2.msra.mxu0 0.0
    %3828 = vmatprep.subr.mxu0 0.0
    %3829 = vmatpush2.msra.mxu0 0.0
    %3830 = vmatprep.subr.mxu0 0.0
    %3831 = vmatpush2.msra.mxu0 0.0
    %3832 = vmatprep.subr.mxu0 0.0
    %3833 = vmatpush2.msra.mxu0 0.0
    %3834 = vmatprep.subr.mxu0 0.0
    %3835 = vmatpush2.msra.mxu0 0.0
    %3836 = vmatprep.mubr.f32.mxu0 0.0
    %3837 = vmatmul.mubr.f32.gmra.mxu0 %v3767
    %v3838 = vpop.f32.mrf.mxu0
    %v3839 = vadd.f32 0.0, %v3838
    %v3840 = vpop.f32.mrf.mxu0
    %3841 = vmatprep.mubr.f32.mxu0 0.0
    %3842 = vmatmul.mubr.f32.gmra.mxu0 %v3770
    %v3843 = vpop.f32.mrf.mxu0
    %v3844 = vadd.f32 0.0, %v3843
    %v3845 = vpop.f32.mrf.mxu0
    %3846 = vdwg.mxu0
    %v3848 = vsel %vm789, %v3839, 0
    %v3851 = vsel %vm789, %v3844, 0
    %3853 = vmatprep.subr.mxu0 0.0
    %3854 = vmatpush1.msra.mxu0 0.0
    %3855 = vmatprep.subr.mxu0 0.0
    %3856 = vmatpush1.msra.mxu0 0.0
    %3857 = vmatprep.subr.mxu0 0.0
    %3858 = vmatpush1.msra.mxu0 0.0
    %3859 = vmatprep.subr.mxu0 0.0
    %3860 = vmatpush1.msra.mxu0 0.0
    %3861 = vmatprep.subr.mxu0 0.0
    %3862 = vmatpush1.msra.mxu0 0.0
    %3863 = vmatprep.subr.mxu0 0.0
    %3864 = vmatpush1.msra.mxu0 0.0
    %3865 = vmatprep.subr.mxu0 0.0
    %3866 = vmatpush1.msra.mxu0 0.0
    %3867 = vmatprep.subr.mxu0 0.0
    %3868 = vmatpush1.msra.mxu0 0.0
    %3869 = vmatprep.subr.mxu0 0.0
    %3870 = vmatpush1.msra.mxu0 0.0
    %3871 = vmatprep.subr.mxu0 0.0
    %3872 = vmatpush1.msra.mxu0 0.0
    %3873 = vmatprep.subr.mxu0 0.0
    %3874 = vmatpush1.msra.mxu0 0.0
    %3875 = vmatprep.subr.mxu0 0.0
    %3876 = vmatpush1.msra.mxu0 0.0
    %3877 = vmatprep.subr.mxu0 0.0
    %3878 = vmatpush1.msra.mxu0 0.0
    %3879 = vmatprep.subr.mxu0 0.0
    %3880 = vmatpush1.msra.mxu0 0.0
    %3881 = vmatprep.subr.mxu0 0.0
    %3882 = vmatpush1.msra.mxu0 0.0
    %3883 = vmatprep.subr.mxu0 0.0
    %3884 = vmatpush1.msra.mxu0 %v406
    %3885 = vmatprep.subr.mxu0 0.0
    %3886 = vmatpush2.msra.mxu0 0.0
    %3887 = vmatprep.subr.mxu0 0.0
    %3888 = vmatpush2.msra.mxu0 0.0
    %3889 = vmatprep.subr.mxu0 0.0
    %3890 = vmatpush2.msra.mxu0 0.0
    %3891 = vmatprep.subr.mxu0 0.0
    %3892 = vmatpush2.msra.mxu0 0.0
    %3893 = vmatprep.subr.mxu0 0.0
    %3894 = vmatpush2.msra.mxu0 0.0
    %3895 = vmatprep.subr.mxu0 0.0
    %3896 = vmatpush2.msra.mxu0 0.0
    %3897 = vmatprep.subr.mxu0 0.0
    %3898 = vmatpush2.msra.mxu0 0.0
    %3899 = vmatprep.subr.mxu0 0.0
    %3900 = vmatpush2.msra.mxu0 0.0
    %3901 = vmatprep.subr.mxu0 0.0
    %3902 = vmatpush2.msra.mxu0 0.0
    %3903 = vmatprep.subr.mxu0 0.0
    %3904 = vmatpush2.msra.mxu0 0.0
    %3905 = vmatprep.subr.mxu0 0.0
    %3906 = vmatpush2.msra.mxu0 0.0
    %3907 = vmatprep.subr.mxu0 0.0
    %3908 = vmatpush2.msra.mxu0 0.0
    %3909 = vmatprep.subr.mxu0 0.0
    %3910 = vmatpush2.msra.mxu0 0.0
    %3911 = vmatprep.subr.mxu0 0.0
    %3912 = vmatpush2.msra.mxu0 0.0
    %3913 = vmatprep.subr.mxu0 0.0
    %3914 = vmatpush2.msra.mxu0 0.0
    %3915 = vmatprep.subr.mxu0 0.0
    %3916 = vmatpush2.msra.mxu0 0.0
    %3917 = vmatprep.mubr.f32.mxu0 0.0
    %3918 = vmatmul.mubr.f32.gmra.mxu0 %v3848
    %v3919 = vpop.f32.mrf.mxu0
    %v3920 = vadd.f32 0.0, %v3919
    %v3921 = vpop.f32.mrf.mxu0
    %3922 = vmatprep.mubr.f32.mxu0 0.0
    %3923 = vmatmul.mubr.f32.gmra.mxu0 %v3851
    %v3924 = vpop.f32.mrf.mxu0
    %v3925 = vadd.f32 0.0, %v3924
    %v3926 = vpop.f32.mrf.mxu0
    %3927 = vdwg.mxu0
    %v3928 = vadd.f32 %v3647, %v3920
    %v3929 = vadd.f32 %v3648, %v3925
    %v3931 = vlaneseq
    %v3932 = vshrl.u32 %v3931, 7
    %v3933 = vsub.s32 0, %v3932
    %v3934 = vrot.slane %v402, %v3933
    %v3936 = vadd.f32 %v3928, %v3934
    %v3937 = vadd.f32 %v3929, %v3934
    %v3938 = vadd.f32 %v2723, %v3936
    %v3939 = vadd.f32 %v2724, %v3937
    %v3940 = vsel %vm523, %v3938, 0.0
    %3941 = vadd.xlane.f32.xlu0 %v3940
    %v3942 = vpop.xlane.xlu0 %3941
    %v3943 = vsel %vm523, %v3939, 0.0
    %3944 = vadd.xlane.f32.xlu0 %v3943
    %v3945 = vpop.xlane.xlu0 %3944
    %v3946 = vmul.f32 %v3942, %v2467
    %v3947 = vmul.f32 %v3945, %v2467
    %v3948 = vsub.f32 %v3938, %v3946
    %v3949 = vsub.f32 %v3939, %v3947
    %v3950 = vmul.f32 %v3948, %v3948
    %v3951 = vmul.f32 %v3949, %v3949
    %v3952 = vsel %vm523, %v3950, 0.0
    %3953 = vadd.xlane.f32.xlu0 %v3952
    %v3954 = vpop.xlane.xlu0 %3953
    %v3955 = vsel %vm523, %v3951, 0.0
    %3956 = vadd.xlane.f32.xlu0 %v3955
    %v3957 = vpop.xlane.xlu0 %3956
    %v3958 = vmul.f32 %v3954, %v2467
    %v3959 = vmul.f32 %v3957, %v2467
    %v3960 = vadd.f32 %v3958, 1e-05
    %v3961 = vadd.f32 %v3959, 1e-05
    %v3962 = vrsqrt.pop %v3960
    %v3963 = vrsqrt.pop %v3961
    %v3964 = vmul.f32 %v3948, %v3962
    %v3965 = vmul.f32 %v3949, %v3963
    %v3967 = vlaneseq
    %v3968 = vshrl.u32 %v3967, 7
    %v3969 = vsub.s32 0, %v3968
    %v3970 = vrot.slane %v399, %v3969
    %v3972 = vmul.f32 %v3964, %v3970
    %v3973 = vmul.f32 %v3965, %v3970
    %v3975 = vlaneseq
    %v3976 = vshrl.u32 %v3975, 7
    %v3977 = vsub.s32 0, %v3976
    %v3978 = vrot.slane %v398, %v3977
    %v3980 = vadd.f32 %v3972, %v3978
    %v3981 = vadd.f32 %v3973, %v3978
    %v3983 = vlaneseq
    %v3984 = vshrl.u32 %v3983, 7
    %v3985 = vsub.s32 0, %v3984
    %v3986 = vrot.slane %v384, %v3985
    %v3989 = vsel %vm523, %v3980, 0
    %v3992 = vsel %vm523, %v3981, 0
    %3994 = vmatprep.subr.mxu0 0.0
    %3995 = vmatpush1.msra.mxu0 0.0
    %3996 = vmatprep.subr.mxu0 0.0
    %3997 = vmatpush1.msra.mxu0 0.0
    %3998 = vmatprep.subr.mxu0 0.0
    %3999 = vmatpush1.msra.mxu0 0.0
    %4000 = vmatprep.subr.mxu0 0.0
    %4001 = vmatpush1.msra.mxu0 0.0
    %4002 = vmatprep.subr.mxu0 0.0
    %4003 = vmatpush1.msra.mxu0 0.0
    %4004 = vmatprep.subr.mxu0 0.0
    %4005 = vmatpush1.msra.mxu0 0.0
    %4006 = vmatprep.subr.mxu0 0.0
    %4007 = vmatpush1.msra.mxu0 0.0
    %4008 = vmatprep.subr.mxu0 0.0
    %4009 = vmatpush1.msra.mxu0 0.0
    %4010 = vmatprep.subr.mxu0 0.0
    %4011 = vmatpush1.msra.mxu0 0.0
    %4012 = vmatprep.subr.mxu0 0.0
    %4013 = vmatpush1.msra.mxu0 0.0
    %4014 = vmatprep.subr.mxu0 0.0
    %4015 = vmatpush1.msra.mxu0 0.0
    %4016 = vmatprep.subr.mxu0 0.0
    %4017 = vmatpush1.msra.mxu0 0.0
    %4018 = vmatprep.subr.mxu0 0.0
    %4019 = vmatpush1.msra.mxu0 %v388
    %4020 = vmatprep.subr.mxu0 0.0
    %4021 = vmatpush1.msra.mxu0 %v387
    %4022 = vmatprep.subr.mxu0 0.0
    %4023 = vmatpush1.msra.mxu0 %v386
    %4024 = vmatprep.subr.mxu0 0.0
    %4025 = vmatpush1.msra.mxu0 %v385
    %4026 = vmatprep.subr.mxu0 0.0
    %4027 = vmatpush2.msra.mxu0 0.0
    %4028 = vmatprep.subr.mxu0 0.0
    %4029 = vmatpush2.msra.mxu0 0.0
    %4030 = vmatprep.subr.mxu0 0.0
    %4031 = vmatpush2.msra.mxu0 0.0
    %4032 = vmatprep.subr.mxu0 0.0
    %4033 = vmatpush2.msra.mxu0 0.0
    %4034 = vmatprep.subr.mxu0 0.0
    %4035 = vmatpush2.msra.mxu0 0.0
    %4036 = vmatprep.subr.mxu0 0.0
    %4037 = vmatpush2.msra.mxu0 0.0
    %4038 = vmatprep.subr.mxu0 0.0
    %4039 = vmatpush2.msra.mxu0 0.0
    %4040 = vmatprep.subr.mxu0 0.0
    %4041 = vmatpush2.msra.mxu0 0.0
    %4042 = vmatprep.subr.mxu0 0.0
    %4043 = vmatpush2.msra.mxu0 0.0
    %4044 = vmatprep.subr.mxu0 0.0
    %4045 = vmatpush2.msra.mxu0 0.0
    %4046 = vmatprep.subr.mxu0 0.0
    %4047 = vmatpush2.msra.mxu0 0.0
    %4048 = vmatprep.subr.mxu0 0.0
    %4049 = vmatpush2.msra.mxu0 0.0
    %4050 = vmatprep.subr.mxu0 0.0
    %4051 = vmatpush2.msra.mxu0 0.0
    %4052 = vmatprep.subr.mxu0 0.0
    %4053 = vmatpush2.msra.mxu0 0.0
    %4054 = vmatprep.subr.mxu0 0.0
    %4055 = vmatpush2.msra.mxu0 0.0
    %4056 = vmatprep.subr.mxu0 0.0
    %4057 = vmatpush2.msra.mxu0 0.0
    %4058 = vmatprep.mubr.f32.mxu0 0.0
    %4059 = vmatmul.mubr.f32.gmra.mxu0 %v3989
    %v4060 = vpop.f32.mrf.mxu0
    %v4061 = vadd.f32 %v3986, %v4060
    %v4062 = vpop.f32.mrf.mxu0
    %4063 = vmatprep.mubr.f32.mxu0 0.0
    %4064 = vmatmul.mubr.f32.gmra.mxu0 %v3992
    %v4065 = vpop.f32.mrf.mxu0
    %v4066 = vadd.f32 %v3986, %v4065
    %v4067 = vpop.f32.mrf.mxu0
    %4068 = vdwg.mxu0
    %v4069 = vmax.f32 %v4061, 0.0
    %v4070 = vmax.f32 %v4066, 0.0
    %v4072 = vlaneseq
    %v4073 = vshrl.u32 %v4072, 7
    %v4074 = vsub.s32 0, %v4073
    %v4075 = vrot.slane %v389, %v4074
    %v4078 = vsel %vm2599, %v4069, 0
    %v4081 = vsel %vm2599, %v4070, 0
    %4083 = vmatprep.subr.mxu0 0.0
    %4084 = vmatpush1.msra.mxu0 0.0
    %4085 = vmatprep.subr.mxu0 0.0
    %4086 = vmatpush1.msra.mxu0 0.0
    %4087 = vmatprep.subr.mxu0 0.0
    %4088 = vmatpush1.msra.mxu0 0.0
    %4089 = vmatprep.subr.mxu0 0.0
    %4090 = vmatpush1.msra.mxu0 0.0
    %4091 = vmatprep.subr.mxu0 0.0
    %4092 = vmatpush1.msra.mxu0 0.0
    %4093 = vmatprep.subr.mxu0 0.0
    %4094 = vmatpush1.msra.mxu0 0.0
    %4095 = vmatprep.subr.mxu0 0.0
    %4096 = vmatpush1.msra.mxu0 0.0
    %4097 = vmatprep.subr.mxu0 0.0
    %4098 = vmatpush1.msra.mxu0 0.0
    %4099 = vmatprep.subr.mxu0 0.0
    %4100 = vmatpush1.msra.mxu0 %v397
    %4101 = vmatprep.subr.mxu0 0.0
    %4102 = vmatpush1.msra.mxu0 %v396
    %4103 = vmatprep.subr.mxu0 0.0
    %4104 = vmatpush1.msra.mxu0 %v395
    %4105 = vmatprep.subr.mxu0 0.0
    %4106 = vmatpush1.msra.mxu0 %v394
    %4107 = vmatprep.subr.mxu0 0.0
    %4108 = vmatpush1.msra.mxu0 %v393
    %4109 = vmatprep.subr.mxu0 0.0
    %4110 = vmatpush1.msra.mxu0 %v392
    %4111 = vmatprep.subr.mxu0 0.0
    %4112 = vmatpush1.msra.mxu0 %v391
    %4113 = vmatprep.subr.mxu0 0.0
    %4114 = vmatpush1.msra.mxu0 %v390
    %4115 = vmatprep.subr.mxu0 0.0
    %4116 = vmatpush2.msra.mxu0 0.0
    %4117 = vmatprep.subr.mxu0 0.0
    %4118 = vmatpush2.msra.mxu0 0.0
    %4119 = vmatprep.subr.mxu0 0.0
    %4120 = vmatpush2.msra.mxu0 0.0
    %4121 = vmatprep.subr.mxu0 0.0
    %4122 = vmatpush2.msra.mxu0 0.0
    %4123 = vmatprep.subr.mxu0 0.0
    %4124 = vmatpush2.msra.mxu0 0.0
    %4125 = vmatprep.subr.mxu0 0.0
    %4126 = vmatpush2.msra.mxu0 0.0
    %4127 = vmatprep.subr.mxu0 0.0
    %4128 = vmatpush2.msra.mxu0 0.0
    %4129 = vmatprep.subr.mxu0 0.0
    %4130 = vmatpush2.msra.mxu0 0.0
    %4131 = vmatprep.subr.mxu0 0.0
    %4132 = vmatpush2.msra.mxu0 0.0
    %4133 = vmatprep.subr.mxu0 0.0
    %4134 = vmatpush2.msra.mxu0 0.0
    %4135 = vmatprep.subr.mxu0 0.0
    %4136 = vmatpush2.msra.mxu0 0.0
    %4137 = vmatprep.subr.mxu0 0.0
    %4138 = vmatpush2.msra.mxu0 0.0
    %4139 = vmatprep.subr.mxu0 0.0
    %4140 = vmatpush2.msra.mxu0 0.0
    %4141 = vmatprep.subr.mxu0 0.0
    %4142 = vmatpush2.msra.mxu0 0.0
    %4143 = vmatprep.subr.mxu0 0.0
    %4144 = vmatpush2.msra.mxu0 0.0
    %4145 = vmatprep.subr.mxu0 0.0
    %4146 = vmatpush2.msra.mxu0 0.0
    %4147 = vmatprep.mubr.f32.mxu0 0.0
    %4148 = vmatmul.mubr.f32.gmra.mxu0 %v4078
    %v4149 = vpop.f32.mrf.mxu0
    %v4150 = vadd.f32 %v4075, %v4149
    %v4151 = vpop.f32.mrf.mxu0
    %4152 = vmatprep.mubr.f32.mxu0 0.0
    %4153 = vmatmul.mubr.f32.gmra.mxu0 %v4081
    %v4154 = vpop.f32.mrf.mxu0
    %v4155 = vadd.f32 %v4075, %v4154
    %v4156 = vpop.f32.mrf.mxu0
    %4157 = vdwg.mxu0
    %v4158 = vadd.f32 %v3980, %v4150
    %v4159 = vadd.f32 %v3981, %v4155
    %v4160 = vsel %vm523, %v4158, 0.0
    %4161 = vadd.xlane.f32.xlu0 %v4160
    %v4162 = vpop.xlane.xlu0 %4161
    %v4163 = vsel %vm523, %v4159, 0.0
    %4164 = vadd.xlane.f32.xlu0 %v4163
    %v4165 = vpop.xlane.xlu0 %4164
    %v4166 = vmul.f32 %v4162, %v2467
    %v4167 = vmul.f32 %v4165, %v2467
    %v4168 = vsub.f32 %v4158, %v4166
    %v4169 = vsub.f32 %v4159, %v4167
    %v4170 = vmul.f32 %v4168, %v4168
    %v4171 = vmul.f32 %v4169, %v4169
    %v4172 = vsel %vm523, %v4170, 0.0
    %4173 = vadd.xlane.f32.xlu0 %v4172
    %v4174 = vpop.xlane.xlu0 %4173
    %v4175 = vsel %vm523, %v4171, 0.0
    %4176 = vadd.xlane.f32.xlu0 %v4175
    %v4177 = vpop.xlane.xlu0 %4176
    %v4178 = vmul.f32 %v4174, %v2467
    %v4179 = vmul.f32 %v4177, %v2467
    %v4180 = vadd.f32 %v4178, 1e-05
    %v4181 = vadd.f32 %v4179, 1e-05
    %v4182 = vrsqrt.pop %v4180
    %v4183 = vrsqrt.pop %v4181
    %v4184 = vmul.f32 %v4168, %v4182
    %v4185 = vmul.f32 %v4169, %v4183
    %v4187 = vlaneseq
    %v4188 = vshrl.u32 %v4187, 7
    %v4189 = vsub.s32 0, %v4188
    %v4190 = vrot.slane %v401, %v4189
    %v4192 = vmul.f32 %v4184, %v4190
    %v4193 = vmul.f32 %v4185, %v4190
    %v4195 = vlaneseq
    %v4196 = vshrl.u32 %v4195, 7
    %v4197 = vsub.s32 0, %v4196
    %v4198 = vrot.slane %v400, %v4197
    %v4200 = vadd.f32 %v4192, %v4198
    %v4201 = vadd.f32 %v4193, %v4198
    %v4203 = vlaneseq
    %v4204 = vshrl.u32 %v4203, 7
    %v4205 = vsub.s32 0, %v4204
    %v4206 = vrot.slane %v411, %v4205
    %v4209 = vsel %vm523, %v4200, 0
    %v4212 = vsel %vm523, %v4201, 0
    %4214 = vmatprep.subr.mxu0 0.0
    %4215 = vmatpush1.msra.mxu0 0.0
    %4216 = vmatprep.subr.mxu0 0.0
    %4217 = vmatpush1.msra.mxu0 0.0
    %4218 = vmatprep.subr.mxu0 0.0
    %4219 = vmatpush1.msra.mxu0 0.0
    %4220 = vmatprep.subr.mxu0 0.0
    %4221 = vmatpush1.msra.mxu0 0.0
    %4222 = vmatprep.subr.mxu0 0.0
    %4223 = vmatpush1.msra.mxu0 0.0
    %4224 = vmatprep.subr.mxu0 0.0
    %4225 = vmatpush1.msra.mxu0 0.0
    %4226 = vmatprep.subr.mxu0 0.0
    %4227 = vmatpush1.msra.mxu0 0.0
    %4228 = vmatprep.subr.mxu0 0.0
    %4229 = vmatpush1.msra.mxu0 0.0
    %4230 = vmatprep.subr.mxu0 0.0
    %4231 = vmatpush1.msra.mxu0 0.0
    %4232 = vmatprep.subr.mxu0 0.0
    %4233 = vmatpush1.msra.mxu0 0.0
    %4234 = vmatprep.subr.mxu0 0.0
    %4235 = vmatpush1.msra.mxu0 0.0
    %4236 = vmatprep.subr.mxu0 0.0
    %4237 = vmatpush1.msra.mxu0 0.0
    %4238 = vmatprep.subr.mxu0 0.0
    %4239 = vmatpush1.msra.mxu0 %v415
    %4240 = vmatprep.subr.mxu0 0.0
    %4241 = vmatpush1.msra.mxu0 %v414
    %4242 = vmatprep.subr.mxu0 0.0
    %4243 = vmatpush1.msra.mxu0 %v413
    %4244 = vmatprep.subr.mxu0 0.0
    %4245 = vmatpush1.msra.mxu0 %v412
    %4246 = vmatprep.subr.mxu0 0.0
    %4247 = vmatpush2.msra.mxu0 0.0
    %4248 = vmatprep.subr.mxu0 0.0
    %4249 = vmatpush2.msra.mxu0 0.0
    %4250 = vmatprep.subr.mxu0 0.0
    %4251 = vmatpush2.msra.mxu0 0.0
    %4252 = vmatprep.subr.mxu0 0.0
    %4253 = vmatpush2.msra.mxu0 0.0
    %4254 = vmatprep.subr.mxu0 0.0
    %4255 = vmatpush2.msra.mxu0 0.0
    %4256 = vmatprep.subr.mxu0 0.0
    %4257 = vmatpush2.msra.mxu0 0.0
    %4258 = vmatprep.subr.mxu0 0.0
    %4259 = vmatpush2.msra.mxu0 0.0
    %4260 = vmatprep.subr.mxu0 0.0
    %4261 = vmatpush2.msra.mxu0 0.0
    %4262 = vmatprep.subr.mxu0 0.0
    %4263 = vmatpush2.msra.mxu0 0.0
    %4264 = vmatprep.subr.mxu0 0.0
    %4265 = vmatpush2.msra.mxu0 0.0
    %4266 = vmatprep.subr.mxu0 0.0
    %4267 = vmatpush2.msra.mxu0 0.0
    %4268 = vmatprep.subr.mxu0 0.0
    %4269 = vmatpush2.msra.mxu0 0.0
    %4270 = vmatprep.subr.mxu0 0.0
    %4271 = vmatpush2.msra.mxu0 0.0
    %4272 = vmatprep.subr.mxu0 0.0
    %4273 = vmatpush2.msra.mxu0 0.0
    %4274 = vmatprep.subr.mxu0 0.0
    %4275 = vmatpush2.msra.mxu0 0.0
    %4276 = vmatprep.subr.mxu0 0.0
    %4277 = vmatpush2.msra.mxu0 0.0
    %4278 = vmatprep.mubr.f32.mxu0 0.0
    %4279 = vmatmul.mubr.f32.gmra.mxu0 %v4209
    %v4280 = vpop.f32.mrf.mxu0
    %v4281 = vadd.f32 %v4206, %v4280
    %v4282 = vpop.f32.mrf.mxu0
    %4283 = vmatprep.mubr.f32.mxu0 0.0
    %4284 = vmatmul.mubr.f32.gmra.mxu0 %v4212
    %v4285 = vpop.f32.mrf.mxu0
    %v4286 = vadd.f32 %v4206, %v4285
    %v4287 = vpop.f32.mrf.mxu0
    %4288 = vdwg.mxu0
    %v4289 = vmax.f32 %v4281, 0.0
    %v4290 = vmax.f32 %v4286, 0.0
    %v4292 = vlaneseq
    %v4293 = vshrl.u32 %v4292, 7
    %v4294 = vsub.s32 0, %v4293
    %v4295 = vrot.slane %v416, %v4294
    %v4298 = vsel %vm433, %v4289, 0
    %v4301 = vsel %vm433, %v4290, 0
    %4303 = vmatprep.subr.mxu0 0.0
    %4304 = vmatpush1.msra.mxu0 0.0
    %4305 = vmatprep.subr.mxu0 0.0
    %4306 = vmatpush1.msra.mxu0 0.0
    %4307 = vmatprep.subr.mxu0 0.0
    %4308 = vmatpush1.msra.mxu0 0.0
    %4309 = vmatprep.subr.mxu0 0.0
    %4310 = vmatpush1.msra.mxu0 0.0
    %4311 = vmatprep.subr.mxu0 0.0
    %4312 = vmatpush1.msra.mxu0 0.0
    %4313 = vmatprep.subr.mxu0 0.0
    %4314 = vmatpush1.msra.mxu0 0.0
    %4315 = vmatprep.subr.mxu0 0.0
    %4316 = vmatpush1.msra.mxu0 0.0
    %4317 = vmatprep.subr.mxu0 0.0
    %4318 = vmatpush1.msra.mxu0 0.0
    %4319 = vmatprep.subr.mxu0 0.0
    %4320 = vmatpush1.msra.mxu0 0.0
    %4321 = vmatprep.subr.mxu0 0.0
    %4322 = vmatpush1.msra.mxu0 0.0
    %4323 = vmatprep.subr.mxu0 0.0
    %4324 = vmatpush1.msra.mxu0 0.0
    %4325 = vmatprep.subr.mxu0 0.0
    %4326 = vmatpush1.msra.mxu0 0.0
    %4327 = vmatprep.subr.mxu0 0.0
    %4328 = vmatpush1.msra.mxu0 0.0
    %4329 = vmatprep.subr.mxu0 0.0
    %4330 = vmatpush1.msra.mxu0 0.0
    %4331 = vmatprep.subr.mxu0 0.0
    %4332 = vmatpush1.msra.mxu0 %v418
    %4333 = vmatprep.subr.mxu0 0.0
    %4334 = vmatpush1.msra.mxu0 %v417
    %4335 = vmatprep.subr.mxu0 0.0
    %4336 = vmatpush2.msra.mxu0 0.0
    %4337 = vmatprep.subr.mxu0 0.0
    %4338 = vmatpush2.msra.mxu0 0.0
    %4339 = vmatprep.subr.mxu0 0.0
    %4340 = vmatpush2.msra.mxu0 0.0
    %4341 = vmatprep.subr.mxu0 0.0
    %4342 = vmatpush2.msra.mxu0 0.0
    %4343 = vmatprep.subr.mxu0 0.0
    %4344 = vmatpush2.msra.mxu0 0.0
    %4345 = vmatprep.subr.mxu0 0.0
    %4346 = vmatpush2.msra.mxu0 0.0
    %4347 = vmatprep.subr.mxu0 0.0
    %4348 = vmatpush2.msra.mxu0 0.0
    %4349 = vmatprep.subr.mxu0 0.0
    %4350 = vmatpush2.msra.mxu0 0.0
    %4351 = vmatprep.subr.mxu0 0.0
    %4352 = vmatpush2.msra.mxu0 0.0
    %4353 = vmatprep.subr.mxu0 0.0
    %4354 = vmatpush2.msra.mxu0 0.0
    %4355 = vmatprep.subr.mxu0 0.0
    %4356 = vmatpush2.msra.mxu0 0.0
    %4357 = vmatprep.subr.mxu0 0.0
    %4358 = vmatpush2.msra.mxu0 0.0
    %4359 = vmatprep.subr.mxu0 0.0
    %4360 = vmatpush2.msra.mxu0 0.0
    %4361 = vmatprep.subr.mxu0 0.0
    %4362 = vmatpush2.msra.mxu0 0.0
    %4363 = vmatprep.subr.mxu0 0.0
    %4364 = vmatpush2.msra.mxu0 0.0
    %4365 = vmatprep.subr.mxu0 0.0
    %4366 = vmatpush2.msra.mxu0 0.0
    %4367 = vmatprep.mubr.f32.mxu0 0.0
    %4368 = vmatmul.mubr.f32.gmra.mxu0 %v4298
    %v4369 = vpop.f32.mrf.mxu0
    %v4370 = vadd.f32 %v4295, %v4369
    %v4371 = vpop.f32.mrf.mxu0
    %4372 = vmatprep.mubr.f32.mxu0 0.0
    %4373 = vmatmul.mubr.f32.gmra.mxu0 %v4301
    %v4374 = vpop.f32.mrf.mxu0
    %v4375 = vadd.f32 %v4295, %v4374
    %v4376 = vpop.f32.mrf.mxu0
    %4377 = vdwg.mxu0
    %v4378 = vmax.f32 %v4370, 0.0
    %v4379 = vmax.f32 %v4375, 0.0
    %v4381 = vlaneseq
    %v4382 = vshrl.u32 %v4381, 7
    %v4383 = vsub.s32 0, %v4382
    %v4384 = vrot.slane %v419, %v4383
    %v4387 = vsel %vm789, %v4378, 0
    %v4390 = vsel %vm789, %v4379, 0
    %4392 = vmatprep.subr.mxu0 0.0
    %4393 = vmatpush1.msra.mxu0 0.0
    %4394 = vmatprep.subr.mxu0 0.0
    %4395 = vmatpush1.msra.mxu0 0.0
    %4396 = vmatprep.subr.mxu0 0.0
    %4397 = vmatpush1.msra.mxu0 0.0
    %4398 = vmatprep.subr.mxu0 0.0
    %4399 = vmatpush1.msra.mxu0 0.0
    %4400 = vmatprep.subr.mxu0 0.0
    %4401 = vmatpush1.msra.mxu0 0.0
    %4402 = vmatprep.subr.mxu0 0.0
    %4403 = vmatpush1.msra.mxu0 0.0
    %4404 = vmatprep.subr.mxu0 0.0
    %4405 = vmatpush1.msra.mxu0 0.0
    %4406 = vmatprep.subr.mxu0 0.0
    %4407 = vmatpush1.msra.mxu0 0.0
    %4408 = vmatprep.subr.mxu0 0.0
    %4409 = vmatpush1.msra.mxu0 0.0
    %4410 = vmatprep.subr.mxu0 0.0
    %4411 = vmatpush1.msra.mxu0 0.0
    %4412 = vmatprep.subr.mxu0 0.0
    %4413 = vmatpush1.msra.mxu0 0.0
    %4414 = vmatprep.subr.mxu0 0.0
    %4415 = vmatpush1.msra.mxu0 0.0
    %4416 = vmatprep.subr.mxu0 0.0
    %4417 = vmatpush1.msra.mxu0 0.0
    %4418 = vmatprep.subr.mxu0 0.0
    %4419 = vmatpush1.msra.mxu0 0.0
    %4420 = vmatprep.subr.mxu0 0.0
    %4421 = vmatpush1.msra.mxu0 0.0
    %4422 = vmatprep.subr.mxu0 0.0
    %4423 = vmatpush1.msra.mxu0 %v420
    %4424 = vmatprep.subr.mxu0 0.0
    %4425 = vmatpush2.msra.mxu0 0.0
    %4426 = vmatprep.subr.mxu0 0.0
    %4427 = vmatpush2.msra.mxu0 0.0
    %4428 = vmatprep.subr.mxu0 0.0
    %4429 = vmatpush2.msra.mxu0 0.0
    %4430 = vmatprep.subr.mxu0 0.0
    %4431 = vmatpush2.msra.mxu0 0.0
    %4432 = vmatprep.subr.mxu0 0.0
    %4433 = vmatpush2.msra.mxu0 0.0
    %4434 = vmatprep.subr.mxu0 0.0
    %4435 = vmatpush2.msra.mxu0 0.0
    %4436 = vmatprep.subr.mxu0 0.0
    %4437 = vmatpush2.msra.mxu0 0.0
    %4438 = vmatprep.subr.mxu0 0.0
    %4439 = vmatpush2.msra.mxu0 0.0
    %4440 = vmatprep.subr.mxu0 0.0
    %4441 = vmatpush2.msra.mxu0 0.0
    %4442 = vmatprep.subr.mxu0 0.0
    %4443 = vmatpush2.msra.mxu0 0.0
    %4444 = vmatprep.subr.mxu0 0.0
    %4445 = vmatpush2.msra.mxu0 0.0
    %4446 = vmatprep.subr.mxu0 0.0
    %4447 = vmatpush2.msra.mxu0 0.0
    %4448 = vmatprep.subr.mxu0 0.0
    %4449 = vmatpush2.msra.mxu0 0.0
    %4450 = vmatprep.subr.mxu0 0.0
    %4451 = vmatpush2.msra.mxu0 0.0
    %4452 = vmatprep.subr.mxu0 0.0
    %4453 = vmatpush2.msra.mxu0 0.0
    %4454 = vmatprep.subr.mxu0 0.0
    %4455 = vmatpush2.msra.mxu0 0.0
    %4456 = vmatprep.mubr.f32.mxu0 0.0
    %4457 = vmatmul.mubr.f32.gmra.mxu0 %v4387
    %v4458 = vpop.f32.mrf.mxu0
    %v4459 = vadd.f32 %v4384, %v4458
    %v4460 = vpop.f32.mrf.mxu0
    %4461 = vmatprep.mubr.f32.mxu0 0.0
    %4462 = vmatmul.mubr.f32.gmra.mxu0 %v4390
    %v4463 = vpop.f32.mrf.mxu0
    %v4464 = vadd.f32 %v4384, %v4463
    %v4465 = vpop.f32.mrf.mxu0
    %4466 = vdwg.mxu0
    %vm4467 = vcmask 31744
    %4468 = vst.msk [vmem:[%s103] sm:$0xff] %vm4467, %v4459
    %4469 = vst.msk [vmem:[%s103 + $0x8] sm:$0xff] %vm4467, %v4464
    // Predicated region
    $region242: #{tpu_custom_call.1} parent=1 // pred_check
      _
    $region243: #{tpu_custom_call.1} parent=1 // pred_check_branch
      %4471 = sbr.rel (0) target = $region245
    $region244: #{tpu_custom_call.1} parent=1 // pred_region
      _
    $region245: #{tpu_custom_call.1} parent=1 // pred_fallthru
      _
    // Predicated region
    $region246: #{tpu_custom_call.1} parent=1 // pred_check
      _
    $region247: #{tpu_custom_call.1} parent=1 // pred_check_branch
      %4473 = sbr.rel (0) target = $region249
    $region248: #{tpu_custom_call.1} parent=1 // pred_region
      _
    $region249: #{tpu_custom_call.1} parent=1 // pred_fallthru
      _
    %4474 = vsyncpa [#allocation4], 1
    %4475 = vsyncpa [#allocation6], 1
    %4476 = vsyncpa [#allocation9], 1
    %4477 = vsyncpa [#allocation12], 1
    %4478 = vsyncpa [#allocation15], 1

</llo_original>
